<compile_context>
chip_gen: v7x
topology: tpu7x:2x2x1
jax: 0.10.0
libtpu: 0.0.40
codegen_flags: <defaults>
</compile_context>

<pallas_src>
import functools
import math

import jax
import jax.numpy as jnp
from jax.experimental import pallas as pl
from jax.experimental.pallas import tpu as pltpu


_SQRT_HALF = 1.0 / math.sqrt(2.0)
_STATIC_HEAD_UNROLL = 8   # static unroll (compile-time offsets) up to this many heads


def _erf_f32(x):
    """Abramowitz & Stegun 7.1.26 rational approximation, |err| < 1.5e-7.

    The single divide is routed to the EUP via pl.reciprocal(approx=True);
    the rest is f32 VPU mul/add plus one exp on the EUP.
    """
    a1, a2, a3, a4, a5 = (0.254829592, -0.284496736, 1.421413741,
                          -1.453152027, 1.061405429)
    p = 0.3275911
    ax = jnp.abs(x)
    t = pl.reciprocal(1.0 + p * ax, approx=True)
    poly = ((((a5 * t + a4) * t + a3) * t + a2) * t + a1) * t
    y = 1.0 - poly * jnp.exp(-ax * ax)
    return jnp.where(x >= 0.0, y, -y)


def _gelu_exact(x):
    # Matches torch.nn.GELU() (exact erf formulation).
    return 0.5 * x * (1.0 + _erf_f32(x * _SQRT_HALF))


def _layernorm(v, g, b, eps):
    mu = jnp.mean(v, axis=-1, keepdims=True)
    var = jnp.mean(jnp.square(v - mu), axis=-1, keepdims=True)
    return (v - mu) * jax.lax.rsqrt(var + eps) * g + b


def _transformer_block_kernel(x_ref, g1_ref, b1_ref, wqkv_ref, wout_ref,
                              bout_ref, g2_ref, b2_ref, w1_ref, bm1_ref,
                              w2_ref, bm2_ref, o_ref, qkv_s, ctx_s, *,
                              heads, eps):
    x = x_ref[0].astype(jnp.float32)                       # [N, D] f32
    n, d = x.shape
    hd = d // heads
    scale = float(hd) ** -0.5

    # ---- attention branch ----------------------------------------------------
    xn = _layernorm(x, g1_ref[...], b1_ref[...], eps)       # f32 (VPU)
    # bf16 operands on the MXU, f32 accumulation; result staged in VMEM scratch.
    qkv_s[...] = jnp.dot(xn.astype(jnp.bfloat16), wqkv_ref[...],
                         preferred_element_type=jnp.float32)   # [N, 3D] f32

    def one_head(off):
        qh = qkv_s[:, pl.ds(off, hd)]
        kh = qkv_s[:, pl.ds(d + off, hd)]
        vh = qkv_s[:, pl.ds(2 * d + off, hd)]
        # q @ k^T without an explicit transpose (contract on last dims).
        dots = jax.lax.dot_general(
            qh.astype(jnp.bfloat16), kh.astype(jnp.bfloat16),
            (((1,), (1,)), ((), ())),
            preferred_element_type=jnp.float32) * scale     # [N, N] f32
        dots = dots - jnp.max(dots, axis=-1, keepdims=True)
        e = jnp.exp(dots)
        # Softmax normalization on the EUP (approx reciprocal) -> VPU stays free.
        attn = e * pl.reciprocal(jnp.sum(e, axis=-1, keepdims=True),
                                 approx=True)
        ctx = jnp.dot(attn.astype(jnp.bfloat16), vh.astype(jnp.bfloat16),
                      preferred_element_type=jnp.float32)   # [N, hd] f32
        # Stash this head's context at its lane offset; the output projection
        # then runs as ONE full-K matmul instead of `heads` K=hd matmuls plus
        # a running [N, D] accumulation.
        ctx_s[:, pl.ds(off, hd)] = ctx

    if heads <= _STATIC_HEAD_UNROLL:
        for h in range(heads):                 # few heads: static offsets
            one_head(h * hd)
    else:
        # Many heads: fori_loop bounds per-head live ranges (no vreg spills).
        def body(h, carry):
            one_head(pl.multiple_of(h * hd, hd))
            return carry
        jax.lax.fori_loop(0, heads, body, 0)

    # Single full-K output projection fused directly into residual 1.
    x = x + jnp.dot(ctx_s[...].astype(jnp.bfloat16), wout_ref[...],
                    preferred_element_type=jnp.float32) + bout_ref[...]

    # ---- MLP branch -----------------------------------------------------------
    xn2 = _layernorm(x, g2_ref[...], b2_ref[...], eps)
    hmid = jnp.dot(xn2.astype(jnp.bfloat16), w1_ref[...],
                   preferred_element_type=jnp.float32) + bm1_ref[...]
    hmid = _gelu_exact(hmid)                                # f32 VPU/EUP
    mlp_out = jnp.dot(hmid.astype(jnp.bfloat16), w2_ref[...],
                      preferred_element_type=jnp.float32) + bm2_ref[...]

    o_ref[0] = (x + mlp_out).astype(o_ref.dtype)            # residual 2


def transformer_block(x, params, *, heads, eps=1e-5):
    """x: [B, N, D] f32.  params hold LN/attention/MLP weights with Linear
    weights already transposed to (in, out) layout."""
    B, N, D = x.shape
    if D % heads != 0:
        raise ValueError(f"dim={D} must be divisible by heads={heads}")
    mlp_dim = params["w1"].shape[1]

    # Matmul weights -> bf16 (fast MXU path on v5e/v6e/v7x, half the resident
    # VMEM).  LN gains/biases and linear biases stay f32 so every elementwise
    # op runs in f32.
    wqkv = params["wqkv"].astype(jnp.bfloat16)
    wout = params["wout"].astype(jnp.bfloat16)
    w1 = params["w1"].astype(jnp.bfloat16)
    w2 = params["w2"].astype(jnp.bfloat16)
    args = (x, params["g1"], params["b1"], wqkv, wout, params["bout"],
            params["g2"], params["b2"], w1, params["bm1"], w2, params["bm2"])

    # --- explicit VMEM budget --------------------------------------------------
    weight_bytes = sum(int(a.size) * a.dtype.itemsize for a in args[1:])
    act_tile_bytes = N * D * x.dtype.itemsize
    scratch_bytes = (N * 3 * D + N * D) * 4
    live_bytes = 6 * N * max(3 * D, mlp_dim) * 4       # rough intermediate bound
    needed = 2 * weight_bytes + 4 * act_tile_bytes + scratch_bytes + live_bytes
    # Cap at 48 MiB so the fused block still fits v7x's 64 MiB VMEM; on
    # v5e/v6e (128 MiB physical) the cap can be raised for very wide configs.
    vmem_limit = int(min(max(needed, 8 * 1024 * 1024), 48 * 1024 * 1024))

    flops = B * N * (2 * D * 3 * D        # qkv projection
                     + 4 * N * D          # q@k^T and attn@v over all heads
                     + 2 * D * D          # output projection
                     + 4 * D * mlp_dim)   # two MLP matmuls
    transcendentals = B * (heads * N * N + N * mlp_dim)
    bytes_accessed = 2 * x.size * x.dtype.itemsize + weight_bytes

    kernel = functools.partial(_transformer_block_kernel, heads=heads, eps=eps)

    def make_call(single_buffer_weights):
        # Grid-invariant weights/biases: constant index_map (DMA'd once,
        # resident across all grid steps) + single-buffer request so they are
        # not pointlessly double-buffered in VMEM.
        pm = pl.Buffered(1) if single_buffer_weights else None
        c2 = lambda b: (0, 0)
        wspec = lambda shape: pl.BlockSpec(shape, c2, pipeline_mode=pm)
        return pl.pallas_call(
            kernel,
            out_shape=jax.ShapeDtypeStruct((B, N, D), x.dtype),
            grid_spec=pltpu.PrefetchScalarGridSpec(
                num_scalar_prefetch=0,
                grid=(B,),
                in_specs=[
                    pl.BlockSpec((1, N, D), lambda b: (b, 0, 0)),  # x (streamed)
                    wspec((1, D)),            # g1
                    wspec((1, D)),            # b1
                    wspec((D, 3 * D)),        # wqkv (bf16)
                    wspec((D, D)),            # wout (bf16)
                    wspec((1, D)),            # bout
                    wspec((1, D)),            # g2
                    wspec((1, D)),            # b2
                    wspec((D, mlp_dim)),      # w1   (bf16)
                    wspec((1, mlp_dim)),      # bm1
                    wspec((mlp_dim, D)),      # w2   (bf16)
                    wspec((1, D)),            # bm2
                ],
                out_specs=pl.BlockSpec((1, N, D), lambda b: (b, 0, 0)),
                scratch_shapes=[
                    pltpu.VMEM((N, 3 * D), jnp.float32),   # qkv staging
                    pltpu.VMEM((N, D), jnp.float32),       # per-head contexts
                ]),
            compiler_params=pltpu.CompilerParams(
                dimension_semantics=("parallel",),
                vmem_limit_bytes=vmem_limit),
            cost_estimate=pl.CostEstimate(
                flops=int(flops),
                transcendentals=int(transcendentals),
                bytes_accessed=int(bytes_accessed)),
        )

    try:
        return make_call(True)(*args)
    except Exception:
        # Version-compat: older JAX without single-buffer pipeline_mode support
        # falls back to default (double-buffered) pipelining for the weights.
        return make_call(False)(*args)


def _ref_transformer_block(x, p, *, heads, eps=1e-5):
    """Pure-JAX f32 reference (HIGHEST-precision matmuls) of the forward pass."""
    hp = jax.lax.Precision.HIGHEST

    def ln(v, g, b):
        mu = jnp.mean(v, axis=-1, keepdims=True)
        var = jnp.mean(jnp.square(v - mu), axis=-1, keepdims=True)
        return (v - mu) * jax.lax.rsqrt(var + eps) * g + b

    B, N, D = x.shape
    hd = D // heads

    xn = ln(x, p["g1"], p["b1"])
    qkv = jnp.einsum("bnd,de->bne", xn, p["wqkv"], precision=hp)
    q, k, v = jnp.split(qkv, 3, axis=-1)
    q = q.reshape(B, N, heads, hd).transpose(0, 2, 1, 3)
    k = k.reshape(B, N, heads, hd).transpose(0, 2, 1, 3)
    v = v.reshape(B, N, heads, hd).transpose(0, 2, 1, 3)
    dots = jnp.einsum("bhnd,bhmd->bhnm", q, k, precision=hp) * (hd ** -0.5)
    attn = jax.nn.softmax(dots, axis=-1)
    o = jnp.einsum("bhnm,bhmd->bhnd", attn, v, precision=hp)
    o = o.transpose(0, 2, 1, 3).reshape(B, N, D)
    o = jnp.einsum("bnd,de->bne", o, p["wout"], precision=hp) + p["bout"]
    x = x + o
    xn2 = ln(x, p["g2"], p["b2"])
    h = jnp.einsum("bnd,dm->bnm", xn2, p["w1"], precision=hp) + p["bm1"]
    h = jax.nn.gelu(h, approximate=False)
    h = jnp.einsum("bnm,md->bnd", h, p["w2"], precision=hp) + p["bm2"]
    return x + h


if __name__ == "__main__":
    # Small shapes consistent with the module: batch=2, seq=8, dim=32,
    # heads=4, mlp_dim=64.  (Real ViT widths — D a multiple of 128, N >= 197 —
    # are where the bf16/MXU/lane-density choices actually pay off.)
    B, N, D = 2, 8, 32
    heads = 4
    mlp_dim = 64

    key = jax.random.PRNGKey(0)
    keys = jax.random.split(key, 12)

    def w_init(k, shape, fan_in):
        return jax.random.normal(k, shape, dtype=jnp.float32) / math.sqrt(fan_in)

    x = jax.random.normal(keys[0], (B, N, D), dtype=jnp.float32)
    params = {
        "g1":   1.0 + 0.1 * jax.random.normal(keys[1], (1, D), jnp.float32),
        "b1":   0.1 * jax.random.normal(keys[2], (1, D), jnp.float32),
        "wqkv": w_init(keys[3], (D, 3 * D), D),
        "wout": w_init(keys[4], (D, D), D),
        "bout": 0.1 * jax.random.normal(keys[5], (1, D), jnp.float32),
        "g2":   1.0 + 0.1 * jax.random.normal(keys[6], (1, D), jnp.float32),
        "b2":   0.1 * jax.random.normal(keys[7], (1, D), jnp.float32),
        "w1":   w_init(keys[8], (D, mlp_dim), D),
        "bm1":  0.1 * jax.random.normal(keys[9], (1, mlp_dim), jnp.float32),
        "w2":   w_init(keys[10], (mlp_dim, D), mlp_dim),
        "bm2":  0.1 * jax.random.normal(keys[11], (1, D), jnp.float32),
    }

    out = transformer_block(x, params, heads=heads)
    out = jax.block_until_ready(out)

    ref = jax.block_until_ready(_ref_transformer_block(x, params, heads=heads))

    assert out.shape == (B, N, D)
    max_err = float(jnp.max(jnp.abs(out - ref)))
    # Tolerance sized for bf16 MXU operands + EUP approximate reciprocals
    # against an f32 HIGHEST-precision reference.
    assert jnp.allclose(out, ref, atol=2e-2, rtol=2e-2), max_err

    print("KERNEL_OK")
</pallas_src>

<mosaic_0001>
module attributes {stable_mosaic.version = 11 : i64} {
  func.func @_transformer_block_kernel(%arg0: i32, %arg1: memref<1x8x32xf32, #tpu.memory_space<vmem>>, %arg2: memref<1x32xf32, #tpu.memory_space<vmem>>, %arg3: memref<1x32xf32, #tpu.memory_space<vmem>>, %arg4: memref<32x96xbf16, #tpu.memory_space<vmem>>, %arg5: memref<32x32xbf16, #tpu.memory_space<vmem>>, %arg6: memref<1x32xf32, #tpu.memory_space<vmem>>, %arg7: memref<1x32xf32, #tpu.memory_space<vmem>>, %arg8: memref<1x32xf32, #tpu.memory_space<vmem>>, %arg9: memref<32x64xbf16, #tpu.memory_space<vmem>>, %arg10: memref<1x64xf32, #tpu.memory_space<vmem>>, %arg11: memref<64x32xbf16, #tpu.memory_space<vmem>>, %arg12: memref<1x32xf32, #tpu.memory_space<vmem>>, %arg13: memref<1x8x32xf32, #tpu.memory_space<vmem>>, %arg14: memref<8x96xf32, #tpu.memory_space<vmem>>, %arg15: memref<8x32xf32, #tpu.memory_space<vmem>>) attributes {dimension_semantics = [#tpu.dimension_semantics<parallel>], iteration_bounds = array<i64: 2>, scalar_prefetch = 0 : i64, scratch_operands = 2 : i64, tpu.core_type = #tpu.core_type<tc>, window_params = [{transform_indices = @transform_0, window_bounds = array<i64: 1, 8, 32>}, {pipeline_mode = #tpu.pipeline_mode<synchronous>, transform_indices = @transform_1, window_bounds = array<i64: 1, 32>}, {pipeline_mode = #tpu.pipeline_mode<synchronous>, transform_indices = @transform_2, window_bounds = array<i64: 1, 32>}, {pipeline_mode = #tpu.pipeline_mode<synchronous>, transform_indices = @transform_3, window_bounds = array<i64: 32, 96>}, {pipeline_mode = #tpu.pipeline_mode<synchronous>, transform_indices = @transform_4, window_bounds = array<i64: 32, 32>}, {pipeline_mode = #tpu.pipeline_mode<synchronous>, transform_indices = @transform_5, window_bounds = array<i64: 1, 32>}, {pipeline_mode = #tpu.pipeline_mode<synchronous>, transform_indices = @transform_6, window_bounds = array<i64: 1, 32>}, {pipeline_mode = #tpu.pipeline_mode<synchronous>, transform_indices = @transform_7, window_bounds = array<i64: 1, 32>}, {pipeline_mode = #tpu.pipeline_mode<synchronous>, transform_indices = @transform_8, window_bounds = array<i64: 32, 64>}, {pipeline_mode = #tpu.pipeline_mode<synchronous>, transform_indices = @transform_9, window_bounds = array<i64: 1, 64>}, {pipeline_mode = #tpu.pipeline_mode<synchronous>, transform_indices = @transform_10, window_bounds = array<i64: 64, 32>}, {pipeline_mode = #tpu.pipeline_mode<synchronous>, transform_indices = @transform_11, window_bounds = array<i64: 1, 32>}, {transform_indices = @transform_12, window_bounds = array<i64: 1, 8, 32>}]} {
    %c0 = arith.constant 0 : index
    %c0_0 = arith.constant 0 : index
    %c0_1 = arith.constant 0 : index
    %0 = vector.load %arg1[%c0, %c0_0, %c0_1] : memref<1x8x32xf32, #tpu.memory_space<vmem>>, vector<1x8x32xf32>
    %1 = vector.shape_cast %0 : vector<1x8x32xf32> to vector<8x32xf32>
    %c0_2 = arith.constant 0 : index
    %c0_3 = arith.constant 0 : index
    %2 = vector.load %arg2[%c0_2, %c0_3] : memref<1x32xf32, #tpu.memory_space<vmem>>, vector<1x32xf32>
    %c0_4 = arith.constant 0 : index
    %c0_5 = arith.constant 0 : index
    %3 = vector.load %arg3[%c0_4, %c0_5] : memref<1x32xf32, #tpu.memory_space<vmem>>, vector<1x32xf32>
    %cst = arith.constant dense<0.000000e+00> : vector<8xf32>
    %4 = vector.multi_reduction <add>, %1, %cst [1] : vector<8x32xf32> to vector<8xf32>
    %5 = vector.shape_cast %4 : vector<8xf32> to vector<8x1xf32>
    %cst_6 = arith.constant 3.200000e+01 : f32
    %6 = vector.broadcast %cst_6 : f32 to vector<8x1xf32>
    %7 = arith.divf %5, %6 : vector<8x1xf32>
    %8 = vector.broadcast %7 : vector<8x1xf32> to vector<8x32xf32>
    %9 = arith.subf %1, %8 : vector<8x32xf32>
    %10 = arith.mulf %9, %9 : vector<8x32xf32>
    %cst_7 = arith.constant dense<0.000000e+00> : vector<8xf32>
    %11 = vector.multi_reduction <add>, %10, %cst_7 [1] : vector<8x32xf32> to vector<8xf32>
    %12 = vector.shape_cast %11 : vector<8xf32> to vector<8x1xf32>
    %cst_8 = arith.constant 3.200000e+01 : f32
    %13 = vector.broadcast %cst_8 : f32 to vector<8x1xf32>
    %14 = arith.divf %12, %13 : vector<8x1xf32>
    %15 = vector.broadcast %7 : vector<8x1xf32> to vector<8x32xf32>
    %16 = arith.subf %1, %15 : vector<8x32xf32>
    %cst_9 = arith.constant 9.99999974E-6 : f32
    %17 = vector.broadcast %cst_9 : f32 to vector<8x1xf32>
    %18 = arith.addf %14, %17 : vector<8x1xf32>
    %19 = math.rsqrt %18 : vector<8x1xf32>
    %20 = vector.broadcast %19 : vector<8x1xf32> to vector<8x32xf32>
    %21 = arith.mulf %16, %20 : vector<8x32xf32>
    %22 = vector.broadcast %2 : vector<1x32xf32> to vector<8x32xf32>
    %23 = arith.mulf %21, %22 : vector<8x32xf32>
    %24 = vector.broadcast %3 : vector<1x32xf32> to vector<8x32xf32>
    %25 = arith.addf %23, %24 : vector<8x32xf32>
    %26 = arith.truncf %25 : vector<8x32xf32> to vector<8x32xbf16>
    %c0_10 = arith.constant 0 : index
    %c0_11 = arith.constant 0 : index
    %27 = vector.load %arg4[%c0_10, %c0_11] : memref<32x96xbf16, #tpu.memory_space<vmem>>, vector<32x96xbf16>
    %cst_12 = arith.constant dense<0.000000e+00> : vector<8x96xf32>
    %28 = tpu.matmul %26, %27, %cst_12 {dimension_numbers = #tpu.dot_dimension_numbers<[1], [0], [0], [1], [0, 0, 1, 1], [], []>} : vector<8x32xbf16>, vector<32x96xbf16>, vector<8x96xf32> -> vector<8x96xf32>
    %c0_13 = arith.constant 0 : index
    %c0_14 = arith.constant 0 : index
    %29 = vector.load %arg14[%c0_13, %c0_14] : memref<8x96xf32, #tpu.memory_space<vmem>>, vector<8x96xf32>
    tpu.vector_store %arg14[%c0_13, %c0_14], %28 {strides = array<i32>} : memref<8x96xf32, #tpu.memory_space<vmem>>, vector<8x96xf32>,
    %c0_15 = arith.constant 0 : index
    %c0_16 = arith.constant 0 : index
    %30 = vector.load %arg14[%c0_15, %c0_16] : memref<8x96xf32, #tpu.memory_space<vmem>>, vector<8x8xf32>
    %c0_17 = arith.constant 0 : index
    %c32 = arith.constant 32 : index
    %31 = vector.load %arg14[%c0_17, %c32] : memref<8x96xf32, #tpu.memory_space<vmem>>, vector<8x8xf32>
    %c0_18 = arith.constant 0 : index
    %c64 = arith.constant 64 : index
    %32 = vector.load %arg14[%c0_18, %c64] : memref<8x96xf32, #tpu.memory_space<vmem>>, vector<8x8xf32>
    %33 = arith.truncf %30 : vector<8x8xf32> to vector<8x8xbf16>
    %34 = arith.truncf %31 : vector<8x8xf32> to vector<8x8xbf16>
    %cst_19 = arith.constant dense<0.000000e+00> : vector<8x8xf32>
    %35 = tpu.matmul %33, %34, %cst_19 {dimension_numbers = #tpu.dot_dimension_numbers<[1], [1], [0], [0], [0, 0, 1, 0], [], []>} : vector<8x8xbf16>, vector<8x8xbf16>, vector<8x8xf32> -> vector<8x8xf32>
    %cst_20 = arith.constant 0.353553385 : f32
    %36 = vector.broadcast %cst_20 : f32 to vector<8x8xf32>
    %37 = arith.mulf %35, %36 : vector<8x8xf32>
    %cst_21 = arith.constant dense<0xFF800000> : vector<8xf32>
    %38 = vector.multi_reduction <maximumf>, %37, %cst_21 [1] : vector<8x8xf32> to vector<8xf32>
    %39 = vector.shape_cast %38 : vector<8xf32> to vector<8x1xf32>
    %40 = vector.broadcast %39 : vector<8x1xf32> to vector<8x8xf32>
    %41 = arith.subf %37, %40 : vector<8x8xf32>
    %42 = math.exp %41 : vector<8x8xf32>
    %cst_22 = arith.constant dense<0.000000e+00> : vector<8xf32>
    %43 = vector.multi_reduction <add>, %42, %cst_22 [1] : vector<8x8xf32> to vector<8xf32>
    %44 = vector.shape_cast %43 : vector<8xf32> to vector<8x1xf32>
    %45 = tpu.reciprocal %44 {approx = true} : vector<8x1xf32> -> vector<8x1xf32>
    %46 = vector.broadcast %45 : vector<8x1xf32> to vector<8x8xf32>
    %47 = arith.mulf %42, %46 : vector<8x8xf32>
    %48 = arith.truncf %47 : vector<8x8xf32> to vector<8x8xbf16>
    %49 = arith.truncf %32 : vector<8x8xf32> to vector<8x8xbf16>
    %cst_23 = arith.constant dense<0.000000e+00> : vector<8x8xf32>
    %50 = tpu.matmul %48, %49, %cst_23 {dimension_numbers = #tpu.dot_dimension_numbers<[1], [0], [0], [1], [0, 0, 1, 1], [], []>} : vector<8x8xbf16>, vector<8x8xbf16>, vector<8x8xf32> -> vector<8x8xf32>
    %c0_24 = arith.constant 0 : index
    %c0_25 = arith.constant 0 : index
    %51 = vector.load %arg15[%c0_24, %c0_25] : memref<8x32xf32, #tpu.memory_space<vmem>>, vector<8x8xf32>
    tpu.vector_store %arg15[%c0_24, %c0_25], %50 {strides = array<i32>} : memref<8x32xf32, #tpu.memory_space<vmem>>, vector<8x8xf32>,
    %c0_26 = arith.constant 0 : index
    %c8 = arith.constant 8 : index
    %52 = vector.load %arg14[%c0_26, %c8] : memref<8x96xf32, #tpu.memory_space<vmem>>, vector<8x8xf32>
    %c0_27 = arith.constant 0 : index
    %c40 = arith.constant 40 : index
    %53 = vector.load %arg14[%c0_27, %c40] : memref<8x96xf32, #tpu.memory_space<vmem>>, vector<8x8xf32>
    %c0_28 = arith.constant 0 : index
    %c72 = arith.constant 72 : index
    %54 = vector.load %arg14[%c0_28, %c72] : memref<8x96xf32, #tpu.memory_space<vmem>>, vector<8x8xf32>
    %55 = arith.truncf %52 : vector<8x8xf32> to vector<8x8xbf16>
    %56 = arith.truncf %53 : vector<8x8xf32> to vector<8x8xbf16>
    %cst_29 = arith.constant dense<0.000000e+00> : vector<8x8xf32>
    %57 = tpu.matmul %55, %56, %cst_29 {dimension_numbers = #tpu.dot_dimension_numbers<[1], [1], [0], [0], [0, 0, 1, 0], [], []>} : vector<8x8xbf16>, vector<8x8xbf16>, vector<8x8xf32> -> vector<8x8xf32>
    %cst_30 = arith.constant 0.353553385 : f32
    %58 = vector.broadcast %cst_30 : f32 to vector<8x8xf32>
    %59 = arith.mulf %57, %58 : vector<8x8xf32>
    %cst_31 = arith.constant dense<0xFF800000> : vector<8xf32>
    %60 = vector.multi_reduction <maximumf>, %59, %cst_31 [1] : vector<8x8xf32> to vector<8xf32>
    %61 = vector.shape_cast %60 : vector<8xf32> to vector<8x1xf32>
    %62 = vector.broadcast %61 : vector<8x1xf32> to vector<8x8xf32>
    %63 = arith.subf %59, %62 : vector<8x8xf32>
    %64 = math.exp %63 : vector<8x8xf32>
    %cst_32 = arith.constant dense<0.000000e+00> : vector<8xf32>
    %65 = vector.multi_reduction <add>, %64, %cst_32 [1] : vector<8x8xf32> to vector<8xf32>
    %66 = vector.shape_cast %65 : vector<8xf32> to vector<8x1xf32>
    %67 = tpu.reciprocal %66 {approx = true} : vector<8x1xf32> -> vector<8x1xf32>
    %68 = vector.broadcast %67 : vector<8x1xf32> to vector<8x8xf32>
    %69 = arith.mulf %64, %68 : vector<8x8xf32>
    %70 = arith.truncf %69 : vector<8x8xf32> to vector<8x8xbf16>
    %71 = arith.truncf %54 : vector<8x8xf32> to vector<8x8xbf16>
    %cst_33 = arith.constant dense<0.000000e+00> : vector<8x8xf32>
    %72 = tpu.matmul %70, %71, %cst_33 {dimension_numbers = #tpu.dot_dimension_numbers<[1], [0], [0], [1], [0, 0, 1, 1], [], []>} : vector<8x8xbf16>, vector<8x8xbf16>, vector<8x8xf32> -> vector<8x8xf32>
    %c0_34 = arith.constant 0 : index
    %c8_35 = arith.constant 8 : index
    %73 = vector.load %arg15[%c0_34, %c8_35] : memref<8x32xf32, #tpu.memory_space<vmem>>, vector<8x8xf32>
    tpu.vector_store %arg15[%c0_34, %c8_35], %72 {strides = array<i32>} : memref<8x32xf32, #tpu.memory_space<vmem>>, vector<8x8xf32>,
    %c0_36 = arith.constant 0 : index
    %c16 = arith.constant 16 : index
    %74 = vector.load %arg14[%c0_36, %c16] : memref<8x96xf32, #tpu.memory_space<vmem>>, vector<8x8xf32>
    %c0_37 = arith.constant 0 : index
    %c48 = arith.constant 48 : index
    %75 = vector.load %arg14[%c0_37, %c48] : memref<8x96xf32, #tpu.memory_space<vmem>>, vector<8x8xf32>
    %c0_38 = arith.constant 0 : index
    %c80 = arith.constant 80 : index
    %76 = vector.load %arg14[%c0_38, %c80] : memref<8x96xf32, #tpu.memory_space<vmem>>, vector<8x8xf32>
    %77 = arith.truncf %74 : vector<8x8xf32> to vector<8x8xbf16>
    %78 = arith.truncf %75 : vector<8x8xf32> to vector<8x8xbf16>
    %cst_39 = arith.constant dense<0.000000e+00> : vector<8x8xf32>
    %79 = tpu.matmul %77, %78, %cst_39 {dimension_numbers = #tpu.dot_dimension_numbers<[1], [1], [0], [0], [0, 0, 1, 0], [], []>} : vector<8x8xbf16>, vector<8x8xbf16>, vector<8x8xf32> -> vector<8x8xf32>
    %cst_40 = arith.constant 0.353553385 : f32
    %80 = vector.broadcast %cst_40 : f32 to vector<8x8xf32>
    %81 = arith.mulf %79, %80 : vector<8x8xf32>
    %cst_41 = arith.constant dense<0xFF800000> : vector<8xf32>
    %82 = vector.multi_reduction <maximumf>, %81, %cst_41 [1] : vector<8x8xf32> to vector<8xf32>
    %83 = vector.shape_cast %82 : vector<8xf32> to vector<8x1xf32>
    %84 = vector.broadcast %83 : vector<8x1xf32> to vector<8x8xf32>
    %85 = arith.subf %81, %84 : vector<8x8xf32>
    %86 = math.exp %85 : vector<8x8xf32>
    %cst_42 = arith.constant dense<0.000000e+00> : vector<8xf32>
    %87 = vector.multi_reduction <add>, %86, %cst_42 [1] : vector<8x8xf32> to vector<8xf32>
    %88 = vector.shape_cast %87 : vector<8xf32> to vector<8x1xf32>
    %89 = tpu.reciprocal %88 {approx = true} : vector<8x1xf32> -> vector<8x1xf32>
    %90 = vector.broadcast %89 : vector<8x1xf32> to vector<8x8xf32>
    %91 = arith.mulf %86, %90 : vector<8x8xf32>
    %92 = arith.truncf %91 : vector<8x8xf32> to vector<8x8xbf16>
    %93 = arith.truncf %76 : vector<8x8xf32> to vector<8x8xbf16>
    %cst_43 = arith.constant dense<0.000000e+00> : vector<8x8xf32>
    %94 = tpu.matmul %92, %93, %cst_43 {dimension_numbers = #tpu.dot_dimension_numbers<[1], [0], [0], [1], [0, 0, 1, 1], [], []>} : vector<8x8xbf16>, vector<8x8xbf16>, vector<8x8xf32> -> vector<8x8xf32>
    %c0_44 = arith.constant 0 : index
    %c16_45 = arith.constant 16 : index
    %95 = vector.load %arg15[%c0_44, %c16_45] : memref<8x32xf32, #tpu.memory_space<vmem>>, vector<8x8xf32>
    tpu.vector_store %arg15[%c0_44, %c16_45], %94 {strides = array<i32>} : memref<8x32xf32, #tpu.memory_space<vmem>>, vector<8x8xf32>,
    %c0_46 = arith.constant 0 : index
    %c24 = arith.constant 24 : index
    %96 = vector.load %arg14[%c0_46, %c24] : memref<8x96xf32, #tpu.memory_space<vmem>>, vector<8x8xf32>
    %c0_47 = arith.constant 0 : index
    %c56 = arith.constant 56 : index
    %97 = vector.load %arg14[%c0_47, %c56] : memref<8x96xf32, #tpu.memory_space<vmem>>, vector<8x8xf32>
    %c0_48 = arith.constant 0 : index
    %c88 = arith.constant 88 : index
    %98 = vector.load %arg14[%c0_48, %c88] : memref<8x96xf32, #tpu.memory_space<vmem>>, vector<8x8xf32>
    %99 = arith.truncf %96 : vector<8x8xf32> to vector<8x8xbf16>
    %100 = arith.truncf %97 : vector<8x8xf32> to vector<8x8xbf16>
    %cst_49 = arith.constant dense<0.000000e+00> : vector<8x8xf32>
    %101 = tpu.matmul %99, %100, %cst_49 {dimension_numbers = #tpu.dot_dimension_numbers<[1], [1], [0], [0], [0, 0, 1, 0], [], []>} : vector<8x8xbf16>, vector<8x8xbf16>, vector<8x8xf32> -> vector<8x8xf32>
    %cst_50 = arith.constant 0.353553385 : f32
    %102 = vector.broadcast %cst_50 : f32 to vector<8x8xf32>
    %103 = arith.mulf %101, %102 : vector<8x8xf32>
    %cst_51 = arith.constant dense<0xFF800000> : vector<8xf32>
    %104 = vector.multi_reduction <maximumf>, %103, %cst_51 [1] : vector<8x8xf32> to vector<8xf32>
    %105 = vector.shape_cast %104 : vector<8xf32> to vector<8x1xf32>
    %106 = vector.broadcast %105 : vector<8x1xf32> to vector<8x8xf32>
    %107 = arith.subf %103, %106 : vector<8x8xf32>
    %108 = math.exp %107 : vector<8x8xf32>
    %cst_52 = arith.constant dense<0.000000e+00> : vector<8xf32>
    %109 = vector.multi_reduction <add>, %108, %cst_52 [1] : vector<8x8xf32> to vector<8xf32>
    %110 = vector.shape_cast %109 : vector<8xf32> to vector<8x1xf32>
    %111 = tpu.reciprocal %110 {approx = true} : vector<8x1xf32> -> vector<8x1xf32>
    %112 = vector.broadcast %111 : vector<8x1xf32> to vector<8x8xf32>
    %113 = arith.mulf %108, %112 : vector<8x8xf32>
    %114 = arith.truncf %113 : vector<8x8xf32> to vector<8x8xbf16>
    %115 = arith.truncf %98 : vector<8x8xf32> to vector<8x8xbf16>
    %cst_53 = arith.constant dense<0.000000e+00> : vector<8x8xf32>
    %116 = tpu.matmul %114, %115, %cst_53 {dimension_numbers = #tpu.dot_dimension_numbers<[1], [0], [0], [1], [0, 0, 1, 1], [], []>} : vector<8x8xbf16>, vector<8x8xbf16>, vector<8x8xf32> -> vector<8x8xf32>
    %c0_54 = arith.constant 0 : index
    %c24_55 = arith.constant 24 : index
    %117 = vector.load %arg15[%c0_54, %c24_55] : memref<8x32xf32, #tpu.memory_space<vmem>>, vector<8x8xf32>
    tpu.vector_store %arg15[%c0_54, %c24_55], %116 {strides = array<i32>} : memref<8x32xf32, #tpu.memory_space<vmem>>, vector<8x8xf32>,
    %c0_56 = arith.constant 0 : index
    %c0_57 = arith.constant 0 : index
    %118 = vector.load %arg15[%c0_56, %c0_57] : memref<8x32xf32, #tpu.memory_space<vmem>>, vector<8x32xf32>
    %119 = arith.truncf %118 : vector<8x32xf32> to vector<8x32xbf16>
    %c0_58 = arith.constant 0 : index
    %c0_59 = arith.constant 0 : index
    %120 = vector.load %arg5[%c0_58, %c0_59] : memref<32x32xbf16, #tpu.memory_space<vmem>>, vector<32x32xbf16>
    %cst_60 = arith.constant dense<0.000000e+00> : vector<8x32xf32>
    %121 = tpu.matmul %119, %120, %cst_60 {dimension_numbers = #tpu.dot_dimension_numbers<[1], [0], [0], [1], [0, 0, 1, 1], [], []>} : vector<8x32xbf16>, vector<32x32xbf16>, vector<8x32xf32> -> vector<8x32xf32>
    %122 = arith.addf %1, %121 : vector<8x32xf32>
    %c0_61 = arith.constant 0 : index
    %c0_62 = arith.constant 0 : index
    %123 = vector.load %arg6[%c0_61, %c0_62] : memref<1x32xf32, #tpu.memory_space<vmem>>, vector<1x32xf32>
    %124 = vector.broadcast %123 : vector<1x32xf32> to vector<8x32xf32>
    %125 = arith.addf %122, %124 : vector<8x32xf32>
    %c0_63 = arith.constant 0 : index
    %c0_64 = arith.constant 0 : index
    %126 = vector.load %arg7[%c0_63, %c0_64] : memref<1x32xf32, #tpu.memory_space<vmem>>, vector<1x32xf32>
    %c0_65 = arith.constant 0 : index
    %c0_66 = arith.constant 0 : index
    %127 = vector.load %arg8[%c0_65, %c0_66] : memref<1x32xf32, #tpu.memory_space<vmem>>, vector<1x32xf32>
    %cst_67 = arith.constant dense<0.000000e+00> : vector<8xf32>
    %128 = vector.multi_reduction <add>, %125, %cst_67 [1] : vector<8x32xf32> to vector<8xf32>
    %129 = vector.shape_cast %128 : vector<8xf32> to vector<8x1xf32>
    %cst_68 = arith.constant 3.200000e+01 : f32
    %130 = vector.broadcast %cst_68 : f32 to vector<8x1xf32>
    %131 = arith.divf %129, %130 : vector<8x1xf32>
    %132 = vector.broadcast %131 : vector<8x1xf32> to vector<8x32xf32>
    %133 = arith.subf %125, %132 : vector<8x32xf32>
    %134 = arith.mulf %133, %133 : vector<8x32xf32>
    %cst_69 = arith.constant dense<0.000000e+00> : vector<8xf32>
    %135 = vector.multi_reduction <add>, %134, %cst_69 [1] : vector<8x32xf32> to vector<8xf32>
    %136 = vector.shape_cast %135 : vector<8xf32> to vector<8x1xf32>
    %cst_70 = arith.constant 3.200000e+01 : f32
    %137 = vector.broadcast %cst_70 : f32 to vector<8x1xf32>
    %138 = arith.divf %136, %137 : vector<8x1xf32>
    %139 = vector.broadcast %131 : vector<8x1xf32> to vector<8x32xf32>
    %140 = arith.subf %125, %139 : vector<8x32xf32>
    %cst_71 = arith.constant 9.99999974E-6 : f32
    %141 = vector.broadcast %cst_71 : f32 to vector<8x1xf32>
    %142 = arith.addf %138, %141 : vector<8x1xf32>
    %143 = math.rsqrt %142 : vector<8x1xf32>
    %144 = vector.broadcast %143 : vector<8x1xf32> to vector<8x32xf32>
    %145 = arith.mulf %140, %144 : vector<8x32xf32>
    %146 = vector.broadcast %126 : vector<1x32xf32> to vector<8x32xf32>
    %147 = arith.mulf %145, %146 : vector<8x32xf32>
    %148 = vector.broadcast %127 : vector<1x32xf32> to vector<8x32xf32>
    %149 = arith.addf %147, %148 : vector<8x32xf32>
    %150 = arith.truncf %149 : vector<8x32xf32> to vector<8x32xbf16>
    %c0_72 = arith.constant 0 : index
    %c0_73 = arith.constant 0 : index
    %151 = vector.load %arg9[%c0_72, %c0_73] : memref<32x64xbf16, #tpu.memory_space<vmem>>, vector<32x64xbf16>
    %cst_74 = arith.constant dense<0.000000e+00> : vector<8x64xf32>
    %152 = tpu.matmul %150, %151, %cst_74 {dimension_numbers = #tpu.dot_dimension_numbers<[1], [0], [0], [1], [0, 0, 1, 1], [], []>} : vector<8x32xbf16>, vector<32x64xbf16>, vector<8x64xf32> -> vector<8x64xf32>
    %c0_75 = arith.constant 0 : index
    %c0_76 = arith.constant 0 : index
    %153 = vector.load %arg10[%c0_75, %c0_76] : memref<1x64xf32, #tpu.memory_space<vmem>>, vector<1x64xf32>
    %154 = vector.broadcast %153 : vector<1x64xf32> to vector<8x64xf32>
    %155 = arith.addf %152, %154 : vector<8x64xf32>
    %cst_77 = arith.constant 5.000000e-01 : f32
    %156 = vector.broadcast %cst_77 : f32 to vector<8x64xf32>
    %157 = arith.mulf %156, %155 : vector<8x64xf32>
    %cst_78 = arith.constant 0.707106769 : f32
    %158 = vector.broadcast %cst_78 : f32 to vector<8x64xf32>
    %159 = arith.mulf %155, %158 : vector<8x64xf32>
    %160 = math.absf %159 : vector<8x64xf32>
    %cst_79 = arith.constant 0.327591091 : f32
    %161 = vector.broadcast %cst_79 : f32 to vector<8x64xf32>
    %162 = arith.mulf %161, %160 : vector<8x64xf32>
    %cst_80 = arith.constant 1.000000e+00 : f32
    %163 = vector.broadcast %cst_80 : f32 to vector<8x64xf32>
    %164 = arith.addf %163, %162 : vector<8x64xf32>
    %165 = tpu.reciprocal %164 {approx = true} : vector<8x64xf32> -> vector<8x64xf32>
    %cst_81 = arith.constant 1.06140542 : f32
    %166 = vector.broadcast %cst_81 : f32 to vector<8x64xf32>
    %167 = arith.mulf %166, %165 : vector<8x64xf32>
    %cst_82 = arith.constant -1.45315206 : f32
    %168 = vector.broadcast %cst_82 : f32 to vector<8x64xf32>
    %169 = arith.addf %167, %168 : vector<8x64xf32>
    %170 = arith.mulf %169, %165 : vector<8x64xf32>
    %cst_83 = arith.constant 1.42141378 : f32
    %171 = vector.broadcast %cst_83 : f32 to vector<8x64xf32>
    %172 = arith.addf %170, %171 : vector<8x64xf32>
    %173 = arith.mulf %172, %165 : vector<8x64xf32>
    %cst_84 = arith.constant -0.284496725 : f32
    %174 = vector.broadcast %cst_84 : f32 to vector<8x64xf32>
    %175 = arith.addf %173, %174 : vector<8x64xf32>
    %176 = arith.mulf %175, %165 : vector<8x64xf32>
    %cst_85 = arith.constant 0.254829586 : f32
    %177 = vector.broadcast %cst_85 : f32 to vector<8x64xf32>
    %178 = arith.addf %176, %177 : vector<8x64xf32>
    %179 = arith.mulf %178, %165 : vector<8x64xf32>
    %cst_86 = arith.constant 0.000000e+00 : f32
    %180 = vector.broadcast %cst_86 : f32 to vector<8x64xf32>
    %181 = arith.subf %180, %160 : vector<8x64xf32>
    %182 = arith.mulf %181, %160 : vector<8x64xf32>
    %183 = math.exp %182 : vector<8x64xf32>
    %184 = arith.mulf %179, %183 : vector<8x64xf32>
    %cst_87 = arith.constant 1.000000e+00 : f32
    %185 = vector.broadcast %cst_87 : f32 to vector<8x64xf32>
    %186 = arith.subf %185, %184 : vector<8x64xf32>
    %cst_88 = arith.constant 0.000000e+00 : f32
    %187 = vector.broadcast %cst_88 : f32 to vector<8x64xf32>
    %188 = arith.cmpf oge, %159, %187 : vector<8x64xf32>
    %cst_89 = arith.constant 0.000000e+00 : f32
    %189 = vector.broadcast %cst_89 : f32 to vector<8x64xf32>
    %190 = arith.subf %189, %186 : vector<8x64xf32>
    %191 = arith.select %188, %186, %190 : vector<8x64xi1>, vector<8x64xf32>
    %cst_90 = arith.constant 1.000000e+00 : f32
    %192 = vector.broadcast %cst_90 : f32 to vector<8x64xf32>
    %193 = arith.addf %192, %191 : vector<8x64xf32>
    %194 = arith.mulf %157, %193 : vector<8x64xf32>
    %195 = arith.truncf %194 : vector<8x64xf32> to vector<8x64xbf16>
    %c0_91 = arith.constant 0 : index
    %c0_92 = arith.constant 0 : index
    %196 = vector.load %arg11[%c0_91, %c0_92] : memref<64x32xbf16, #tpu.memory_space<vmem>>, vector<64x32xbf16>
    %cst_93 = arith.constant dense<0.000000e+00> : vector<8x32xf32>
    %197 = tpu.matmul %195, %196, %cst_93 {dimension_numbers = #tpu.dot_dimension_numbers<[1], [0], [0], [1], [0, 0, 1, 1], [], []>} : vector<8x64xbf16>, vector<64x32xbf16>, vector<8x32xf32> -> vector<8x32xf32>
    %c0_94 = arith.constant 0 : index
    %c0_95 = arith.constant 0 : index
    %198 = vector.load %arg12[%c0_94, %c0_95] : memref<1x32xf32, #tpu.memory_space<vmem>>, vector<1x32xf32>
    %199 = vector.broadcast %198 : vector<1x32xf32> to vector<8x32xf32>
    %200 = arith.addf %197, %199 : vector<8x32xf32>
    %201 = arith.addf %125, %200 : vector<8x32xf32>
    %c0_96 = arith.constant 0 : index
    %c0_97 = arith.constant 0 : index
    %c0_98 = arith.constant 0 : index
    %202 = vector.load %arg13[%c0_96, %c0_97, %c0_98] : memref<1x8x32xf32, #tpu.memory_space<vmem>>, vector<1x8x32xf32>
    %203 = vector.shape_cast %202 : vector<1x8x32xf32> to vector<8x32xf32>
    %204 = vector.shape_cast %201 : vector<8x32xf32> to vector<1x8x32xf32>
    tpu.vector_store %arg13[%c0_96, %c0_97, %c0_98], %204 {strides = array<i32>} : memref<1x8x32xf32, #tpu.memory_space<vmem>>, vector<1x8x32xf32>,
    return
  }
  func.func @transform_0(%arg0: i32) -> (i32, i32, i32) {
    %c0_i32 = arith.constant 0 : i32
    %c0_i32_0 = arith.constant 0 : i32
    %c0_i32_1 = arith.constant 0 : i32
    return %arg0, %c0_i32, %c0_i32_0 : i32, i32, i32
  }
  func.func @transform_1(%arg0: i32) -> (i32, i32) {
    %c0_i32 = arith.constant 0 : i32
    %c0_i32_0 = arith.constant 0 : i32
    %c0_i32_1 = arith.constant 0 : i32
    return %c0_i32, %c0_i32_0 : i32, i32
  }
  func.func @transform_2(%arg0: i32) -> (i32, i32) {
    %c0_i32 = arith.constant 0 : i32
    %c0_i32_0 = arith.constant 0 : i32
    %c0_i32_1 = arith.constant 0 : i32
    return %c0_i32, %c0_i32_0 : i32, i32
  }
  func.func @transform_3(%arg0: i32) -> (i32, i32) {
    %c0_i32 = arith.constant 0 : i32
    %c0_i32_0 = arith.constant 0 : i32
    %c0_i32_1 = arith.constant 0 : i32
    return %c0_i32, %c0_i32_0 : i32, i32
  }
  func.func @transform_4(%arg0: i32) -> (i32, i32) {
    %c0_i32 = arith.constant 0 : i32
    %c0_i32_0 = arith.constant 0 : i32
    %c0_i32_1 = arith.constant 0 : i32
    return %c0_i32, %c0_i32_0 : i32, i32
  }
  func.func @transform_5(%arg0: i32) -> (i32, i32) {
    %c0_i32 = arith.constant 0 : i32
    %c0_i32_0 = arith.constant 0 : i32
    %c0_i32_1 = arith.constant 0 : i32
    return %c0_i32, %c0_i32_0 : i32, i32
  }
  func.func @transform_6(%arg0: i32) -> (i32, i32) {
    %c0_i32 = arith.constant 0 : i32
    %c0_i32_0 = arith.constant 0 : i32
    %c0_i32_1 = arith.constant 0 : i32
    return %c0_i32, %c0_i32_0 : i32, i32
  }
  func.func @transform_7(%arg0: i32) -> (i32, i32) {
    %c0_i32 = arith.constant 0 : i32
    %c0_i32_0 = arith.constant 0 : i32
    %c0_i32_1 = arith.constant 0 : i32
    return %c0_i32, %c0_i32_0 : i32, i32
  }
  func.func @transform_8(%arg0: i32) -> (i32, i32) {
    %c0_i32 = arith.constant 0 : i32
    %c0_i32_0 = arith.constant 0 : i32
    %c0_i32_1 = arith.constant 0 : i32
    return %c0_i32, %c0_i32_0 : i32, i32
  }
  func.func @transform_9(%arg0: i32) -> (i32, i32) {
    %c0_i32 = arith.constant 0 : i32
    %c0_i32_0 = arith.constant 0 : i32
    %c0_i32_1 = arith.constant 0 : i32
    return %c0_i32, %c0_i32_0 : i32, i32
  }
  func.func @transform_10(%arg0: i32) -> (i32, i32) {
    %c0_i32 = arith.constant 0 : i32
    %c0_i32_0 = arith.constant 0 : i32
    %c0_i32_1 = arith.constant 0 : i32
    return %c0_i32, %c0_i32_0 : i32, i32
  }
  func.func @transform_11(%arg0: i32) -> (i32, i32) {
    %c0_i32 = arith.constant 0 : i32
    %c0_i32_0 = arith.constant 0 : i32
    %c0_i32_1 = arith.constant 0 : i32
    return %c0_i32, %c0_i32_0 : i32, i32
  }
  func.func @transform_12(%arg0: i32) -> (i32, i32, i32) {
    %c0_i32 = arith.constant 0 : i32
    %c0_i32_0 = arith.constant 0 : i32
    %c0_i32_1 = arith.constant 0 : i32
    return %arg0, %c0_i32, %c0_i32_0 : i32, i32, i32
  }
}

module attributes {stable_mosaic.version = 11 : i64} {
  func.func @_transformer_block_kernel(%arg0: i32, %arg1: memref<1x8x32xf32, #tpu.memory_space<vmem>>, %arg2: memref<1x32xf32, #tpu.memory_space<vmem>>, %arg3: memref<1x32xf32, #tpu.memory_space<vmem>>, %arg4: memref<32x96xbf16, #tpu.memory_space<vmem>>, %arg5: memref<32x32xbf16, #tpu.memory_space<vmem>>, %arg6: memref<1x32xf32, #tpu.memory_space<vmem>>, %arg7: memref<1x32xf32, #tpu.memory_space<vmem>>, %arg8: memref<1x32xf32, #tpu.memory_space<vmem>>, %arg9: memref<32x64xbf16, #tpu.memory_space<vmem>>, %arg10: memref<1x64xf32, #tpu.memory_space<vmem>>, %arg11: memref<64x32xbf16, #tpu.memory_space<vmem>>, %arg12: memref<1x32xf32, #tpu.memory_space<vmem>>, %arg13: memref<1x8x32xf32, #tpu.memory_space<vmem>>, %arg14: memref<8x96xf32, #tpu.memory_space<vmem>>, %arg15: memref<8x32xf32, #tpu.memory_space<vmem>>) attributes {dimension_semantics = [#tpu.dimension_semantics<parallel>], iteration_bounds = array<i64: 2>, scalar_prefetch = 0 : i64, scratch_operands = 2 : i64, tpu.core_type = #tpu.core_type<tc>, window_params = [{transform_indices = @transform_0, window_bounds = array<i64: 1, 8, 32>}, {pipeline_mode = #tpu.pipeline_mode<synchronous>, transform_indices = @transform_1, window_bounds = array<i64: 1, 32>}, {pipeline_mode = #tpu.pipeline_mode<synchronous>, transform_indices = @transform_2, window_bounds = array<i64: 1, 32>}, {pipeline_mode = #tpu.pipeline_mode<synchronous>, transform_indices = @transform_3, window_bounds = array<i64: 32, 96>}, {pipeline_mode = #tpu.pipeline_mode<synchronous>, transform_indices = @transform_4, window_bounds = array<i64: 32, 32>}, {pipeline_mode = #tpu.pipeline_mode<synchronous>, transform_indices = @transform_5, window_bounds = array<i64: 1, 32>}, {pipeline_mode = #tpu.pipeline_mode<synchronous>, transform_indices = @transform_6, window_bounds = array<i64: 1, 32>}, {pipeline_mode = #tpu.pipeline_mode<synchronous>, transform_indices = @transform_7, window_bounds = array<i64: 1, 32>}, {pipeline_mode = #tpu.pipeline_mode<synchronous>, transform_indices = @transform_8, window_bounds = array<i64: 32, 64>}, {pipeline_mode = #tpu.pipeline_mode<synchronous>, transform_indices = @transform_9, window_bounds = array<i64: 1, 64>}, {pipeline_mode = #tpu.pipeline_mode<synchronous>, transform_indices = @transform_10, window_bounds = array<i64: 64, 32>}, {pipeline_mode = #tpu.pipeline_mode<synchronous>, transform_indices = @transform_11, window_bounds = array<i64: 1, 32>}, {transform_indices = @transform_12, window_bounds = array<i64: 1, 8, 32>}]} {
    %c0 = arith.constant 0 : index
    %c0_0 = arith.constant 0 : index
    %c0_1 = arith.constant 0 : index
    %0 = vector.load %arg1[%c0, %c0_0, %c0_1] : memref<1x8x32xf32, #tpu.memory_space<vmem>>, vector<1x8x32xf32>
    %1 = vector.shape_cast %0 : vector<1x8x32xf32> to vector<8x32xf32>
    %c0_2 = arith.constant 0 : index
    %c0_3 = arith.constant 0 : index
    %2 = vector.load %arg2[%c0_2, %c0_3] : memref<1x32xf32, #tpu.memory_space<vmem>>, vector<1x32xf32>
    %c0_4 = arith.constant 0 : index
    %c0_5 = arith.constant 0 : index
    %3 = vector.load %arg3[%c0_4, %c0_5] : memref<1x32xf32, #tpu.memory_space<vmem>>, vector<1x32xf32>
    %cst = arith.constant dense<0.000000e+00> : vector<8xf32>
    %4 = vector.multi_reduction <add>, %1, %cst [1] : vector<8x32xf32> to vector<8xf32>
    %5 = vector.shape_cast %4 : vector<8xf32> to vector<8x1xf32>
    %cst_6 = arith.constant 3.200000e+01 : f32
    %6 = vector.broadcast %cst_6 : f32 to vector<8x1xf32>
    %7 = arith.divf %5, %6 : vector<8x1xf32>
    %8 = vector.broadcast %7 : vector<8x1xf32> to vector<8x32xf32>
    %9 = arith.subf %1, %8 : vector<8x32xf32>
    %10 = arith.mulf %9, %9 : vector<8x32xf32>
    %cst_7 = arith.constant dense<0.000000e+00> : vector<8xf32>
    %11 = vector.multi_reduction <add>, %10, %cst_7 [1] : vector<8x32xf32> to vector<8xf32>
    %12 = vector.shape_cast %11 : vector<8xf32> to vector<8x1xf32>
    %cst_8 = arith.constant 3.200000e+01 : f32
    %13 = vector.broadcast %cst_8 : f32 to vector<8x1xf32>
    %14 = arith.divf %12, %13 : vector<8x1xf32>
    %15 = vector.broadcast %7 : vector<8x1xf32> to vector<8x32xf32>
    %16 = arith.subf %1, %15 : vector<8x32xf32>
    %cst_9 = arith.constant 9.99999974E-6 : f32
    %17 = vector.broadcast %cst_9 : f32 to vector<8x1xf32>
    %18 = arith.addf %14, %17 : vector<8x1xf32>
    %19 = math.rsqrt %18 : vector<8x1xf32>
    %20 = vector.broadcast %19 : vector<8x1xf32> to vector<8x32xf32>
    %21 = arith.mulf %16, %20 : vector<8x32xf32>
    %22 = vector.broadcast %2 : vector<1x32xf32> to vector<8x32xf32>
    %23 = arith.mulf %21, %22 : vector<8x32xf32>
    %24 = vector.broadcast %3 : vector<1x32xf32> to vector<8x32xf32>
    %25 = arith.addf %23, %24 : vector<8x32xf32>
    %26 = arith.truncf %25 : vector<8x32xf32> to vector<8x32xbf16>
    %c0_10 = arith.constant 0 : index
    %c0_11 = arith.constant 0 : index
    %27 = vector.load %arg4[%c0_10, %c0_11] : memref<32x96xbf16, #tpu.memory_space<vmem>>, vector<32x96xbf16>
    %cst_12 = arith.constant dense<0.000000e+00> : vector<8x96xf32>
    %28 = tpu.matmul %26, %27, %cst_12 {dimension_numbers = #tpu.dot_dimension_numbers<[1], [0], [0], [1], [0, 0, 1, 1], [], []>} : vector<8x32xbf16>, vector<32x96xbf16>, vector<8x96xf32> -> vector<8x96xf32>
    %c0_13 = arith.constant 0 : index
    %c0_14 = arith.constant 0 : index
    %29 = vector.load %arg14[%c0_13, %c0_14] : memref<8x96xf32, #tpu.memory_space<vmem>>, vector<8x96xf32>
    tpu.vector_store %arg14[%c0_13, %c0_14], %28 {strides = array<i32>} : memref<8x96xf32, #tpu.memory_space<vmem>>, vector<8x96xf32>,
    %c0_15 = arith.constant 0 : index
    %c0_16 = arith.constant 0 : index
    %30 = vector.load %arg14[%c0_15, %c0_16] : memref<8x96xf32, #tpu.memory_space<vmem>>, vector<8x8xf32>
    %c0_17 = arith.constant 0 : index
    %c32 = arith.constant 32 : index
    %31 = vector.load %arg14[%c0_17, %c32] : memref<8x96xf32, #tpu.memory_space<vmem>>, vector<8x8xf32>
    %c0_18 = arith.constant 0 : index
    %c64 = arith.constant 64 : index
    %32 = vector.load %arg14[%c0_18, %c64] : memref<8x96xf32, #tpu.memory_space<vmem>>, vector<8x8xf32>
    %33 = arith.truncf %30 : vector<8x8xf32> to vector<8x8xbf16>
    %34 = arith.truncf %31 : vector<8x8xf32> to vector<8x8xbf16>
    %cst_19 = arith.constant dense<0.000000e+00> : vector<8x8xf32>
    %35 = tpu.matmul %33, %34, %cst_19 {dimension_numbers = #tpu.dot_dimension_numbers<[1], [1], [0], [0], [0, 0, 1, 0], [], []>} : vector<8x8xbf16>, vector<8x8xbf16>, vector<8x8xf32> -> vector<8x8xf32>
    %cst_20 = arith.constant 0.353553385 : f32
    %36 = vector.broadcast %cst_20 : f32 to vector<8x8xf32>
    %37 = arith.mulf %35, %36 : vector<8x8xf32>
    %cst_21 = arith.constant dense<0xFF800000> : vector<8xf32>
    %38 = vector.multi_reduction <maximumf>, %37, %cst_21 [1] : vector<8x8xf32> to vector<8xf32>
    %39 = vector.shape_cast %38 : vector<8xf32> to vector<8x1xf32>
    %40 = vector.broadcast %39 : vector<8x1xf32> to vector<8x8xf32>
    %41 = arith.subf %37, %40 : vector<8x8xf32>
    %42 = math.exp %41 : vector<8x8xf32>
    %cst_22 = arith.constant dense<0.000000e+00> : vector<8xf32>
    %43 = vector.multi_reduction <add>, %42, %cst_22 [1] : vector<8x8xf32> to vector<8xf32>
    %44 = vector.shape_cast %43 : vector<8xf32> to vector<8x1xf32>
    %45 = tpu.reciprocal %44 {approx = true} : vector<8x1xf32> -> vector<8x1xf32>
    %46 = vector.broadcast %45 : vector<8x1xf32> to vector<8x8xf32>
    %47 = arith.mulf %42, %46 : vector<8x8xf32>
    %48 = arith.truncf %47 : vector<8x8xf32> to vector<8x8xbf16>
    %49 = arith.truncf %32 : vector<8x8xf32> to vector<8x8xbf16>
    %cst_23 = arith.constant dense<0.000000e+00> : vector<8x8xf32>
    %50 = tpu.matmul %48, %49, %cst_23 {dimension_numbers = #tpu.dot_dimension_numbers<[1], [0], [0], [1], [0, 0, 1, 1], [], []>} : vector<8x8xbf16>, vector<8x8xbf16>, vector<8x8xf32> -> vector<8x8xf32>
    %c0_24 = arith.constant 0 : index
    %c0_25 = arith.constant 0 : index
    %51 = vector.load %arg15[%c0_24, %c0_25] : memref<8x32xf32, #tpu.memory_space<vmem>>, vector<8x8xf32>
    tpu.vector_store %arg15[%c0_24, %c0_25], %50 {strides = array<i32>} : memref<8x32xf32, #tpu.memory_space<vmem>>, vector<8x8xf32>,
    %c0_26 = arith.constant 0 : index
    %c8 = arith.constant 8 : index
    %52 = vector.load %arg14[%c0_26, %c8] : memref<8x96xf32, #tpu.memory_space<vmem>>, vector<8x8xf32>
    %c0_27 = arith.constant 0 : index
    %c40 = arith.constant 40 : index
    %53 = vector.load %arg14[%c0_27, %c40] : memref<8x96xf32, #tpu.memory_space<vmem>>, vector<8x8xf32>
    %c0_28 = arith.constant 0 : index
    %c72 = arith.constant 72 : index
    %54 = vector.load %arg14[%c0_28, %c72] : memref<8x96xf32, #tpu.memory_space<vmem>>, vector<8x8xf32>
    %55 = arith.truncf %52 : vector<8x8xf32> to vector<8x8xbf16>
    %56 = arith.truncf %53 : vector<8x8xf32> to vector<8x8xbf16>
    %cst_29 = arith.constant dense<0.000000e+00> : vector<8x8xf32>
    %57 = tpu.matmul %55, %56, %cst_29 {dimension_numbers = #tpu.dot_dimension_numbers<[1], [1], [0], [0], [0, 0, 1, 0], [], []>} : vector<8x8xbf16>, vector<8x8xbf16>, vector<8x8xf32> -> vector<8x8xf32>
    %cst_30 = arith.constant 0.353553385 : f32
    %58 = vector.broadcast %cst_30 : f32 to vector<8x8xf32>
    %59 = arith.mulf %57, %58 : vector<8x8xf32>
    %cst_31 = arith.constant dense<0xFF800000> : vector<8xf32>
    %60 = vector.multi_reduction <maximumf>, %59, %cst_31 [1] : vector<8x8xf32> to vector<8xf32>
    %61 = vector.shape_cast %60 : vector<8xf32> to vector<8x1xf32>
    %62 = vector.broadcast %61 : vector<8x1xf32> to vector<8x8xf32>
    %63 = arith.subf %59, %62 : vector<8x8xf32>
    %64 = math.exp %63 : vector<8x8xf32>
    %cst_32 = arith.constant dense<0.000000e+00> : vector<8xf32>
    %65 = vector.multi_reduction <add>, %64, %cst_32 [1] : vector<8x8xf32> to vector<8xf32>
    %66 = vector.shape_cast %65 : vector<8xf32> to vector<8x1xf32>
    %67 = tpu.reciprocal %66 {approx = true} : vector<8x1xf32> -> vector<8x1xf32>
    %68 = vector.broadcast %67 : vector<8x1xf32> to vector<8x8xf32>
    %69 = arith.mulf %64, %68 : vector<8x8xf32>
    %70 = arith.truncf %69 : vector<8x8xf32> to vector<8x8xbf16>
    %71 = arith.truncf %54 : vector<8x8xf32> to vector<8x8xbf16>
    %cst_33 = arith.constant dense<0.000000e+00> : vector<8x8xf32>
    %72 = tpu.matmul %70, %71, %cst_33 {dimension_numbers = #tpu.dot_dimension_numbers<[1], [0], [0], [1], [0, 0, 1, 1], [], []>} : vector<8x8xbf16>, vector<8x8xbf16>, vector<8x8xf32> -> vector<8x8xf32>
    %c0_34 = arith.constant 0 : index
    %c8_35 = arith.constant 8 : index
    %73 = vector.load %arg15[%c0_34, %c8_35] : memref<8x32xf32, #tpu.memory_space<vmem>>, vector<8x8xf32>
    tpu.vector_store %arg15[%c0_34, %c8_35], %72 {strides = array<i32>} : memref<8x32xf32, #tpu.memory_space<vmem>>, vector<8x8xf32>,
    %c0_36 = arith.constant 0 : index
    %c16 = arith.constant 16 : index
    %74 = vector.load %arg14[%c0_36, %c16] : memref<8x96xf32, #tpu.memory_space<vmem>>, vector<8x8xf32>
    %c0_37 = arith.constant 0 : index
    %c48 = arith.constant 48 : index
    %75 = vector.load %arg14[%c0_37, %c48] : memref<8x96xf32, #tpu.memory_space<vmem>>, vector<8x8xf32>
    %c0_38 = arith.constant 0 : index
    %c80 = arith.constant 80 : index
    %76 = vector.load %arg14[%c0_38, %c80] : memref<8x96xf32, #tpu.memory_space<vmem>>, vector<8x8xf32>
    %77 = arith.truncf %74 : vector<8x8xf32> to vector<8x8xbf16>
    %78 = arith.truncf %75 : vector<8x8xf32> to vector<8x8xbf16>
    %cst_39 = arith.constant dense<0.000000e+00> : vector<8x8xf32>
    %79 = tpu.matmul %77, %78, %cst_39 {dimension_numbers = #tpu.dot_dimension_numbers<[1], [1], [0], [0], [0, 0, 1, 0], [], []>} : vector<8x8xbf16>, vector<8x8xbf16>, vector<8x8xf32> -> vector<8x8xf32>
    %cst_40 = arith.constant 0.353553385 : f32
    %80 = vector.broadcast %cst_40 : f32 to vector<8x8xf32>
    %81 = arith.mulf %79, %80 : vector<8x8xf32>
    %cst_41 = arith.constant dense<0xFF800000> : vector<8xf32>
    %82 = vector.multi_reduction <maximumf>, %81, %cst_41 [1] : vector<8x8xf32> to vector<8xf32>
    %83 = vector.shape_cast %82 : vector<8xf32> to vector<8x1xf32>
    %84 = vector.broadcast %83 : vector<8x1xf32> to vector<8x8xf32>
    %85 = arith.subf %81, %84 : vector<8x8xf32>
    %86 = math.exp %85 : vector<8x8xf32>
    %cst_42 = arith.constant dense<0.000000e+00> : vector<8xf32>
    %87 = vector.multi_reduction <add>, %86, %cst_42 [1] : vector<8x8xf32> to vector<8xf32>
    %88 = vector.shape_cast %87 : vector<8xf32> to vector<8x1xf32>
    %89 = tpu.reciprocal %88 {approx = true} : vector<8x1xf32> -> vector<8x1xf32>
    %90 = vector.broadcast %89 : vector<8x1xf32> to vector<8x8xf32>
    %91 = arith.mulf %86, %90 : vector<8x8xf32>
    %92 = arith.truncf %91 : vector<8x8xf32> to vector<8x8xbf16>
    %93 = arith.truncf %76 : vector<8x8xf32> to vector<8x8xbf16>
    %cst_43 = arith.constant dense<0.000000e+00> : vector<8x8xf32>
    %94 = tpu.matmul %92, %93, %cst_43 {dimension_numbers = #tpu.dot_dimension_numbers<[1], [0], [0], [1], [0, 0, 1, 1], [], []>} : vector<8x8xbf16>, vector<8x8xbf16>, vector<8x8xf32> -> vector<8x8xf32>
    %c0_44 = arith.constant 0 : index
    %c16_45 = arith.constant 16 : index
    %95 = vector.load %arg15[%c0_44, %c16_45] : memref<8x32xf32, #tpu.memory_space<vmem>>, vector<8x8xf32>
    tpu.vector_store %arg15[%c0_44, %c16_45], %94 {strides = array<i32>} : memref<8x32xf32, #tpu.memory_space<vmem>>, vector<8x8xf32>,
    %c0_46 = arith.constant 0 : index
    %c24 = arith.constant 24 : index
    %96 = vector.load %arg14[%c0_46, %c24] : memref<8x96xf32, #tpu.memory_space<vmem>>, vector<8x8xf32>
    %c0_47 = arith.constant 0 : index
    %c56 = arith.constant 56 : index
    %97 = vector.load %arg14[%c0_47, %c56] : memref<8x96xf32, #tpu.memory_space<vmem>>, vector<8x8xf32>
    %c0_48 = arith.constant 0 : index
    %c88 = arith.constant 88 : index
    %98 = vector.load %arg14[%c0_48, %c88] : memref<8x96xf32, #tpu.memory_space<vmem>>, vector<8x8xf32>
    %99 = arith.truncf %96 : vector<8x8xf32> to vector<8x8xbf16>
    %100 = arith.truncf %97 : vector<8x8xf32> to vector<8x8xbf16>
    %cst_49 = arith.constant dense<0.000000e+00> : vector<8x8xf32>
    %101 = tpu.matmul %99, %100, %cst_49 {dimension_numbers = #tpu.dot_dimension_numbers<[1], [1], [0], [0], [0, 0, 1, 0], [], []>} : vector<8x8xbf16>, vector<8x8xbf16>, vector<8x8xf32> -> vector<8x8xf32>
    %cst_50 = arith.constant 0.353553385 : f32
    %102 = vector.broadcast %cst_50 : f32 to vector<8x8xf32>
    %103 = arith.mulf %101, %102 : vector<8x8xf32>
    %cst_51 = arith.constant dense<0xFF800000> : vector<8xf32>
    %104 = vector.multi_reduction <maximumf>, %103, %cst_51 [1] : vector<8x8xf32> to vector<8xf32>
    %105 = vector.shape_cast %104 : vector<8xf32> to vector<8x1xf32>
    %106 = vector.broadcast %105 : vector<8x1xf32> to vector<8x8xf32>
    %107 = arith.subf %103, %106 : vector<8x8xf32>
    %108 = math.exp %107 : vector<8x8xf32>
    %cst_52 = arith.constant dense<0.000000e+00> : vector<8xf32>
    %109 = vector.multi_reduction <add>, %108, %cst_52 [1] : vector<8x8xf32> to vector<8xf32>
    %110 = vector.shape_cast %109 : vector<8xf32> to vector<8x1xf32>
    %111 = tpu.reciprocal %110 {approx = true} : vector<8x1xf32> -> vector<8x1xf32>
    %112 = vector.broadcast %111 : vector<8x1xf32> to vector<8x8xf32>
    %113 = arith.mulf %108, %112 : vector<8x8xf32>
    %114 = arith.truncf %113 : vector<8x8xf32> to vector<8x8xbf16>
    %115 = arith.truncf %98 : vector<8x8xf32> to vector<8x8xbf16>
    %cst_53 = arith.constant dense<0.000000e+00> : vector<8x8xf32>
    %116 = tpu.matmul %114, %115, %cst_53 {dimension_numbers = #tpu.dot_dimension_numbers<[1], [0], [0], [1], [0, 0, 1, 1], [], []>} : vector<8x8xbf16>, vector<8x8xbf16>, vector<8x8xf32> -> vector<8x8xf32>
    %c0_54 = arith.constant 0 : index
    %c24_55 = arith.constant 24 : index
    %117 = vector.load %arg15[%c0_54, %c24_55] : memref<8x32xf32, #tpu.memory_space<vmem>>, vector<8x8xf32>
    tpu.vector_store %arg15[%c0_54, %c24_55], %116 {strides = array<i32>} : memref<8x32xf32, #tpu.memory_space<vmem>>, vector<8x8xf32>,
    %c0_56 = arith.constant 0 : index
    %c0_57 = arith.constant 0 : index
    %118 = vector.load %arg15[%c0_56, %c0_57] : memref<8x32xf32, #tpu.memory_space<vmem>>, vector<8x32xf32>
    %119 = arith.truncf %118 : vector<8x32xf32> to vector<8x32xbf16>
    %c0_58 = arith.constant 0 : index
    %c0_59 = arith.constant 0 : index
    %120 = vector.load %arg5[%c0_58, %c0_59] : memref<32x32xbf16, #tpu.memory_space<vmem>>, vector<32x32xbf16>
    %cst_60 = arith.constant dense<0.000000e+00> : vector<8x32xf32>
    %121 = tpu.matmul %119, %120, %cst_60 {dimension_numbers = #tpu.dot_dimension_numbers<[1], [0], [0], [1], [0, 0, 1, 1], [], []>} : vector<8x32xbf16>, vector<32x32xbf16>, vector<8x32xf32> -> vector<8x32xf32>
    %122 = arith.addf %1, %121 : vector<8x32xf32>
    %c0_61 = arith.constant 0 : index
    %c0_62 = arith.constant 0 : index
    %123 = vector.load %arg6[%c0_61, %c0_62] : memref<1x32xf32, #tpu.memory_space<vmem>>, vector<1x32xf32>
    %124 = vector.broadcast %123 : vector<1x32xf32> to vector<8x32xf32>
    %125 = arith.addf %122, %124 : vector<8x32xf32>
    %c0_63 = arith.constant 0 : index
    %c0_64 = arith.constant 0 : index
    %126 = vector.load %arg7[%c0_63, %c0_64] : memref<1x32xf32, #tpu.memory_space<vmem>>, vector<1x32xf32>
    %c0_65 = arith.constant 0 : index
    %c0_66 = arith.constant 0 : index
    %127 = vector.load %arg8[%c0_65, %c0_66] : memref<1x32xf32, #tpu.memory_space<vmem>>, vector<1x32xf32>
    %cst_67 = arith.constant dense<0.000000e+00> : vector<8xf32>
    %128 = vector.multi_reduction <add>, %125, %cst_67 [1] : vector<8x32xf32> to vector<8xf32>
    %129 = vector.shape_cast %128 : vector<8xf32> to vector<8x1xf32>
    %cst_68 = arith.constant 3.200000e+01 : f32
    %130 = vector.broadcast %cst_68 : f32 to vector<8x1xf32>
    %131 = arith.divf %129, %130 : vector<8x1xf32>
    %132 = vector.broadcast %131 : vector<8x1xf32> to vector<8x32xf32>
    %133 = arith.subf %125, %132 : vector<8x32xf32>
    %134 = arith.mulf %133, %133 : vector<8x32xf32>
    %cst_69 = arith.constant dense<0.000000e+00> : vector<8xf32>
    %135 = vector.multi_reduction <add>, %134, %cst_69 [1] : vector<8x32xf32> to vector<8xf32>
    %136 = vector.shape_cast %135 : vector<8xf32> to vector<8x1xf32>
    %cst_70 = arith.constant 3.200000e+01 : f32
    %137 = vector.broadcast %cst_70 : f32 to vector<8x1xf32>
    %138 = arith.divf %136, %137 : vector<8x1xf32>
    %139 = vector.broadcast %131 : vector<8x1xf32> to vector<8x32xf32>
    %140 = arith.subf %125, %139 : vector<8x32xf32>
    %cst_71 = arith.constant 9.99999974E-6 : f32
    %141 = vector.broadcast %cst_71 : f32 to vector<8x1xf32>
    %142 = arith.addf %138, %141 : vector<8x1xf32>
    %143 = math.rsqrt %142 : vector<8x1xf32>
    %144 = vector.broadcast %143 : vector<8x1xf32> to vector<8x32xf32>
    %145 = arith.mulf %140, %144 : vector<8x32xf32>
    %146 = vector.broadcast %126 : vector<1x32xf32> to vector<8x32xf32>
    %147 = arith.mulf %145, %146 : vector<8x32xf32>
    %148 = vector.broadcast %127 : vector<1x32xf32> to vector<8x32xf32>
    %149 = arith.addf %147, %148 : vector<8x32xf32>
    %150 = arith.truncf %149 : vector<8x32xf32> to vector<8x32xbf16>
    %c0_72 = arith.constant 0 : index
    %c0_73 = arith.constant 0 : index
    %151 = vector.load %arg9[%c0_72, %c0_73] : memref<32x64xbf16, #tpu.memory_space<vmem>>, vector<32x64xbf16>
    %cst_74 = arith.constant dense<0.000000e+00> : vector<8x64xf32>
    %152 = tpu.matmul %150, %151, %cst_74 {dimension_numbers = #tpu.dot_dimension_numbers<[1], [0], [0], [1], [0, 0, 1, 1], [], []>} : vector<8x32xbf16>, vector<32x64xbf16>, vector<8x64xf32> -> vector<8x64xf32>
    %c0_75 = arith.constant 0 : index
    %c0_76 = arith.constant 0 : index
    %153 = vector.load %arg10[%c0_75, %c0_76] : memref<1x64xf32, #tpu.memory_space<vmem>>, vector<1x64xf32>
    %154 = vector.broadcast %153 : vector<1x64xf32> to vector<8x64xf32>
    %155 = arith.addf %152, %154 : vector<8x64xf32>
    %cst_77 = arith.constant 5.000000e-01 : f32
    %156 = vector.broadcast %cst_77 : f32 to vector<8x64xf32>
    %157 = arith.mulf %156, %155 : vector<8x64xf32>
    %cst_78 = arith.constant 0.707106769 : f32
    %158 = vector.broadcast %cst_78 : f32 to vector<8x64xf32>
    %159 = arith.mulf %155, %158 : vector<8x64xf32>
    %160 = math.absf %159 : vector<8x64xf32>
    %cst_79 = arith.constant 0.327591091 : f32
    %161 = vector.broadcast %cst_79 : f32 to vector<8x64xf32>
    %162 = arith.mulf %161, %160 : vector<8x64xf32>
    %cst_80 = arith.constant 1.000000e+00 : f32
    %163 = vector.broadcast %cst_80 : f32 to vector<8x64xf32>
    %164 = arith.addf %163, %162 : vector<8x64xf32>
    %165 = tpu.reciprocal %164 {approx = true} : vector<8x64xf32> -> vector<8x64xf32>
    %cst_81 = arith.constant 1.06140542 : f32
    %166 = vector.broadcast %cst_81 : f32 to vector<8x64xf32>
    %167 = arith.mulf %166, %165 : vector<8x64xf32>
    %cst_82 = arith.constant -1.45315206 : f32
    %168 = vector.broadcast %cst_82 : f32 to vector<8x64xf32>
    %169 = arith.addf %167, %168 : vector<8x64xf32>
    %170 = arith.mulf %169, %165 : vector<8x64xf32>
    %cst_83 = arith.constant 1.42141378 : f32
    %171 = vector.broadcast %cst_83 : f32 to vector<8x64xf32>
    %172 = arith.addf %170, %171 : vector<8x64xf32>
    %173 = arith.mulf %172, %165 : vector<8x64xf32>
    %cst_84 = arith.constant -0.284496725 : f32
    %174 = vector.broadcast %cst_84 : f32 to vector<8x64xf32>
    %175 = arith.addf %173, %174 : vector<8x64xf32>
    %176 = arith.mulf %175, %165 : vector<8x64xf32>
    %cst_85 = arith.constant 0.254829586 : f32
    %177 = vector.broadcast %cst_85 : f32 to vector<8x64xf32>
    %178 = arith.addf %176, %177 : vector<8x64xf32>
    %179 = arith.mulf %178, %165 : vector<8x64xf32>
    %cst_86 = arith.constant 0.000000e+00 : f32
    %180 = vector.broadcast %cst_86 : f32 to vector<8x64xf32>
    %181 = arith.subf %180, %160 : vector<8x64xf32>
    %182 = arith.mulf %181, %160 : vector<8x64xf32>
    %183 = math.exp %182 : vector<8x64xf32>
    %184 = arith.mulf %179, %183 : vector<8x64xf32>
    %cst_87 = arith.constant 1.000000e+00 : f32
    %185 = vector.broadcast %cst_87 : f32 to vector<8x64xf32>
    %186 = arith.subf %185, %184 : vector<8x64xf32>
    %cst_88 = arith.constant 0.000000e+00 : f32
    %187 = vector.broadcast %cst_88 : f32 to vector<8x64xf32>
    %188 = arith.cmpf oge, %159, %187 : vector<8x64xf32>
    %cst_89 = arith.constant 0.000000e+00 : f32
    %189 = vector.broadcast %cst_89 : f32 to vector<8x64xf32>
    %190 = arith.subf %189, %186 : vector<8x64xf32>
    %191 = arith.select %188, %186, %190 : vector<8x64xi1>, vector<8x64xf32>
    %cst_90 = arith.constant 1.000000e+00 : f32
    %192 = vector.broadcast %cst_90 : f32 to vector<8x64xf32>
    %193 = arith.addf %192, %191 : vector<8x64xf32>
    %194 = arith.mulf %157, %193 : vector<8x64xf32>
    %195 = arith.truncf %194 : vector<8x64xf32> to vector<8x64xbf16>
    %c0_91 = arith.constant 0 : index
    %c0_92 = arith.constant 0 : index
    %196 = vector.load %arg11[%c0_91, %c0_92] : memref<64x32xbf16, #tpu.memory_space<vmem>>, vector<64x32xbf16>
    %cst_93 = arith.constant dense<0.000000e+00> : vector<8x32xf32>
    %197 = tpu.matmul %195, %196, %cst_93 {dimension_numbers = #tpu.dot_dimension_numbers<[1], [0], [0], [1], [0, 0, 1, 1], [], []>} : vector<8x64xbf16>, vector<64x32xbf16>, vector<8x32xf32> -> vector<8x32xf32>
    %c0_94 = arith.constant 0 : index
    %c0_95 = arith.constant 0 : index
    %198 = vector.load %arg12[%c0_94, %c0_95] : memref<1x32xf32, #tpu.memory_space<vmem>>, vector<1x32xf32>
    %199 = vector.broadcast %198 : vector<1x32xf32> to vector<8x32xf32>
    %200 = arith.addf %197, %199 : vector<8x32xf32>
    %201 = arith.addf %125, %200 : vector<8x32xf32>
    %c0_96 = arith.constant 0 : index
    %c0_97 = arith.constant 0 : index
    %c0_98 = arith.constant 0 : index
    %202 = vector.load %arg13[%c0_96, %c0_97, %c0_98] : memref<1x8x32xf32, #tpu.memory_space<vmem>>, vector<1x8x32xf32>
    %203 = vector.shape_cast %202 : vector<1x8x32xf32> to vector<8x32xf32>
    %204 = vector.shape_cast %201 : vector<8x32xf32> to vector<1x8x32xf32>
    tpu.vector_store %arg13[%c0_96, %c0_97, %c0_98], %204 {strides = array<i32>} : memref<1x8x32xf32, #tpu.memory_space<vmem>>, vector<1x8x32xf32>,
    return
  }
  func.func @transform_0(%arg0: i32) -> (i32, i32, i32) {
    %c0_i32 = arith.constant 0 : i32
    %c0_i32_0 = arith.constant 0 : i32
    %c0_i32_1 = arith.constant 0 : i32
    return %arg0, %c0_i32, %c0_i32_0 : i32, i32, i32
  }
  func.func @transform_1(%arg0: i32) -> (i32, i32) {
    %c0_i32 = arith.constant 0 : i32
    %c0_i32_0 = arith.constant 0 : i32
    %c0_i32_1 = arith.constant 0 : i32
    return %c0_i32, %c0_i32_0 : i32, i32
  }
  func.func @transform_2(%arg0: i32) -> (i32, i32) {
    %c0_i32 = arith.constant 0 : i32
    %c0_i32_0 = arith.constant 0 : i32
    %c0_i32_1 = arith.constant 0 : i32
    return %c0_i32, %c0_i32_0 : i32, i32
  }
  func.func @transform_3(%arg0: i32) -> (i32, i32) {
    %c0_i32 = arith.constant 0 : i32
    %c0_i32_0 = arith.constant 0 : i32
    %c0_i32_1 = arith.constant 0 : i32
    return %c0_i32, %c0_i32_0 : i32, i32
  }
  func.func @transform_4(%arg0: i32) -> (i32, i32) {
    %c0_i32 = arith.constant 0 : i32
    %c0_i32_0 = arith.constant 0 : i32
    %c0_i32_1 = arith.constant 0 : i32
    return %c0_i32, %c0_i32_0 : i32, i32
  }
  func.func @transform_5(%arg0: i32) -> (i32, i32) {
    %c0_i32 = arith.constant 0 : i32
    %c0_i32_0 = arith.constant 0 : i32
    %c0_i32_1 = arith.constant 0 : i32
    return %c0_i32, %c0_i32_0 : i32, i32
  }
  func.func @transform_6(%arg0: i32) -> (i32, i32) {
    %c0_i32 = arith.constant 0 : i32
    %c0_i32_0 = arith.constant 0 : i32
    %c0_i32_1 = arith.constant 0 : i32
    return %c0_i32, %c0_i32_0 : i32, i32
  }
  func.func @transform_7(%arg0: i32) -> (i32, i32) {
    %c0_i32 = arith.constant 0 : i32
    %c0_i32_0 = arith.constant 0 : i32
    %c0_i32_1 = arith.constant 0 : i32
    return %c0_i32, %c0_i32_0 : i32, i32
  }
  func.func @transform_8(%arg0: i32) -> (i32, i32) {
    %c0_i32 = arith.constant 0 : i32
    %c0_i32_0 = arith.constant 0 : i32
    %c0_i32_1 = arith.constant 0 : i32
    return %c0_i32, %c0_i32_0 : i32, i32
  }
  func.func @transform_9(%arg0: i32) -> (i32, i32) {
    %c0_i32 = arith.constant 0 : i32
    %c0_i32_0 = arith.constant 0 : i32
    %c0_i32_1 = arith.constant 0 : i32
    return %c0_i32, %c0_i32_0 : i32, i32
  }
  func.func @transform_10(%arg0: i32) -> (i32, i32) {
    %c0_i32 = arith.constant 0 : i32
    %c0_i32_0 = arith.constant 0 : i32
    %c0_i32_1 = arith.constant 0 : i32
    return %c0_i32, %c0_i32_0 : i32, i32
  }
  func.func @transform_11(%arg0: i32) -> (i32, i32) {
    %c0_i32 = arith.constant 0 : i32
    %c0_i32_0 = arith.constant 0 : i32
    %c0_i32_1 = arith.constant 0 : i32
    return %c0_i32, %c0_i32_0 : i32, i32
  }
  func.func @transform_12(%arg0: i32) -> (i32, i32, i32) {
    %c0_i32 = arith.constant 0 : i32
    %c0_i32_0 = arith.constant 0 : i32
    %c0_i32_1 = arith.constant 0 : i32
    return %arg0, %c0_i32, %c0_i32_0 : i32, i32, i32
  }
}

</mosaic_0001>

<llo_original>
// kernel: tpu_custom_call.1
$region0: #{tpu_custom_call.1}
  #allocation0 [shape = 'u32[]', space=smem, size = 0x4, offset = 0x4, fixed_abs, tag = 'smem constant byte address 0x4 - core index']
  #allocation1 [shape = 'u32[144,128]{1,0:T(1,128)}', space=vmem, size = 0x12000, scoped, tag = 'internal scratch']
  #allocation2 [shape = 'f32[8,96]{1,0:T(8,128)}', space=vmem, size = 0x1000, scoped, tag = 'scratch operand']
  #allocation3 [shape = 'f32[8,32]{1,0:T(8,128)}', space=vmem, size = 0x1000, scoped, tag = 'scratch operand']
  %s0 = inlined_call_operand.vmem [shape: f32[2,8,32], index: 0, kind: input, shape index: {}]
  %s1 = inlined_call_operand.vmem [shape: f32[1,32], index: 1, kind: input, shape index: {}]
  %s2 = inlined_call_operand.vmem [shape: f32[1,32], index: 2, kind: input, shape index: {}]
  %s3 = inlined_call_operand.vmem [shape: bf16[32,96], index: 3, kind: input, shape index: {}]
  %s4 = inlined_call_operand.vmem [shape: bf16[32,32], index: 4, kind: input, shape index: {}]
  %s5 = inlined_call_operand.vmem [shape: f32[1,32], index: 5, kind: input, shape index: {}]
  %s6 = inlined_call_operand.vmem [shape: f32[1,32], index: 6, kind: input, shape index: {}]
  %s7 = inlined_call_operand.vmem [shape: f32[1,32], index: 7, kind: input, shape index: {}]
  %s8 = inlined_call_operand.hbm [shape: bf16[32,64], index: 8, kind: input, shape index: {}]
  %s9 = inlined_call_operand.vmem [shape: f32[1,64], index: 9, kind: input, shape index: {}]
  %s10 = inlined_call_operand.vmem [shape: bf16[64,32], index: 10, kind: input, shape index: {}]
  %s11 = inlined_call_operand.vmem [shape: f32[1,32], index: 11, kind: input, shape index: {}]
  %s12 = inlined_call_operand.hbm [shape: f32[2,8,32], index: 12, kind: output, shape index: {}]
  %s13 = sld [smem:[#allocation0]]
  $region85: #{tpu_custom_call.1} parent=0
    _
  %s15 = ssub.s32 1, %s13
  %s16 = scalar_select 0, %s15, %s13
  $region1: #{tpu_custom_call.1} parent=0
    #allocation4 [shape = 'u8[8192]{0}', space=vmem, size = 0x2000, scoped, tag = 'input window, operand 8, single buffered']
    #allocation5 [shape = 's32[2]{0}', space=sflag, size = 0x8, scoped, tag = 'scoped memory for tpu_custom_call.1']
    #allocation6 [shape = 's32[2]{0}', space=sflag, size = 0x8, scoped, tag = 'scoped memory for tpu_custom_call.1']
    #allocation7 [shape = 'u8[8192]{0}', space=vmem, size = 0x2000, scoped, tag = 'output window, operand 0']
    %17 = vsyncpa [#allocation5], 0
    %18 = vsyncpa [#allocation6], 0
    %s19 = scalar_lea.sflag [#allocation6], 1
    %20 = vsyncpa %s19, 0
    loop: start=0, step=1, limit=4
    $region2: #{tpu_custom_call.1} parent=1 // loop_pre_header
      _
    $region3: #{tpu_custom_call.1} parent=1 // loop_header
      %s22 = sphi 0, %s26
      %p23 = scmp.ge.s32.totalorder %s22, 4
      %s32 = sphi 0, %s34
      %s35 = sphi 0, %s32
      %s36 = sphi 0, %s35
      %s52 = sphi 0, %s36
      %s56 = sphi 0, %s56
      %s58 = sphi 0, %s56
      %s59 = sphi 0, %s58
      %s73 = sphi 0, %s59
      %s77 = sphi 0, %s77
      %s79 = sphi 0, %s77
      %s80 = sphi 0, %s79
      %s94 = sphi 0, %s80
      %s98 = sphi 0, %s98
      %s100 = sphi 0, %s98
      %s101 = sphi 0, %s100
      %s115 = sphi 0, %s101
      %s119 = sphi 0, %s119
      %s121 = sphi 0, %s119
      %s122 = sphi 0, %s121
      %s136 = sphi 0, %s122
      %s140 = sphi 0, %s140
      %s142 = sphi 0, %s140
      %s143 = sphi 0, %s142
      %s157 = sphi 0, %s143
      %s161 = sphi 0, %s161
      %s163 = sphi 0, %s161
      %s164 = sphi 0, %s163
      %s178 = sphi 0, %s164
      %s182 = sphi 0, %s182
      %s184 = sphi 0, %s182
      %s185 = sphi 0, %s184
      %s199 = sphi 0, %s185
      %s203 = sphi 0, %s203
      %s205 = sphi 0, %s203
      %s206 = sphi 0, %s205
      %s220 = sphi 0, %s206
      %s224 = sphi 0, %s224
      %s226 = sphi 0, %s224
      %s227 = sphi 0, %s226
      %s241 = sphi 0, %s227
      %s245 = sphi 0, %s245
      %s247 = sphi 0, %s245
      %s248 = sphi 0, %s247
      %s262 = sphi 0, %s248
      %s266 = sphi 0, %s266
      %s268 = sphi 0, %s266
      %s269 = sphi 0, %s268
      %s283 = sphi 0, %s269
      %s289 = sphi 0, %s291
      %s292 = sphi 0, %s289
      %s293 = sphi 0, %s292
      %s309 = sphi 0, %s293
    $region4: #{tpu_custom_call.1} parent=1 // loop_header_branch
      %25 = sbr.rel (%p23) target = $region8
    $region5: #{tpu_custom_call.1} parent=1 // loop_body
      %s27 = ssub.s32 %s22, 1
      %s28 = ssub.s32 %s22, 2
      %s29 = sadd.s32 %s22, 1
      %s30 = ssub.s32 %s22, %s29
      %p31 = scmp.eq.s32.totalorder %s30, 0
      %s33 = sadd.s32 %s32, 1
      %s34 = scalar_select %p31, %s32, %s33
      %p37 = pneg %p31
      %p38 = scmp.eq.s32.totalorder %s22, 1
      %p39 = por %p37, %p38
      %p40 = scmp.ne.s32.totalorder %s32, %s35
      %p41 = scmp.eq.s32.totalorder %s22, 0
      %p42 = por %p40, %p41
      %p43 = scmp.ne.s32.totalorder %s32, %s35
      %p44 = scmp.eq.s32.totalorder %s27, 1
      %p45 = por %p43, %p44
      %p46 = scmp.ne.s32.totalorder %s35, %s36
      %p47 = scmp.eq.s32.totalorder %s27, 0
      %p48 = por %p46, %p47
      %p49 = scmp.ne.s32.totalorder %s35, %s36
      %p50 = scmp.eq.s32.totalorder %s28, 1
      %p51 = por %p49, %p50
      %p53 = scmp.ne.s32.totalorder %s36, %s52
      %p54 = scmp.eq.s32.totalorder %s28, 0
      %p55 = por %p53, %p54
      %s57 = sadd.s32 %s56, 1
      %p60 = scmp.eq.s32.totalorder %s22, 1
      %p61 = scmp.ne.s32.totalorder %s56, %s58
      %p62 = scmp.eq.s32.totalorder %s22, 0
      %p63 = por %p61, %p62
      %p64 = scmp.ne.s32.totalorder %s56, %s58
      %p65 = scmp.eq.s32.totalorder %s27, 1
      %p66 = por %p64, %p65
      %p67 = scmp.ne.s32.totalorder %s58, %s59
      %p68 = scmp.eq.s32.totalorder %s27, 0
      %p69 = por %p67, %p68
      %p70 = scmp.ne.s32.totalorder %s58, %s59
      %p71 = scmp.eq.s32.totalorder %s28, 1
      %p72 = por %p70, %p71
      %p74 = scmp.ne.s32.totalorder %s59, %s73
      %p75 = scmp.eq.s32.totalorder %s28, 0
      %p76 = por %p74, %p75
      %s78 = sadd.s32 %s77, 1
      %p81 = scmp.eq.s32.totalorder %s22, 1
      %p82 = scmp.ne.s32.totalorder %s77, %s79
      %p83 = scmp.eq.s32.totalorder %s22, 0
      %p84 = por %p82, %p83
      %p85 = scmp.ne.s32.totalorder %s77, %s79
      %p86 = scmp.eq.s32.totalorder %s27, 1
      %p87 = por %p85, %p86
      %p88 = scmp.ne.s32.totalorder %s79, %s80
      %p89 = scmp.eq.s32.totalorder %s27, 0
      %p90 = por %p88, %p89
      %p91 = scmp.ne.s32.totalorder %s79, %s80
      %p92 = scmp.eq.s32.totalorder %s28, 1
      %p93 = por %p91, %p92
      %p95 = scmp.ne.s32.totalorder %s80, %s94
      %p96 = scmp.eq.s32.totalorder %s28, 0
      %p97 = por %p95, %p96
      %s99 = sadd.s32 %s98, 1
      %p102 = scmp.eq.s32.totalorder %s22, 1
      %p103 = scmp.ne.s32.totalorder %s98, %s100
      %p104 = scmp.eq.s32.totalorder %s22, 0
      %p105 = por %p103, %p104
      %p106 = scmp.ne.s32.totalorder %s98, %s100
      %p107 = scmp.eq.s32.totalorder %s27, 1
      %p108 = por %p106, %p107
      %p109 = scmp.ne.s32.totalorder %s100, %s101
      %p110 = scmp.eq.s32.totalorder %s27, 0
      %p111 = por %p109, %p110
      %p112 = scmp.ne.s32.totalorder %s100, %s101
      %p113 = scmp.eq.s32.totalorder %s28, 1
      %p114 = por %p112, %p113
      %p116 = scmp.ne.s32.totalorder %s101, %s115
      %p117 = scmp.eq.s32.totalorder %s28, 0
      %p118 = por %p116, %p117
      %s120 = sadd.s32 %s119, 1
      %p123 = scmp.eq.s32.totalorder %s22, 1
      %p124 = scmp.ne.s32.totalorder %s119, %s121
      %p125 = scmp.eq.s32.totalorder %s22, 0
      %p126 = por %p124, %p125
      %p127 = scmp.ne.s32.totalorder %s119, %s121
      %p128 = scmp.eq.s32.totalorder %s27, 1
      %p129 = por %p127, %p128
      %p130 = scmp.ne.s32.totalorder %s121, %s122
      %p131 = scmp.eq.s32.totalorder %s27, 0
      %p132 = por %p130, %p131
      %p133 = scmp.ne.s32.totalorder %s121, %s122
      %p134 = scmp.eq.s32.totalorder %s28, 1
      %p135 = por %p133, %p134
      %p137 = scmp.ne.s32.totalorder %s122, %s136
      %p138 = scmp.eq.s32.totalorder %s28, 0
      %p139 = por %p137, %p138
      %s141 = sadd.s32 %s140, 1
      %p144 = scmp.eq.s32.totalorder %s22, 1
      %p145 = scmp.ne.s32.totalorder %s140, %s142
      %p146 = scmp.eq.s32.totalorder %s22, 0
      %p147 = por %p145, %p146
      %p148 = scmp.ne.s32.totalorder %s140, %s142
      %p149 = scmp.eq.s32.totalorder %s27, 1
      %p150 = por %p148, %p149
      %p151 = scmp.ne.s32.totalorder %s142, %s143
      %p152 = scmp.eq.s32.totalorder %s27, 0
      %p153 = por %p151, %p152
      %p154 = scmp.ne.s32.totalorder %s142, %s143
      %p155 = scmp.eq.s32.totalorder %s28, 1
      %p156 = por %p154, %p155
      %p158 = scmp.ne.s32.totalorder %s143, %s157
      %p159 = scmp.eq.s32.totalorder %s28, 0
      %p160 = por %p158, %p159
      %s162 = sadd.s32 %s161, 1
      %p165 = scmp.eq.s32.totalorder %s22, 1
      %p166 = scmp.ne.s32.totalorder %s161, %s163
      %p167 = scmp.eq.s32.totalorder %s22, 0
      %p168 = por %p166, %p167
      %p169 = scmp.ne.s32.totalorder %s161, %s163
      %p170 = scmp.eq.s32.totalorder %s27, 1
      %p171 = por %p169, %p170
      %p172 = scmp.ne.s32.totalorder %s163, %s164
      %p173 = scmp.eq.s32.totalorder %s27, 0
      %p174 = por %p172, %p173
      %p175 = scmp.ne.s32.totalorder %s163, %s164
      %p176 = scmp.eq.s32.totalorder %s28, 1
      %p177 = por %p175, %p176
      %p179 = scmp.ne.s32.totalorder %s164, %s178
      %p180 = scmp.eq.s32.totalorder %s28, 0
      %p181 = por %p179, %p180
      %s183 = sadd.s32 %s182, 1
      %p186 = scmp.eq.s32.totalorder %s22, 1
      %p187 = scmp.ne.s32.totalorder %s182, %s184
      %p188 = scmp.eq.s32.totalorder %s22, 0
      %p189 = por %p187, %p188
      %p190 = scmp.ne.s32.totalorder %s182, %s184
      %p191 = scmp.eq.s32.totalorder %s27, 1
      %p192 = por %p190, %p191
      %p193 = scmp.ne.s32.totalorder %s184, %s185
      %p194 = scmp.eq.s32.totalorder %s27, 0
      %p195 = por %p193, %p194
      %p196 = scmp.ne.s32.totalorder %s184, %s185
      %p197 = scmp.eq.s32.totalorder %s28, 1
      %p198 = por %p196, %p197
      %p200 = scmp.ne.s32.totalorder %s185, %s199
      %p201 = scmp.eq.s32.totalorder %s28, 0
      %p202 = por %p200, %p201
      %s204 = sadd.s32 %s203, 1
      %p207 = scmp.eq.s32.totalorder %s22, 1
      %p208 = scmp.ne.s32.totalorder %s203, %s205
      %p209 = scmp.eq.s32.totalorder %s22, 0
      %p210 = por %p208, %p209
      %p211 = scmp.ne.s32.totalorder %s203, %s205
      %p212 = scmp.eq.s32.totalorder %s27, 1
      %p213 = por %p211, %p212
      %p214 = scmp.ne.s32.totalorder %s205, %s206
      %p215 = scmp.eq.s32.totalorder %s27, 0
      %p216 = por %p214, %p215
      %p217 = scmp.ne.s32.totalorder %s205, %s206
      %p218 = scmp.eq.s32.totalorder %s28, 1
      %p219 = por %p217, %p218
      %p221 = scmp.ne.s32.totalorder %s206, %s220
      %p222 = scmp.eq.s32.totalorder %s28, 0
      %p223 = por %p221, %p222
      %s225 = sadd.s32 %s224, 1
      %p228 = scmp.eq.s32.totalorder %s22, 1
      %p229 = scmp.ne.s32.totalorder %s224, %s226
      %p230 = scmp.eq.s32.totalorder %s22, 0
      %p231 = por %p229, %p230
      %p232 = scmp.ne.s32.totalorder %s224, %s226
      %p233 = scmp.eq.s32.totalorder %s27, 1
      %p234 = por %p232, %p233
      %p235 = scmp.ne.s32.totalorder %s226, %s227
      %p236 = scmp.eq.s32.totalorder %s27, 0
      %p237 = por %p235, %p236
      %p238 = scmp.ne.s32.totalorder %s226, %s227
      %p239 = scmp.eq.s32.totalorder %s28, 1
      %p240 = por %p238, %p239
      %p242 = scmp.ne.s32.totalorder %s227, %s241
      %p243 = scmp.eq.s32.totalorder %s28, 0
      %p244 = por %p242, %p243
      %s246 = sadd.s32 %s245, 1
      %p249 = scmp.eq.s32.totalorder %s22, 1
      %p250 = scmp.ne.s32.totalorder %s245, %s247
      %p251 = scmp.eq.s32.totalorder %s22, 0
      %p252 = por %p250, %p251
      %p253 = scmp.ne.s32.totalorder %s245, %s247
      %p254 = scmp.eq.s32.totalorder %s27, 1
      %p255 = por %p253, %p254
      %p256 = scmp.ne.s32.totalorder %s247, %s248
      %p257 = scmp.eq.s32.totalorder %s27, 0
      %p258 = por %p256, %p257
      %p259 = scmp.ne.s32.totalorder %s247, %s248
      %p260 = scmp.eq.s32.totalorder %s28, 1
      %p261 = por %p259, %p260
      %p263 = scmp.ne.s32.totalorder %s248, %s262
      %p264 = scmp.eq.s32.totalorder %s28, 0
      %p265 = por %p263, %p264
      %s267 = sadd.s32 %s266, 1
      %p270 = scmp.eq.s32.totalorder %s22, 1
      %p271 = scmp.ne.s32.totalorder %s266, %s268
      %p272 = scmp.eq.s32.totalorder %s22, 0
      %p273 = por %p271, %p272
      %p274 = scmp.ne.s32.totalorder %s266, %s268
      %p275 = scmp.eq.s32.totalorder %s27, 1
      %p276 = por %p274, %p275
      %p277 = scmp.ne.s32.totalorder %s268, %s269
      %p278 = scmp.eq.s32.totalorder %s27, 0
      %p279 = por %p277, %p278
      %p280 = scmp.ne.s32.totalorder %s268, %s269
      %p281 = scmp.eq.s32.totalorder %s28, 1
      %p282 = por %p280, %p281
      %p284 = scmp.ne.s32.totalorder %s269, %s283
      %p285 = scmp.eq.s32.totalorder %s28, 0
      %p286 = por %p284, %p285
      %s287 = ssub.s32 %s22, %s29
      %p288 = scmp.eq.s32.totalorder %s287, 0
      %s290 = sadd.s32 %s289, 1
      %s291 = scalar_select %p288, %s289, %s290
      %p294 = pneg %p288
      %p295 = scmp.eq.s32.totalorder %s22, 1
      %p296 = por %p294, %p295
      %p297 = scmp.ne.s32.totalorder %s289, %s292
      %p298 = scmp.eq.s32.totalorder %s22, 0
      %p299 = por %p297, %p298
      %p300 = scmp.ne.s32.totalorder %s289, %s292
      %p301 = scmp.eq.s32.totalorder %s27, 1
      %p302 = por %p300, %p301
      %p303 = scmp.ne.s32.totalorder %s292, %s293
      %p304 = scmp.eq.s32.totalorder %s27, 0
      %p305 = por %p303, %p304
      %p306 = scmp.ne.s32.totalorder %s292, %s293
      %p307 = scmp.eq.s32.totalorder %s28, 1
      %p308 = por %p306, %p307
      %p310 = scmp.ne.s32.totalorder %s293, %s309
      %p311 = scmp.eq.s32.totalorder %s28, 0
      %p312 = por %p310, %p311
      %p313 = scmp.le.s32.totalorder 1, %s22
      %p314 = scmp.lt.s32.totalorder %s22, 3
      %p315 = pnand %p313, %p314
      %p316 = pneg %p315
      // Predicated region
      $region9: #{tpu_custom_call.1} parent=5 // pred_check
        _
      $region10: #{tpu_custom_call.1} parent=5 // pred_check_branch
        %318 = sbr.rel (%p315) target = $region12
      $region11: #{tpu_custom_call.1} parent=5 // pred_region
        %s319 = ssub.s32 %s22, 1
        // Predicated region
        $region13: #{tpu_custom_call.1} parent=11 // pred_check
          %p320 = pneg %p69
        $region14: #{tpu_custom_call.1} parent=11 // pred_check_branch
          %322 = sbr.rel (%p320) target = $region16
        $region15: #{tpu_custom_call.1} parent=11 // pred_region
          _
        $region16: #{tpu_custom_call.1} parent=11 // pred_fallthru
          _
        // Predicated region
        $region17: #{tpu_custom_call.1} parent=11 // pred_check
          %p323 = pneg %p90
        $region18: #{tpu_custom_call.1} parent=11 // pred_check_branch
          %325 = sbr.rel (%p323) target = $region20
        $region19: #{tpu_custom_call.1} parent=11 // pred_region
          _
        $region20: #{tpu_custom_call.1} parent=11 // pred_fallthru
          _
        // Predicated region
        $region21: #{tpu_custom_call.1} parent=11 // pred_check
          %p326 = pneg %p111
        $region22: #{tpu_custom_call.1} parent=11 // pred_check_branch
          %328 = sbr.rel (%p326) target = $region24
        $region23: #{tpu_custom_call.1} parent=11 // pred_region
          _
        $region24: #{tpu_custom_call.1} parent=11 // pred_fallthru
          _
        // Predicated region
        $region25: #{tpu_custom_call.1} parent=11 // pred_check
          %p329 = pneg %p132
        $region26: #{tpu_custom_call.1} parent=11 // pred_check_branch
          %331 = sbr.rel (%p329) target = $region28
        $region27: #{tpu_custom_call.1} parent=11 // pred_region
          _
        $region28: #{tpu_custom_call.1} parent=11 // pred_fallthru
          _
        // Predicated region
        $region29: #{tpu_custom_call.1} parent=11 // pred_check
          %p332 = pneg %p153
        $region30: #{tpu_custom_call.1} parent=11 // pred_check_branch
          %334 = sbr.rel (%p332) target = $region32
        $region31: #{tpu_custom_call.1} parent=11 // pred_region
          _
        $region32: #{tpu_custom_call.1} parent=11 // pred_fallthru
          _
        // Predicated region
        $region33: #{tpu_custom_call.1} parent=11 // pred_check
          %p335 = pneg %p174
        $region34: #{tpu_custom_call.1} parent=11 // pred_check_branch
          %337 = sbr.rel (%p335) target = $region36
        $region35: #{tpu_custom_call.1} parent=11 // pred_region
          _
        $region36: #{tpu_custom_call.1} parent=11 // pred_fallthru
          _
        // Predicated region
        $region37: #{tpu_custom_call.1} parent=11 // pred_check
          %p338 = pneg %p195
        $region38: #{tpu_custom_call.1} parent=11 // pred_check_branch
          %340 = sbr.rel (%p338) target = $region40
        $region39: #{tpu_custom_call.1} parent=11 // pred_region
          _
        $region40: #{tpu_custom_call.1} parent=11 // pred_fallthru
          _
        // Predicated region
        $region41: #{tpu_custom_call.1} parent=11 // pred_check
          %p341 = pneg %p216
        $region42: #{tpu_custom_call.1} parent=11 // pred_check_branch
          %343 = sbr.rel (%p341) target = $region44
        $region43: #{tpu_custom_call.1} parent=11 // pred_region
          %s345 = ssub.s32 256, 256
          %346 = vsyncadd [#allocation5], %s345
          %s347 = sshll.u32 [#allocation4], 4
          %s348 = int_to_ptr.vmem [resolvable:$true] %s347
          %353 = dma.hbm_to_vmem [thread:$0]  %s8, 256, %s348, [#allocation5], 64, 64, 4
        $region44: #{tpu_custom_call.1} parent=11 // pred_fallthru
          _
        // Predicated region
        $region45: #{tpu_custom_call.1} parent=11 // pred_check
          %p354 = pneg %p237
        $region46: #{tpu_custom_call.1} parent=11 // pred_check_branch
          %356 = sbr.rel (%p354) target = $region48
        $region47: #{tpu_custom_call.1} parent=11 // pred_region
          _
        $region48: #{tpu_custom_call.1} parent=11 // pred_fallthru
          _
        // Predicated region
        $region49: #{tpu_custom_call.1} parent=11 // pred_check
          %p357 = pneg %p258
        $region50: #{tpu_custom_call.1} parent=11 // pred_check_branch
          %359 = sbr.rel (%p357) target = $region52
        $region51: #{tpu_custom_call.1} parent=11 // pred_region
          _
        $region52: #{tpu_custom_call.1} parent=11 // pred_fallthru
          _
        // Predicated region
        $region53: #{tpu_custom_call.1} parent=11 // pred_check
          %p360 = pneg %p279
        $region54: #{tpu_custom_call.1} parent=11 // pred_check_branch
          %362 = sbr.rel (%p360) target = $region56
        $region55: #{tpu_custom_call.1} parent=11 // pred_region
          _
        $region56: #{tpu_custom_call.1} parent=11 // pred_fallthru
          _
      $region12: #{tpu_custom_call.1} parent=5 // pred_fallthru
        _
      %p363 = scmp.lt.s32.totalorder %s22, 2
      // Predicated region
      $region57: #{tpu_custom_call.1} parent=5 // pred_check
        %p364 = pneg %p363
      $region58: #{tpu_custom_call.1} parent=5 // pred_check_branch
        %366 = sbr.rel (%p364) target = $region60
      $region59: #{tpu_custom_call.1} parent=5 // pred_region
        // Predicated region
        $region61: #{tpu_custom_call.1} parent=59 // pred_check
          %p367 = pneg %p42
        $region62: #{tpu_custom_call.1} parent=59 // pred_check_branch
          %369 = sbr.rel (%p367) target = $region64
        $region63: #{tpu_custom_call.1} parent=59 // pred_region
          %p370 = scmp.lt.s32.totalorder %s22, 1
          %s371 = scalar_select %p370, %s22, 1
          %s372 = smul.addr %s371, 8
          %s373 = scalar_lea.vmem %s0, %s372
        $region64: #{tpu_custom_call.1} parent=59 // pred_fallthru
          _
      $region60: #{tpu_custom_call.1} parent=5 // pred_fallthru
        _
      %p374 = scmp.le.s32.totalorder 1, %s22
      %p375 = scmp.lt.s32.totalorder %s22, 3
      %p376 = pnand %p374, %p375
      %p377 = pneg %p376
      // Predicated region
      $region65: #{tpu_custom_call.1} parent=5 // pred_check
        _
      $region66: #{tpu_custom_call.1} parent=5 // pred_check_branch
        %379 = sbr.rel (%p376) target = $region68
      $region67: #{tpu_custom_call.1} parent=5 // pred_region
        %s380 = ssub.s32 %s22, 1
        // Predicated region
        $region69: #{tpu_custom_call.1} parent=67 // pred_check
          %p381 = pneg %p216
        $region70: #{tpu_custom_call.1} parent=67 // pred_check_branch
          %383 = sbr.rel (%p381) target = $region72
        $region71: #{tpu_custom_call.1} parent=67 // pred_region
          %384 = dma.done [#allocation5], 256
        $region72: #{tpu_custom_call.1} parent=67 // pred_fallthru
          _
        %p385 = scmp.lt.s32.totalorder %s27, 1
        %s386 = scalar_select %p385, %s27, 1
        %s387 = smul.addr %s386, 8
        %s388 = scalar_lea.vmem %s0, %s387
        %p389 = pneg %p48
        %p390 = pneg %p45
        %p391 = pneg %p69
        %p392 = pneg %p66
        %p393 = pneg %p90
        %p394 = pneg %p87
        %p395 = pneg %p111
        %p396 = pneg %p108
        %p397 = pneg %p132
        %p398 = pneg %p129
        %p399 = pneg %p153
        %p400 = pneg %p150
        %p401 = pneg %p174
        %p402 = pneg %p171
        %p403 = pneg %p195
        %p404 = pneg %p192
        %p405 = pneg %p216
        %p406 = pneg %p213
        %p407 = pneg %p237
        %p408 = pneg %p234
        %p409 = pneg %p258
        %p410 = pneg %p255
        %p411 = pneg %p279
        %p412 = pneg %p276
        %p413 = pneg %p305
        %p414 = pneg %p302
        %s415 = sand.u32 %s292, 1
        %s416 = scalar_lea.sflag [#allocation6], %s415
        %s417 = sand.u32 %s292, 1
        %s418 = smul.addr %s417, 8
        %s419 = scalar_lea.vmem [#allocation7], %s418
        %p420 = scmp.lt.s32.totalorder %s27, 1
        %s421 = scalar_select %p420, %s27, 1
        %s422 = smul.addr %s421, 8
        %s423 = scalar_lea.vmem %s0, %s422
        %v425 = vld [vmem:[%s423] sm:$0xff]
        %v426 = vld [vmem:[%s1] sm:$0x1]
        %v427 = vld [vmem:[%s2] sm:$0x1]
        %vm428 = vcmask 261120
        %v429 = vsel %vm428, %v425, 0.0
        %430 = vadd.xlane.f32.xlu0 %v429
        %v431 = vpop.xlane.xlu0 %430
        %v432 = vrcp.pop 32.0
        %v433 = vmul.f32 %v431, %v432
        %v434 = vsub.f32 %v425, %v433
        %v435 = vmul.f32 %v434, %v434
        %v436 = vsel %vm428, %v435, 0.0
        %437 = vadd.xlane.f32.xlu0 %v436
        %v438 = vpop.xlane.xlu0 %437
        %v439 = vmul.f32 %v438, %v432
        %v440 = vadd.f32 %v439, 1e-05
        %v441 = vrsqrt.pop %v440
        %v442 = vmul.f32 %v434, %v441
        %v444 = vlaneseq
        %v445 = vshrl.u32 %v444, 7
        %v446 = vsub.s32 0, %v445
        %v447 = vrot.slane %v426, %v446
        %v449 = vmul.f32 %v442, %v447
        %v451 = vlaneseq
        %v452 = vshrl.u32 %v451, 7
        %v453 = vsub.s32 0, %v452
        %v454 = vrot.slane %v427, %v453
        %v456 = vadd.f32 %v449, %v454
        %v457 = vpack.c.bf16 %v456, %v456
        %v458 = vld [vmem:[%s3] sm:$0xf]
        %v459 = vld [vmem:[%s3 + $0x4] sm:$0xf]
        %v460 = vld [vmem:[%s3 + $0x8] sm:$0xf]
        %v461 = vld [vmem:[%s3 + $0xc] sm:$0xf]
        %v466 = vunpack.c.l.b16 %v458
        %v467 = vunpack.c.l.b16 %v459
        %v468 = vunpack.c.l.b16 %v460
        %v469 = vunpack.c.l.b16 %v461
        %v470 = vpack.c.b16 %v467, %v466
        %v471 = vpack.c.b16 %v469, %v468
        %v475 = vsel %vm428, %v457, 0
        %477 = vmatprep.subr.bf16.mxu0 0
        %478 = vmatpush1.bf16.msra.mxu0 %v470
        %479 = vmatprep.subr.bf16.mxu0 0
        %480 = vmatpush1.bf16.msra.mxu0 %v471
        %481 = vmatprep.subr.bf16.mxu0 0
        %482 = vmatpush1.bf16.msra.mxu0 0
        %483 = vmatprep.subr.bf16.mxu0 0
        %484 = vmatpush1.bf16.msra.mxu0 0
        %485 = vmatprep.subr.bf16.mxu0 0
        %486 = vmatpush1.bf16.msra.mxu0 0
        %487 = vmatprep.subr.bf16.mxu0 0
        %488 = vmatpush1.bf16.msra.mxu0 0
        %489 = vmatprep.subr.bf16.mxu0 0
        %490 = vmatpush1.bf16.msra.mxu0 0
        %491 = vmatprep.subr.bf16.mxu0 0
        %492 = vmatpush1.bf16.msra.mxu0 0
        %493 = vmatprep.subr.bf16.mxu0 0
        %494 = vmatpush1.bf16.msra.mxu0 0
        %495 = vmatprep.subr.bf16.mxu0 0
        %496 = vmatpush1.bf16.msra.mxu0 0
        %497 = vmatprep.subr.bf16.mxu0 0
        %498 = vmatpush1.bf16.msra.mxu0 0
        %499 = vmatprep.subr.bf16.mxu0 0
        %500 = vmatpush1.bf16.msra.mxu0 0
        %501 = vmatprep.subr.bf16.mxu0 0
        %502 = vmatpush1.bf16.msra.mxu0 0
        %503 = vmatprep.subr.bf16.mxu0 0
        %504 = vmatpush1.bf16.msra.mxu0 0
        %505 = vmatprep.subr.bf16.mxu0 0
        %506 = vmatpush1.bf16.msra.mxu0 0
        %507 = vmatprep.subr.bf16.mxu0 0
        %508 = vmatpush1.bf16.msra.mxu0 0
        %509 = vmatprep.mubr.bf16.mxu0 0
        %510 = vmatmul.mubr.bf16.gmra.mrb[0].mxu0 %v475
        %v511 = vpop.f32.mrb[0].mxu0
        %v512 = vadd.f32 0.0, %v511
        %v513 = vpop.f32.mrb[0].mxu0
        %v514 = vpop.f32.mrb[0].mxu0
        %v515 = vpop.f32.mrb[0].mxu0
        %516 = vdwg.mxu0
        %vm517 = vcmask 785408
        %518 = vst.msk [vmem:[#allocation2] sm:$0xff] %vm517, %v512
        %v519 = vld [vmem:[#allocation2] sm:$0xff]
        %v520 = vpack.c.bf16 %v519, %v519
        %522 = vrot.lane.b32.xlu0 %v520, 96
        %v523 = vpop.permute.xlu0 %522
        %vm524 = vcmask 64512
        %v526 = vsel %vm524, %v520, 0
        %v529 = vsel %vm524, %v523, 0
        %531 = vmatprep.subr.bf16.mxu0 0
        %532 = vmatpush1.bf16.xpose.msra.mxu0 %v529
        %533 = vmatprep.subr.bf16.mxu0 0
        %534 = vmatpush1.bf16.xpose.msra.mxu0 0
        %535 = vmatprep.subr.bf16.mxu0 0
        %536 = vmatpush1.bf16.xpose.msra.mxu0 0
        %537 = vmatprep.subr.bf16.mxu0 0
        %538 = vmatpush1.bf16.xpose.msra.mxu0 0
        %539 = vmatprep.subr.bf16.mxu0 0
        %540 = vmatpush1.bf16.xpose.msra.mxu0 0
        %541 = vmatprep.subr.bf16.mxu0 0
        %542 = vmatpush1.bf16.xpose.msra.mxu0 0
        %543 = vmatprep.subr.bf16.mxu0 0
        %544 = vmatpush1.bf16.xpose.msra.mxu0 0
        %545 = vmatprep.subr.bf16.mxu0 0
        %546 = vmatpush1.bf16.xpose.msra.mxu0 0
        %547 = vmatprep.subr.bf16.mxu0 0
        %548 = vmatpush1.bf16.xpose.msra.mxu0 0
        %549 = vmatprep.subr.bf16.mxu0 0
        %550 = vmatpush1.bf16.xpose.msra.mxu0 0
        %551 = vmatprep.subr.bf16.mxu0 0
        %552 = vmatpush1.bf16.xpose.msra.mxu0 0
        %553 = vmatprep.subr.bf16.mxu0 0
        %554 = vmatpush1.bf16.xpose.msra.mxu0 0
        %555 = vmatprep.subr.bf16.mxu0 0
        %556 = vmatpush1.bf16.xpose.msra.mxu0 0
        %557 = vmatprep.subr.bf16.mxu0 0
        %558 = vmatpush1.bf16.xpose.msra.mxu0 0
        %559 = vmatprep.subr.bf16.mxu0 0
        %560 = vmatpush1.bf16.xpose.msra.mxu0 0
        %561 = vmatprep.subr.bf16.mxu0 0
        %562 = vmatpush1.bf16.xpose.msra.mxu0 0
        %563 = vmatprep.mubr.bf16.mxu0 0
        %564 = vmatmul.mubr.bf16.gmra.mrb[0].mxu0 %v526
        %v565 = vpop.f32.mrb[0].mxu0
        %v566 = vadd.f32 0.0, %v565
        %v567 = vpop.f32.mrb[0].mxu0
        %v568 = vpop.f32.mrb[0].mxu0
        %v569 = vpop.f32.mrb[0].mxu0
        %570 = vdwg.mxu0
        %v571 = vmul.f32 %v566, 0.35355338
        %v572 = vsel %vm524, %v571, -inf
        %573 = vmax.xlane.f32.xlu0 %v572
        %v574 = vpop.xlane.xlu0 %573
        %v575 = vsub.f32 %v571, %v574
        %v576 = vmul.f32 %v575, 1.442695
        %v577 = vpow.pop %v576
        %v578 = vsel %vm524, %v577, 0.0
        %579 = vadd.xlane.f32.xlu0 %v578
        %v580 = vpop.xlane.xlu0 %579
        %v581 = vrcp.pop %v580
        %v582 = vmul.f32 %v577, %v581
        %v583 = vpack.c.bf16 %v582, %v582
        %584 = vrot.lane.b32.xlu0 %v520, 64
        %v585 = vpop.permute.xlu0 %584
        %v587 = vsel %vm524, %v583, 0
        %vm589 = vcmask 1043456
        %v591 = vsel %vm589, %v585, 0
        %593 = vmatprep.subr.bf16.mxu0 0
        %594 = vmatpush1.bf16.msra.mxu0 %v591
        %595 = vmatprep.subr.bf16.mxu0 0
        %596 = vmatpush1.bf16.msra.mxu0 0
        %597 = vmatprep.subr.bf16.mxu0 0
        %598 = vmatpush1.bf16.msra.mxu0 0
        %599 = vmatprep.subr.bf16.mxu0 0
        %600 = vmatpush1.bf16.msra.mxu0 0
        %601 = vmatprep.subr.bf16.mxu0 0
        %602 = vmatpush1.bf16.msra.mxu0 0
        %603 = vmatprep.subr.bf16.mxu0 0
        %604 = vmatpush1.bf16.msra.mxu0 0
        %605 = vmatprep.subr.bf16.mxu0 0
        %606 = vmatpush1.bf16.msra.mxu0 0
        %607 = vmatprep.subr.bf16.mxu0 0
        %608 = vmatpush1.bf16.msra.mxu0 0
        %609 = vmatprep.subr.bf16.mxu0 0
        %610 = vmatpush1.bf16.msra.mxu0 0
        %611 = vmatprep.subr.bf16.mxu0 0
        %612 = vmatpush1.bf16.msra.mxu0 0
        %613 = vmatprep.subr.bf16.mxu0 0
        %614 = vmatpush1.bf16.msra.mxu0 0
        %615 = vmatprep.subr.bf16.mxu0 0
        %616 = vmatpush1.bf16.msra.mxu0 0
        %617 = vmatprep.subr.bf16.mxu0 0
        %618 = vmatpush1.bf16.msra.mxu0 0
        %619 = vmatprep.subr.bf16.mxu0 0
        %620 = vmatpush1.bf16.msra.mxu0 0
        %621 = vmatprep.subr.bf16.mxu0 0
        %622 = vmatpush1.bf16.msra.mxu0 0
        %623 = vmatprep.subr.bf16.mxu0 0
        %624 = vmatpush1.bf16.msra.mxu0 0
        %625 = vmatprep.mubr.bf16.mxu0 0
        %626 = vmatmul.mubr.bf16.gmra.mrb[0].mxu0 %v587
        %v627 = vpop.f32.mrb[0].mxu0
        %v628 = vadd.f32 0.0, %v627
        %v629 = vpop.f32.mrb[0].mxu0
        %v630 = vpop.f32.mrb[0].mxu0
        %v631 = vpop.f32.mrb[0].mxu0
        %632 = vdwg.mxu0
        %633 = vst.msk [vmem:[#allocation3] sm:$0xff] %vm524, %v628
        %v634 = vld [vmem:[#allocation2] sm:$0xff]
        %v635 = vpack.c.bf16 %v634, %v634
        %637 = vrot.lane.b32.xlu0 %v635, 120
        %v638 = vpop.permute.xlu0 %637
        %639 = vrot.lane.b32.xlu0 %v635, 88
        %v640 = vpop.permute.xlu0 %639
        %v642 = vsel %vm524, %v638, 0
        %v645 = vsel %vm524, %v640, 0
        %647 = vmatprep.subr.bf16.mxu0 0
        %648 = vmatpush1.bf16.xpose.msra.mxu0 %v645
        %649 = vmatprep.subr.bf16.mxu0 0
        %650 = vmatpush1.bf16.xpose.msra.mxu0 0
        %651 = vmatprep.subr.bf16.mxu0 0
        %652 = vmatpush1.bf16.xpose.msra.mxu0 0
        %653 = vmatprep.subr.bf16.mxu0 0
        %654 = vmatpush1.bf16.xpose.msra.mxu0 0
        %655 = vmatprep.subr.bf16.mxu0 0
        %656 = vmatpush1.bf16.xpose.msra.mxu0 0
        %657 = vmatprep.subr.bf16.mxu0 0
        %658 = vmatpush1.bf16.xpose.msra.mxu0 0
        %659 = vmatprep.subr.bf16.mxu0 0
        %660 = vmatpush1.bf16.xpose.msra.mxu0 0
        %661 = vmatprep.subr.bf16.mxu0 0
        %662 = vmatpush1.bf16.xpose.msra.mxu0 0
        %663 = vmatprep.subr.bf16.mxu0 0
        %664 = vmatpush1.bf16.xpose.msra.mxu0 0
        %665 = vmatprep.subr.bf16.mxu0 0
        %666 = vmatpush1.bf16.xpose.msra.mxu0 0
        %667 = vmatprep.subr.bf16.mxu0 0
        %668 = vmatpush1.bf16.xpose.msra.mxu0 0
        %669 = vmatprep.subr.bf16.mxu0 0
        %670 = vmatpush1.bf16.xpose.msra.mxu0 0
        %671 = vmatprep.subr.bf16.mxu0 0
        %672 = vmatpush1.bf16.xpose.msra.mxu0 0
        %673 = vmatprep.subr.bf16.mxu0 0
        %674 = vmatpush1.bf16.xpose.msra.mxu0 0
        %675 = vmatprep.subr.bf16.mxu0 0
        %676 = vmatpush1.bf16.xpose.msra.mxu0 0
        %677 = vmatprep.subr.bf16.mxu0 0
        %678 = vmatpush1.bf16.xpose.msra.mxu0 0
        %679 = vmatprep.mubr.bf16.mxu0 0
        %680 = vmatmul.mubr.bf16.gmra.mrb[0].mxu0 %v642
        %v681 = vpop.f32.mrb[0].mxu0
        %v682 = vadd.f32 0.0, %v681
        %v683 = vpop.f32.mrb[0].mxu0
        %v684 = vpop.f32.mrb[0].mxu0
        %v685 = vpop.f32.mrb[0].mxu0
        %686 = vdwg.mxu0
        %v687 = vmul.f32 %v682, 0.35355338
        %v688 = vsel %vm524, %v687, -inf
        %689 = vmax.xlane.f32.xlu0 %v688
        %v690 = vpop.xlane.xlu0 %689
        %v691 = vsub.f32 %v687, %v690
        %v692 = vmul.f32 %v691, 1.442695
        %v693 = vpow.pop %v692
        %v694 = vsel %vm524, %v693, 0.0
        %695 = vadd.xlane.f32.xlu0 %v694
        %v696 = vpop.xlane.xlu0 %695
        %v697 = vrcp.pop %v696
        %v698 = vmul.f32 %v693, %v697
        %v699 = vpack.c.bf16 %v698, %v698
        %700 = vrot.lane.b32.xlu0 %v635, 56
        %v701 = vpop.permute.xlu0 %700
        %v703 = vsel %vm524, %v699, 0
        %v706 = vsel %vm589, %v701, 0
        %708 = vmatprep.subr.bf16.mxu0 0
        %709 = vmatpush1.bf16.msra.mxu0 %v706
        %710 = vmatprep.subr.bf16.mxu0 0
        %711 = vmatpush1.bf16.msra.mxu0 0
        %712 = vmatprep.subr.bf16.mxu0 0
        %713 = vmatpush1.bf16.msra.mxu0 0
        %714 = vmatprep.subr.bf16.mxu0 0
        %715 = vmatpush1.bf16.msra.mxu0 0
        %716 = vmatprep.subr.bf16.mxu0 0
        %717 = vmatpush1.bf16.msra.mxu0 0
        %718 = vmatprep.subr.bf16.mxu0 0
        %719 = vmatpush1.bf16.msra.mxu0 0
        %720 = vmatprep.subr.bf16.mxu0 0
        %721 = vmatpush1.bf16.msra.mxu0 0
        %722 = vmatprep.subr.bf16.mxu0 0
        %723 = vmatpush1.bf16.msra.mxu0 0
        %724 = vmatprep.subr.bf16.mxu0 0
        %725 = vmatpush1.bf16.msra.mxu0 0
        %726 = vmatprep.subr.bf16.mxu0 0
        %727 = vmatpush1.bf16.msra.mxu0 0
        %728 = vmatprep.subr.bf16.mxu0 0
        %729 = vmatpush1.bf16.msra.mxu0 0
        %730 = vmatprep.subr.bf16.mxu0 0
        %731 = vmatpush1.bf16.msra.mxu0 0
        %732 = vmatprep.subr.bf16.mxu0 0
        %733 = vmatpush1.bf16.msra.mxu0 0
        %734 = vmatprep.subr.bf16.mxu0 0
        %735 = vmatpush1.bf16.msra.mxu0 0
        %736 = vmatprep.subr.bf16.mxu0 0
        %737 = vmatpush1.bf16.msra.mxu0 0
        %738 = vmatprep.subr.bf16.mxu0 0
        %739 = vmatpush1.bf16.msra.mxu0 0
        %740 = vmatprep.mubr.bf16.mxu0 0
        %741 = vmatmul.mubr.bf16.gmra.mrb[0].mxu0 %v703
        %v742 = vpop.f32.mrb[0].mxu0
        %v743 = vadd.f32 0.0, %v742
        %v744 = vpop.f32.mrb[0].mxu0
        %v745 = vpop.f32.mrb[0].mxu0
        %v746 = vpop.f32.mrb[0].mxu0
        %747 = vdwg.mxu0
        %749 = vrot.lane.b32.xlu0 %v743, 8
        %v750 = vpop.permute.xlu0 %749
        %vm752 = vcmask 130112
        %753 = vst.msk [vmem:[#allocation3] sm:$0xff] %vm752, %v750
        %v754 = vld [vmem:[#allocation2] sm:$0xff]
        %v755 = vpack.c.bf16 %v754, %v754
        %757 = vrot.lane.b32.xlu0 %v755, 112
        %v758 = vpop.permute.xlu0 %757
        %759 = vrot.lane.b32.xlu0 %v755, 80
        %v760 = vpop.permute.xlu0 %759
        %v762 = vsel %vm524, %v758, 0
        %v765 = vsel %vm524, %v760, 0
        %767 = vmatprep.subr.bf16.mxu0 0
        %768 = vmatpush1.bf16.xpose.msra.mxu0 %v765
        %769 = vmatprep.subr.bf16.mxu0 0
        %770 = vmatpush1.bf16.xpose.msra.mxu0 0
        %771 = vmatprep.subr.bf16.mxu0 0
        %772 = vmatpush1.bf16.xpose.msra.mxu0 0
        %773 = vmatprep.subr.bf16.mxu0 0
        %774 = vmatpush1.bf16.xpose.msra.mxu0 0
        %775 = vmatprep.subr.bf16.mxu0 0
        %776 = vmatpush1.bf16.xpose.msra.mxu0 0
        %777 = vmatprep.subr.bf16.mxu0 0
        %778 = vmatpush1.bf16.xpose.msra.mxu0 0
        %779 = vmatprep.subr.bf16.mxu0 0
        %780 = vmatpush1.bf16.xpose.msra.mxu0 0
        %781 = vmatprep.subr.bf16.mxu0 0
        %782 = vmatpush1.bf16.xpose.msra.mxu0 0
        %783 = vmatprep.subr.bf16.mxu0 0
        %784 = vmatpush1.bf16.xpose.msra.mxu0 0
        %785 = vmatprep.subr.bf16.mxu0 0
        %786 = vmatpush1.bf16.xpose.msra.mxu0 0
        %787 = vmatprep.subr.bf16.mxu0 0
        %788 = vmatpush1.bf16.xpose.msra.mxu0 0
        %789 = vmatprep.subr.bf16.mxu0 0
        %790 = vmatpush1.bf16.xpose.msra.mxu0 0
        %791 = vmatprep.subr.bf16.mxu0 0
        %792 = vmatpush1.bf16.xpose.msra.mxu0 0
        %793 = vmatprep.subr.bf16.mxu0 0
        %794 = vmatpush1.bf16.xpose.msra.mxu0 0
        %795 = vmatprep.subr.bf16.mxu0 0
        %796 = vmatpush1.bf16.xpose.msra.mxu0 0
        %797 = vmatprep.subr.bf16.mxu0 0
        %798 = vmatpush1.bf16.xpose.msra.mxu0 0
        %799 = vmatprep.mubr.bf16.mxu0 0
        %800 = vmatmul.mubr.bf16.gmra.mrb[0].mxu0 %v762
        %v801 = vpop.f32.mrb[0].mxu0
        %v802 = vadd.f32 0.0, %v801
        %v803 = vpop.f32.mrb[0].mxu0
        %v804 = vpop.f32.mrb[0].mxu0
        %v805 = vpop.f32.mrb[0].mxu0
        %806 = vdwg.mxu0
        %v807 = vmul.f32 %v802, 0.35355338
        %v808 = vsel %vm524, %v807, -inf
        %809 = vmax.xlane.f32.xlu0 %v808
        %v810 = vpop.xlane.xlu0 %809
        %v811 = vsub.f32 %v807, %v810
        %v812 = vmul.f32 %v811, 1.442695
        %v813 = vpow.pop %v812
        %v814 = vsel %vm524, %v813, 0.0
        %815 = vadd.xlane.f32.xlu0 %v814
        %v816 = vpop.xlane.xlu0 %815
        %v817 = vrcp.pop %v816
        %v818 = vmul.f32 %v813, %v817
        %v819 = vpack.c.bf16 %v818, %v818
        %820 = vrot.lane.b32.xlu0 %v755, 48
        %v821 = vpop.permute.xlu0 %820
        %v823 = vsel %vm524, %v819, 0
        %v826 = vsel %vm589, %v821, 0
        %828 = vmatprep.subr.bf16.mxu0 0
        %829 = vmatpush1.bf16.msra.mxu0 %v826
        %830 = vmatprep.subr.bf16.mxu0 0
        %831 = vmatpush1.bf16.msra.mxu0 0
        %832 = vmatprep.subr.bf16.mxu0 0
        %833 = vmatpush1.bf16.msra.mxu0 0
        %834 = vmatprep.subr.bf16.mxu0 0
        %835 = vmatpush1.bf16.msra.mxu0 0
        %836 = vmatprep.subr.bf16.mxu0 0
        %837 = vmatpush1.bf16.msra.mxu0 0
        %838 = vmatprep.subr.bf16.mxu0 0
        %839 = vmatpush1.bf16.msra.mxu0 0
        %840 = vmatprep.subr.bf16.mxu0 0
        %841 = vmatpush1.bf16.msra.mxu0 0
        %842 = vmatprep.subr.bf16.mxu0 0
        %843 = vmatpush1.bf16.msra.mxu0 0
        %844 = vmatprep.subr.bf16.mxu0 0
        %845 = vmatpush1.bf16.msra.mxu0 0
        %846 = vmatprep.subr.bf16.mxu0 0
        %847 = vmatpush1.bf16.msra.mxu0 0
        %848 = vmatprep.subr.bf16.mxu0 0
        %849 = vmatpush1.bf16.msra.mxu0 0
        %850 = vmatprep.subr.bf16.mxu0 0
        %851 = vmatpush1.bf16.msra.mxu0 0
        %852 = vmatprep.subr.bf16.mxu0 0
        %853 = vmatpush1.bf16.msra.mxu0 0
        %854 = vmatprep.subr.bf16.mxu0 0
        %855 = vmatpush1.bf16.msra.mxu0 0
        %856 = vmatprep.subr.bf16.mxu0 0
        %857 = vmatpush1.bf16.msra.mxu0 0
        %858 = vmatprep.subr.bf16.mxu0 0
        %859 = vmatpush1.bf16.msra.mxu0 0
        %860 = vmatprep.mubr.bf16.mxu0 0
        %861 = vmatmul.mubr.bf16.gmra.mrb[0].mxu0 %v823
        %v862 = vpop.f32.mrb[0].mxu0
        %v863 = vadd.f32 0.0, %v862
        %v864 = vpop.f32.mrb[0].mxu0
        %v865 = vpop.f32.mrb[0].mxu0
        %v866 = vpop.f32.mrb[0].mxu0
        %867 = vdwg.mxu0
        %869 = vrot.lane.b32.xlu0 %v863, 16
        %v870 = vpop.permute.xlu0 %869
        %vm872 = vcmask 195712
        %873 = vst.msk [vmem:[#allocation3] sm:$0xff] %vm872, %v870
        %v874 = vld [vmem:[#allocation2] sm:$0xff]
        %v875 = vpack.c.bf16 %v874, %v874
        %877 = vrot.lane.b32.xlu0 %v875, 104
        %v878 = vpop.permute.xlu0 %877
        %879 = vrot.lane.b32.xlu0 %v875, 72
        %v880 = vpop.permute.xlu0 %879
        %v882 = vsel %vm524, %v878, 0
        %v885 = vsel %vm524, %v880, 0
        %887 = vmatprep.subr.bf16.mxu0 0
        %888 = vmatpush1.bf16.xpose.msra.mxu0 %v885
        %889 = vmatprep.subr.bf16.mxu0 0
        %890 = vmatpush1.bf16.xpose.msra.mxu0 0
        %891 = vmatprep.subr.bf16.mxu0 0
        %892 = vmatpush1.bf16.xpose.msra.mxu0 0
        %893 = vmatprep.subr.bf16.mxu0 0
        %894 = vmatpush1.bf16.xpose.msra.mxu0 0
        %895 = vmatprep.subr.bf16.mxu0 0
        %896 = vmatpush1.bf16.xpose.msra.mxu0 0
        %897 = vmatprep.subr.bf16.mxu0 0
        %898 = vmatpush1.bf16.xpose.msra.mxu0 0
        %899 = vmatprep.subr.bf16.mxu0 0
        %900 = vmatpush1.bf16.xpose.msra.mxu0 0
        %901 = vmatprep.subr.bf16.mxu0 0
        %902 = vmatpush1.bf16.xpose.msra.mxu0 0
        %903 = vmatprep.subr.bf16.mxu0 0
        %904 = vmatpush1.bf16.xpose.msra.mxu0 0
        %905 = vmatprep.subr.bf16.mxu0 0
        %906 = vmatpush1.bf16.xpose.msra.mxu0 0
        %907 = vmatprep.subr.bf16.mxu0 0
        %908 = vmatpush1.bf16.xpose.msra.mxu0 0
        %909 = vmatprep.subr.bf16.mxu0 0
        %910 = vmatpush1.bf16.xpose.msra.mxu0 0
        %911 = vmatprep.subr.bf16.mxu0 0
        %912 = vmatpush1.bf16.xpose.msra.mxu0 0
        %913 = vmatprep.subr.bf16.mxu0 0
        %914 = vmatpush1.bf16.xpose.msra.mxu0 0
        %915 = vmatprep.subr.bf16.mxu0 0
        %916 = vmatpush1.bf16.xpose.msra.mxu0 0
        %917 = vmatprep.subr.bf16.mxu0 0
        %918 = vmatpush1.bf16.xpose.msra.mxu0 0
        %919 = vmatprep.mubr.bf16.mxu0 0
        %920 = vmatmul.mubr.bf16.gmra.mrb[0].mxu0 %v882
        %v921 = vpop.f32.mrb[0].mxu0
        %v922 = vadd.f32 0.0, %v921
        %v923 = vpop.f32.mrb[0].mxu0
        %v924 = vpop.f32.mrb[0].mxu0
        %v925 = vpop.f32.mrb[0].mxu0
        %926 = vdwg.mxu0
        %v927 = vmul.f32 %v922, 0.35355338
        %v928 = vsel %vm524, %v927, -inf
        %929 = vmax.xlane.f32.xlu0 %v928
        %v930 = vpop.xlane.xlu0 %929
        %v931 = vsub.f32 %v927, %v930
        %v932 = vmul.f32 %v931, 1.442695
        %v933 = vpow.pop %v932
        %v934 = vsel %vm524, %v933, 0.0
        %935 = vadd.xlane.f32.xlu0 %v934
        %v936 = vpop.xlane.xlu0 %935
        %v937 = vrcp.pop %v936
        %v938 = vmul.f32 %v933, %v937
        %v939 = vpack.c.bf16 %v938, %v938
        %940 = vrot.lane.b32.xlu0 %v875, 40
        %v941 = vpop.permute.xlu0 %940
        %v943 = vsel %vm524, %v939, 0
        %v946 = vsel %vm589, %v941, 0
        %948 = vmatprep.subr.bf16.mxu0 0
        %949 = vmatpush1.bf16.msra.mxu0 %v946
        %950 = vmatprep.subr.bf16.mxu0 0
        %951 = vmatpush1.bf16.msra.mxu0 0
        %952 = vmatprep.subr.bf16.mxu0 0
        %953 = vmatpush1.bf16.msra.mxu0 0
        %954 = vmatprep.subr.bf16.mxu0 0
        %955 = vmatpush1.bf16.msra.mxu0 0
        %956 = vmatprep.subr.bf16.mxu0 0
        %957 = vmatpush1.bf16.msra.mxu0 0
        %958 = vmatprep.subr.bf16.mxu0 0
        %959 = vmatpush1.bf16.msra.mxu0 0
        %960 = vmatprep.subr.bf16.mxu0 0
        %961 = vmatpush1.bf16.msra.mxu0 0
        %962 = vmatprep.subr.bf16.mxu0 0
        %963 = vmatpush1.bf16.msra.mxu0 0
        %964 = vmatprep.subr.bf16.mxu0 0
        %965 = vmatpush1.bf16.msra.mxu0 0
        %966 = vmatprep.subr.bf16.mxu0 0
        %967 = vmatpush1.bf16.msra.mxu0 0
        %968 = vmatprep.subr.bf16.mxu0 0
        %969 = vmatpush1.bf16.msra.mxu0 0
        %970 = vmatprep.subr.bf16.mxu0 0
        %971 = vmatpush1.bf16.msra.mxu0 0
        %972 = vmatprep.subr.bf16.mxu0 0
        %973 = vmatpush1.bf16.msra.mxu0 0
        %974 = vmatprep.subr.bf16.mxu0 0
        %975 = vmatpush1.bf16.msra.mxu0 0
        %976 = vmatprep.subr.bf16.mxu0 0
        %977 = vmatpush1.bf16.msra.mxu0 0
        %978 = vmatprep.subr.bf16.mxu0 0
        %979 = vmatpush1.bf16.msra.mxu0 0
        %980 = vmatprep.mubr.bf16.mxu0 0
        %981 = vmatmul.mubr.bf16.gmra.mrb[0].mxu0 %v943
        %v982 = vpop.f32.mrb[0].mxu0
        %v983 = vadd.f32 0.0, %v982
        %v984 = vpop.f32.mrb[0].mxu0
        %v985 = vpop.f32.mrb[0].mxu0
        %v986 = vpop.f32.mrb[0].mxu0
        %987 = vdwg.mxu0
        %989 = vrot.lane.b32.xlu0 %v983, 24
        %v990 = vpop.permute.xlu0 %989
        %vm992 = vcmask 261312
        %993 = vst.msk [vmem:[#allocation3] sm:$0xff] %vm992, %v990
        %v994 = vld [vmem:[#allocation3] sm:$0xff]
        %v995 = vpack.c.bf16 %v994, %v994
        %v996 = vld [vmem:[%s4] sm:$0xf]
        %v997 = vld [vmem:[%s4 + $0x4] sm:$0xf]
        %v998 = vld [vmem:[%s4 + $0x8] sm:$0xf]
        %v999 = vld [vmem:[%s4 + $0xc] sm:$0xf]
        %v1004 = vunpack.c.l.b16 %v996
        %v1005 = vunpack.c.l.b16 %v997
        %v1006 = vunpack.c.l.b16 %v998
        %v1007 = vunpack.c.l.b16 %v999
        %v1008 = vpack.c.b16 %v1005, %v1004
        %v1009 = vpack.c.b16 %v1007, %v1006
        %v1013 = vsel %vm428, %v995, 0
        %1015 = vmatprep.subr.bf16.mxu0 0
        %1016 = vmatpush1.bf16.msra.mxu0 %v1008
        %1017 = vmatprep.subr.bf16.mxu0 0
        %1018 = vmatpush1.bf16.msra.mxu0 %v1009
        %1019 = vmatprep.subr.bf16.mxu0 0
        %1020 = vmatpush1.bf16.msra.mxu0 0
        %1021 = vmatprep.subr.bf16.mxu0 0
        %1022 = vmatpush1.bf16.msra.mxu0 0
        %1023 = vmatprep.subr.bf16.mxu0 0
        %1024 = vmatpush1.bf16.msra.mxu0 0
        %1025 = vmatprep.subr.bf16.mxu0 0
        %1026 = vmatpush1.bf16.msra.mxu0 0
        %1027 = vmatprep.subr.bf16.mxu0 0
        %1028 = vmatpush1.bf16.msra.mxu0 0
        %1029 = vmatprep.subr.bf16.mxu0 0
        %1030 = vmatpush1.bf16.msra.mxu0 0
        %1031 = vmatprep.subr.bf16.mxu0 0
        %1032 = vmatpush1.bf16.msra.mxu0 0
        %1033 = vmatprep.subr.bf16.mxu0 0
        %1034 = vmatpush1.bf16.msra.mxu0 0
        %1035 = vmatprep.subr.bf16.mxu0 0
        %1036 = vmatpush1.bf16.msra.mxu0 0
        %1037 = vmatprep.subr.bf16.mxu0 0
        %1038 = vmatpush1.bf16.msra.mxu0 0
        %1039 = vmatprep.subr.bf16.mxu0 0
        %1040 = vmatpush1.bf16.msra.mxu0 0
        %1041 = vmatprep.subr.bf16.mxu0 0
        %1042 = vmatpush1.bf16.msra.mxu0 0
        %1043 = vmatprep.subr.bf16.mxu0 0
        %1044 = vmatpush1.bf16.msra.mxu0 0
        %1045 = vmatprep.subr.bf16.mxu0 0
        %1046 = vmatpush1.bf16.msra.mxu0 0
        %1047 = vmatprep.mubr.bf16.mxu0 0
        %1048 = vmatmul.mubr.bf16.gmra.mrb[0].mxu0 %v1013
        %v1049 = vpop.f32.mrb[0].mxu0
        %v1050 = vadd.f32 0.0, %v1049
        %v1051 = vpop.f32.mrb[0].mxu0
        %v1052 = vpop.f32.mrb[0].mxu0
        %v1053 = vpop.f32.mrb[0].mxu0
        %1054 = vdwg.mxu0
        %v1055 = vadd.f32 %v425, %v1050
        %v1056 = vld [vmem:[%s5] sm:$0x1]
        %v1058 = vlaneseq
        %v1059 = vshrl.u32 %v1058, 7
        %v1060 = vsub.s32 0, %v1059
        %v1061 = vrot.slane %v1056, %v1060
        %v1063 = vadd.f32 %v1055, %v1061
        %v1064 = vld [vmem:[%s6] sm:$0x1]
        %v1065 = vld [vmem:[%s7] sm:$0x1]
        %v1066 = vsel %vm428, %v1063, 0.0
        %1067 = vadd.xlane.f32.xlu0 %v1066
        %v1068 = vpop.xlane.xlu0 %1067
        %v1069 = vmul.f32 %v1068, %v432
        %v1070 = vsub.f32 %v1063, %v1069
        %v1071 = vmul.f32 %v1070, %v1070
        %v1072 = vsel %vm428, %v1071, 0.0
        %1073 = vadd.xlane.f32.xlu0 %v1072
        %v1074 = vpop.xlane.xlu0 %1073
        %v1075 = vmul.f32 %v1074, %v432
        %v1076 = vadd.f32 %v1075, 1e-05
        %v1077 = vrsqrt.pop %v1076
        %v1078 = vmul.f32 %v1070, %v1077
        %v1080 = vlaneseq
        %v1081 = vshrl.u32 %v1080, 7
        %v1082 = vsub.s32 0, %v1081
        %v1083 = vrot.slane %v1064, %v1082
        %v1085 = vmul.f32 %v1078, %v1083
        %v1087 = vlaneseq
        %v1088 = vshrl.u32 %v1087, 7
        %v1089 = vsub.s32 0, %v1088
        %v1090 = vrot.slane %v1065, %v1089
        %v1092 = vadd.f32 %v1085, %v1090
        %v1093 = vpack.c.bf16 %v1092, %v1092
        %v1094 = vld [vmem:[#allocation4] sm:$0xf]
        %v1095 = vld [vmem:[#allocation4 + $0x4] sm:$0xf]
        %v1096 = vld [vmem:[#allocation4 + $0x8] sm:$0xf]
        %v1097 = vld [vmem:[#allocation4 + $0xc] sm:$0xf]
        %v1098 = vld [vmem:[%s9] sm:$0x1]
        %v1100 = vlaneseq
        %v1101 = vshrl.u32 %v1100, 7
        %v1102 = vsub.s32 0, %v1101
        %v1103 = vrot.slane %v1098, %v1102
        %v1109 = vunpack.c.l.b16 %v1094
        %v1110 = vunpack.c.l.b16 %v1095
        %v1111 = vunpack.c.l.b16 %v1096
        %v1112 = vunpack.c.l.b16 %v1097
        %v1113 = vpack.c.b16 %v1110, %v1109
        %v1114 = vpack.c.b16 %v1112, %v1111
        %v1118 = vsel %vm428, %v1093, 0
        %1120 = vmatprep.subr.bf16.mxu0 0
        %1121 = vmatpush1.bf16.msra.mxu0 %v1113
        %1122 = vmatprep.subr.bf16.mxu0 0
        %1123 = vmatpush1.bf16.msra.mxu0 %v1114
        %1124 = vmatprep.subr.bf16.mxu0 0
        %1125 = vmatpush1.bf16.msra.mxu0 0
        %1126 = vmatprep.subr.bf16.mxu0 0
        %1127 = vmatpush1.bf16.msra.mxu0 0
        %1128 = vmatprep.subr.bf16.mxu0 0
        %1129 = vmatpush1.bf16.msra.mxu0 0
        %1130 = vmatprep.subr.bf16.mxu0 0
        %1131 = vmatpush1.bf16.msra.mxu0 0
        %1132 = vmatprep.subr.bf16.mxu0 0
        %1133 = vmatpush1.bf16.msra.mxu0 0
        %1134 = vmatprep.subr.bf16.mxu0 0
        %1135 = vmatpush1.bf16.msra.mxu0 0
        %1136 = vmatprep.subr.bf16.mxu0 0
        %1137 = vmatpush1.bf16.msra.mxu0 0
        %1138 = vmatprep.subr.bf16.mxu0 0
        %1139 = vmatpush1.bf16.msra.mxu0 0
        %1140 = vmatprep.subr.bf16.mxu0 0
        %1141 = vmatpush1.bf16.msra.mxu0 0
        %1142 = vmatprep.subr.bf16.mxu0 0
        %1143 = vmatpush1.bf16.msra.mxu0 0
        %1144 = vmatprep.subr.bf16.mxu0 0
        %1145 = vmatpush1.bf16.msra.mxu0 0
        %1146 = vmatprep.subr.bf16.mxu0 0
        %1147 = vmatpush1.bf16.msra.mxu0 0
        %1148 = vmatprep.subr.bf16.mxu0 0
        %1149 = vmatpush1.bf16.msra.mxu0 0
        %1150 = vmatprep.subr.bf16.mxu0 0
        %1151 = vmatpush1.bf16.msra.mxu0 0
        %1152 = vmatprep.mubr.bf16.mxu0 0
        %1153 = vmatmul.mubr.bf16.gmra.mrb[0].mxu0 %v1118
        %v1154 = vpop.f32.mrb[0].mxu0
        %v1155 = vadd.f32 %v1103, %v1154
        %v1156 = vpop.f32.mrb[0].mxu0
        %v1157 = vpop.f32.mrb[0].mxu0
        %v1158 = vpop.f32.mrb[0].mxu0
        %1159 = vdwg.mxu0
        %v1160 = vmul.f32 %v1155, 0.5
        %v1161 = vmul.f32 %v1155, 0.70710677
        %v1162 = vand.u32 2147483647, %v1161
        %v1163 = vmul.f32 %v1162, 0.3275911
        %v1164 = vadd.f32 %v1163, 1.0
        %v1165 = vrcp.pop %v1164
        %v1166 = vmul.f32 %v1165, 1.0614054
        %v1167 = vadd.f32 %v1166, -1.4531521
        %v1168 = vmul.f32 %v1167, %v1165
        %v1169 = vadd.f32 %v1168, 1.4214138
        %v1170 = vmul.f32 %v1169, %v1165
        %v1171 = vadd.f32 %v1170, -0.28449672
        %v1172 = vmul.f32 %v1171, %v1165
        %v1173 = vadd.f32 %v1172, 0.2548296
        %v1174 = vmul.f32 %v1173, %v1165
        %v1175 = vsub.f32 0.0, %v1162
        %v1176 = vmul.f32 %v1175, %v1162
        %v1177 = vmul.f32 %v1176, 1.442695
        %v1178 = vpow.pop %v1177
        %v1179 = vmul.f32 %v1174, %v1178
        %v1180 = vsub.f32 1.0, %v1179
        %vm1181 = vcmp.ge.f32.partialorder %v1161, 0.0
        %v1182 = vsub.f32 0.0, %v1180
        %v1183 = vsel %vm1181, %v1180, %v1182
        %v1184 = vadd.f32 %v1183, 1.0
        %v1185 = vmul.f32 %v1160, %v1184
        %v1186 = vpack.c.bf16 %v1185, %v1185
        %v1187 = vld [vmem:[%s10] sm:$0xf]
        %v1188 = vld [vmem:[%s10 + $0x4] sm:$0xf]
        %v1189 = vld [vmem:[%s10 + $0x8] sm:$0xf]
        %v1190 = vld [vmem:[%s10 + $0xc] sm:$0xf]
        %v1191 = vld [vmem:[%s10 + $0x10] sm:$0xf]
        %v1192 = vld [vmem:[%s10 + $0x14] sm:$0xf]
        %v1193 = vld [vmem:[%s10 + $0x18] sm:$0xf]
        %v1194 = vld [vmem:[%s10 + $0x1c] sm:$0xf]
        %v1195 = vld [vmem:[%s11] sm:$0x1]
        %v1197 = vlaneseq
        %v1198 = vshrl.u32 %v1197, 7
        %v1199 = vsub.s32 0, %v1198
        %v1200 = vrot.slane %v1195, %v1199
        %v1210 = vunpack.c.l.b16 %v1187
        %v1211 = vunpack.c.l.b16 %v1188
        %v1212 = vunpack.c.l.b16 %v1189
        %v1213 = vunpack.c.l.b16 %v1190
        %v1214 = vunpack.c.l.b16 %v1191
        %v1215 = vunpack.c.l.b16 %v1192
        %v1216 = vunpack.c.l.b16 %v1193
        %v1217 = vunpack.c.l.b16 %v1194
        %v1218 = vpack.c.b16 %v1211, %v1210
        %v1219 = vpack.c.b16 %v1213, %v1212
        %v1220 = vpack.c.b16 %v1215, %v1214
        %v1221 = vpack.c.b16 %v1217, %v1216
        %vm1226 = vcmask 523264
        %v1228 = vsel %vm1226, %v1186, 0
        %1230 = vmatprep.subr.bf16.mxu0 0
        %1231 = vmatpush1.bf16.msra.mxu0 %v1218
        %1232 = vmatprep.subr.bf16.mxu0 0
        %1233 = vmatpush1.bf16.msra.mxu0 %v1219
        %1234 = vmatprep.subr.bf16.mxu0 0
        %1235 = vmatpush1.bf16.msra.mxu0 %v1220
        %1236 = vmatprep.subr.bf16.mxu0 0
        %1237 = vmatpush1.bf16.msra.mxu0 %v1221
        %1238 = vmatprep.subr.bf16.mxu0 0
        %1239 = vmatpush1.bf16.msra.mxu0 0
        %1240 = vmatprep.subr.bf16.mxu0 0
        %1241 = vmatpush1.bf16.msra.mxu0 0
        %1242 = vmatprep.subr.bf16.mxu0 0
        %1243 = vmatpush1.bf16.msra.mxu0 0
        %1244 = vmatprep.subr.bf16.mxu0 0
        %1245 = vmatpush1.bf16.msra.mxu0 0
        %1246 = vmatprep.subr.bf16.mxu0 0
        %1247 = vmatpush1.bf16.msra.mxu0 0
        %1248 = vmatprep.subr.bf16.mxu0 0
        %1249 = vmatpush1.bf16.msra.mxu0 0
        %1250 = vmatprep.subr.bf16.mxu0 0
        %1251 = vmatpush1.bf16.msra.mxu0 0
        %1252 = vmatprep.subr.bf16.mxu0 0
        %1253 = vmatpush1.bf16.msra.mxu0 0
        %1254 = vmatprep.subr.bf16.mxu0 0
        %1255 = vmatpush1.bf16.msra.mxu0 0
        %1256 = vmatprep.subr.bf16.mxu0 0
        %1257 = vmatpush1.bf16.msra.mxu0 0
        %1258 = vmatprep.subr.bf16.mxu0 0
        %1259 = vmatpush1.bf16.msra.mxu0 0
        %1260 = vmatprep.subr.bf16.mxu0 0
        %1261 = vmatpush1.bf16.msra.mxu0 0
        %1262 = vmatprep.mubr.bf16.mxu0 0
        %1263 = vmatmul.mubr.bf16.gmra.mrb[0].mxu0 %v1228
        %v1264 = vpop.f32.mrb[0].mxu0
        %v1265 = vadd.f32 %v1200, %v1264
        %v1266 = vpop.f32.mrb[0].mxu0
        %v1267 = vpop.f32.mrb[0].mxu0
        %v1268 = vpop.f32.mrb[0].mxu0
        %1269 = vdwg.mxu0
        %v1270 = vadd.f32 %v1063, %v1265
        %1271 = vst.msk [vmem:[%s419] sm:$0xff] %vm428, %v1270
        %s1272 = sand.u32 %s292, 1
        %s1273 = scalar_lea.sflag [#allocation6], %s1272
        %s1274 = sand.u32 %s292, 1
        %s1275 = smul.addr %s1274, 8
        %s1276 = scalar_lea.vmem [#allocation7], %s1275
        // Predicated region
        $region73: #{tpu_custom_call.1} parent=67 // pred_check
          %p1277 = pneg %p302
        $region74: #{tpu_custom_call.1} parent=67 // pred_check_branch
          %1279 = sbr.rel (%p1277) target = $region76
        $region75: #{tpu_custom_call.1} parent=67 // pred_region
          %s1281 = ssub.s32 128, 128
          %1282 = vsyncadd %s1273, %s1281
          %s1283 = smul.addr %s27, 128
          %s1284 = scalar_lea.hbm %s12, %s1283
          %s1286 = sshll.u32 %s1276, 4
          %s1287 = int_to_ptr.vmem [resolvable:$true] %s1286
          %1289 = dma.vmem_to_hbm [thread:$0]  %s1287, 128, %s1284, %s1273
        $region76: #{tpu_custom_call.1} parent=67 // pred_fallthru
          _
      $region68: #{tpu_custom_call.1} parent=5 // pred_fallthru
        _
      %p1290 = scmp.le.s32.totalorder 2, %s22
      // Predicated region
      $region77: #{tpu_custom_call.1} parent=5 // pred_check
        %p1291 = pneg %p1290
      $region78: #{tpu_custom_call.1} parent=5 // pred_check_branch
        %1293 = sbr.rel (%p1291) target = $region80
      $region79: #{tpu_custom_call.1} parent=5 // pred_region
        %s1294 = ssub.s32 %s22, 2
        // Predicated region
        $region81: #{tpu_custom_call.1} parent=79 // pred_check
          %p1295 = pneg %p308
        $region82: #{tpu_custom_call.1} parent=79 // pred_check_branch
          %1297 = sbr.rel (%p1295) target = $region84
        $region83: #{tpu_custom_call.1} parent=79 // pred_region
          %s1298 = sand.u32 %s293, 1
          %s1299 = scalar_lea.sflag [#allocation6], %s1298
          %s1300 = sand.u32 %s293, 1
          %s1301 = smul.addr %s1300, 8
          %s1302 = scalar_lea.vmem [#allocation7], %s1301
          %1303 = dma.done %s1299, 128
        $region84: #{tpu_custom_call.1} parent=79 // pred_fallthru
          _
      $region80: #{tpu_custom_call.1} parent=5 // pred_fallthru
        _
    $region6: #{tpu_custom_call.1} parent=1 // loop_footer
      %s26 = sadd.s32 1, %s22
    $region7: #{tpu_custom_call.1} parent=1 // loop_footer_branch
      %21 = sbr.rel target = $region3
    $region8: #{tpu_custom_call.1} parent=1 // loop_exit
      _
    %1304 = vsyncpa [#allocation5], 1
    %s1305 = scalar_lea.sflag [#allocation5], 1
    %1306 = vsyncpa %s1305, 1
    %1307 = vsyncpa [#allocation6], 1
    %s1308 = scalar_lea.sflag [#allocation6], 1
    %1309 = vsyncpa %s1308, 1

// kernel: tpu_custom_call.1
$region0: #{tpu_custom_call.1}
  #allocation0 [shape = 'u32[]', space=smem, size = 0x4, offset = 0x4, fixed_abs, tag = 'smem constant byte address 0x4 - core index']
  #allocation1 [shape = 'u32[144,128]{1,0:T(1,128)}', space=vmem, size = 0x12000, scoped, tag = 'internal scratch']
  #allocation2 [shape = 'f32[8,96]{1,0:T(8,128)}', space=vmem, size = 0x1000, scoped, tag = 'scratch operand']
  #allocation3 [shape = 'f32[8,32]{1,0:T(8,128)}', space=vmem, size = 0x1000, scoped, tag = 'scratch operand']
  %s0 = inlined_call_operand.vmem [shape: f32[2,8,32], index: 0, kind: input, shape index: {}]
  %s1 = inlined_call_operand.vmem [shape: f32[1,32], index: 1, kind: input, shape index: {}]
  %s2 = inlined_call_operand.vmem [shape: f32[1,32], index: 2, kind: input, shape index: {}]
  %s3 = inlined_call_operand.vmem [shape: bf16[32,96], index: 3, kind: input, shape index: {}]
  %s4 = inlined_call_operand.vmem [shape: bf16[32,32], index: 4, kind: input, shape index: {}]
  %s5 = inlined_call_operand.vmem [shape: f32[1,32], index: 5, kind: input, shape index: {}]
  %s6 = inlined_call_operand.vmem [shape: f32[1,32], index: 6, kind: input, shape index: {}]
  %s7 = inlined_call_operand.vmem [shape: f32[1,32], index: 7, kind: input, shape index: {}]
  %s8 = inlined_call_operand.hbm [shape: bf16[32,64], index: 8, kind: input, shape index: {}]
  %s9 = inlined_call_operand.vmem [shape: f32[1,64], index: 9, kind: input, shape index: {}]
  %s10 = inlined_call_operand.vmem [shape: bf16[64,32], index: 10, kind: input, shape index: {}]
  %s11 = inlined_call_operand.vmem [shape: f32[1,32], index: 11, kind: input, shape index: {}]
  %s12 = inlined_call_operand.hbm [shape: f32[2,8,32], index: 12, kind: output, shape index: {}]
  %s13 = sld [smem:[#allocation0]]
  $region85: #{tpu_custom_call.1} parent=0
    _
  %s15 = ssub.s32 1, %s13
  %s16 = scalar_select 0, %s15, %s13
  $region1: #{tpu_custom_call.1} parent=0
    #allocation4 [shape = 'u8[8192]{0}', space=vmem, size = 0x2000, scoped, tag = 'input window, operand 8, single buffered']
    #allocation5 [shape = 's32[2]{0}', space=sflag, size = 0x8, scoped, tag = 'scoped memory for tpu_custom_call.1']
    #allocation6 [shape = 's32[2]{0}', space=sflag, size = 0x8, scoped, tag = 'scoped memory for tpu_custom_call.1']
    #allocation7 [shape = 'u8[8192]{0}', space=vmem, size = 0x2000, scoped, tag = 'output window, operand 0']
    %17 = vsyncpa [#allocation5], 0
    %18 = vsyncpa [#allocation6], 0
    %s19 = scalar_lea.sflag [#allocation6], 1
    %20 = vsyncpa %s19, 0
    loop: start=0, step=1, limit=4
    $region2: #{tpu_custom_call.1} parent=1 // loop_pre_header
      _
    $region3: #{tpu_custom_call.1} parent=1 // loop_header
      %s22 = sphi 0, %s26
      %p23 = scmp.ge.s32.totalorder %s22, 4
      %s32 = sphi 0, %s34
      %s35 = sphi 0, %s32
      %s36 = sphi 0, %s35
      %s52 = sphi 0, %s36
      %s56 = sphi 0, %s56
      %s58 = sphi 0, %s56
      %s59 = sphi 0, %s58
      %s73 = sphi 0, %s59
      %s77 = sphi 0, %s77
      %s79 = sphi 0, %s77
      %s80 = sphi 0, %s79
      %s94 = sphi 0, %s80
      %s98 = sphi 0, %s98
      %s100 = sphi 0, %s98
      %s101 = sphi 0, %s100
      %s115 = sphi 0, %s101
      %s119 = sphi 0, %s119
      %s121 = sphi 0, %s119
      %s122 = sphi 0, %s121
      %s136 = sphi 0, %s122
      %s140 = sphi 0, %s140
      %s142 = sphi 0, %s140
      %s143 = sphi 0, %s142
      %s157 = sphi 0, %s143
      %s161 = sphi 0, %s161
      %s163 = sphi 0, %s161
      %s164 = sphi 0, %s163
      %s178 = sphi 0, %s164
      %s182 = sphi 0, %s182
      %s184 = sphi 0, %s182
      %s185 = sphi 0, %s184
      %s199 = sphi 0, %s185
      %s203 = sphi 0, %s203
      %s205 = sphi 0, %s203
      %s206 = sphi 0, %s205
      %s220 = sphi 0, %s206
      %s224 = sphi 0, %s224
      %s226 = sphi 0, %s224
      %s227 = sphi 0, %s226
      %s241 = sphi 0, %s227
      %s245 = sphi 0, %s245
      %s247 = sphi 0, %s245
      %s248 = sphi 0, %s247
      %s262 = sphi 0, %s248
      %s266 = sphi 0, %s266
      %s268 = sphi 0, %s266
      %s269 = sphi 0, %s268
      %s283 = sphi 0, %s269
      %s289 = sphi 0, %s291
      %s292 = sphi 0, %s289
      %s293 = sphi 0, %s292
      %s309 = sphi 0, %s293
    $region4: #{tpu_custom_call.1} parent=1 // loop_header_branch
      %25 = sbr.rel (%p23) target = $region8
    $region5: #{tpu_custom_call.1} parent=1 // loop_body
      %s27 = ssub.s32 %s22, 1
      %s28 = ssub.s32 %s22, 2
      %s29 = sadd.s32 %s22, 1
      %s30 = ssub.s32 %s22, %s29
      %p31 = scmp.eq.s32.totalorder %s30, 0
      %s33 = sadd.s32 %s32, 1
      %s34 = scalar_select %p31, %s32, %s33
      %p37 = pneg %p31
      %p38 = scmp.eq.s32.totalorder %s22, 1
      %p39 = por %p37, %p38
      %p40 = scmp.ne.s32.totalorder %s32, %s35
      %p41 = scmp.eq.s32.totalorder %s22, 0
      %p42 = por %p40, %p41
      %p43 = scmp.ne.s32.totalorder %s32, %s35
      %p44 = scmp.eq.s32.totalorder %s27, 1
      %p45 = por %p43, %p44
      %p46 = scmp.ne.s32.totalorder %s35, %s36
      %p47 = scmp.eq.s32.totalorder %s27, 0
      %p48 = por %p46, %p47
      %p49 = scmp.ne.s32.totalorder %s35, %s36
      %p50 = scmp.eq.s32.totalorder %s28, 1
      %p51 = por %p49, %p50
      %p53 = scmp.ne.s32.totalorder %s36, %s52
      %p54 = scmp.eq.s32.totalorder %s28, 0
      %p55 = por %p53, %p54
      %s57 = sadd.s32 %s56, 1
      %p60 = scmp.eq.s32.totalorder %s22, 1
      %p61 = scmp.ne.s32.totalorder %s56, %s58
      %p62 = scmp.eq.s32.totalorder %s22, 0
      %p63 = por %p61, %p62
      %p64 = scmp.ne.s32.totalorder %s56, %s58
      %p65 = scmp.eq.s32.totalorder %s27, 1
      %p66 = por %p64, %p65
      %p67 = scmp.ne.s32.totalorder %s58, %s59
      %p68 = scmp.eq.s32.totalorder %s27, 0
      %p69 = por %p67, %p68
      %p70 = scmp.ne.s32.totalorder %s58, %s59
      %p71 = scmp.eq.s32.totalorder %s28, 1
      %p72 = por %p70, %p71
      %p74 = scmp.ne.s32.totalorder %s59, %s73
      %p75 = scmp.eq.s32.totalorder %s28, 0
      %p76 = por %p74, %p75
      %s78 = sadd.s32 %s77, 1
      %p81 = scmp.eq.s32.totalorder %s22, 1
      %p82 = scmp.ne.s32.totalorder %s77, %s79
      %p83 = scmp.eq.s32.totalorder %s22, 0
      %p84 = por %p82, %p83
      %p85 = scmp.ne.s32.totalorder %s77, %s79
      %p86 = scmp.eq.s32.totalorder %s27, 1
      %p87 = por %p85, %p86
      %p88 = scmp.ne.s32.totalorder %s79, %s80
      %p89 = scmp.eq.s32.totalorder %s27, 0
      %p90 = por %p88, %p89
      %p91 = scmp.ne.s32.totalorder %s79, %s80
      %p92 = scmp.eq.s32.totalorder %s28, 1
      %p93 = por %p91, %p92
      %p95 = scmp.ne.s32.totalorder %s80, %s94
      %p96 = scmp.eq.s32.totalorder %s28, 0
      %p97 = por %p95, %p96
      %s99 = sadd.s32 %s98, 1
      %p102 = scmp.eq.s32.totalorder %s22, 1
      %p103 = scmp.ne.s32.totalorder %s98, %s100
      %p104 = scmp.eq.s32.totalorder %s22, 0
      %p105 = por %p103, %p104
      %p106 = scmp.ne.s32.totalorder %s98, %s100
      %p107 = scmp.eq.s32.totalorder %s27, 1
      %p108 = por %p106, %p107
      %p109 = scmp.ne.s32.totalorder %s100, %s101
      %p110 = scmp.eq.s32.totalorder %s27, 0
      %p111 = por %p109, %p110
      %p112 = scmp.ne.s32.totalorder %s100, %s101
      %p113 = scmp.eq.s32.totalorder %s28, 1
      %p114 = por %p112, %p113
      %p116 = scmp.ne.s32.totalorder %s101, %s115
      %p117 = scmp.eq.s32.totalorder %s28, 0
      %p118 = por %p116, %p117
      %s120 = sadd.s32 %s119, 1
      %p123 = scmp.eq.s32.totalorder %s22, 1
      %p124 = scmp.ne.s32.totalorder %s119, %s121
      %p125 = scmp.eq.s32.totalorder %s22, 0
      %p126 = por %p124, %p125
      %p127 = scmp.ne.s32.totalorder %s119, %s121
      %p128 = scmp.eq.s32.totalorder %s27, 1
      %p129 = por %p127, %p128
      %p130 = scmp.ne.s32.totalorder %s121, %s122
      %p131 = scmp.eq.s32.totalorder %s27, 0
      %p132 = por %p130, %p131
      %p133 = scmp.ne.s32.totalorder %s121, %s122
      %p134 = scmp.eq.s32.totalorder %s28, 1
      %p135 = por %p133, %p134
      %p137 = scmp.ne.s32.totalorder %s122, %s136
      %p138 = scmp.eq.s32.totalorder %s28, 0
      %p139 = por %p137, %p138
      %s141 = sadd.s32 %s140, 1
      %p144 = scmp.eq.s32.totalorder %s22, 1
      %p145 = scmp.ne.s32.totalorder %s140, %s142
      %p146 = scmp.eq.s32.totalorder %s22, 0
      %p147 = por %p145, %p146
      %p148 = scmp.ne.s32.totalorder %s140, %s142
      %p149 = scmp.eq.s32.totalorder %s27, 1
      %p150 = por %p148, %p149
      %p151 = scmp.ne.s32.totalorder %s142, %s143
      %p152 = scmp.eq.s32.totalorder %s27, 0
      %p153 = por %p151, %p152
      %p154 = scmp.ne.s32.totalorder %s142, %s143
      %p155 = scmp.eq.s32.totalorder %s28, 1
      %p156 = por %p154, %p155
      %p158 = scmp.ne.s32.totalorder %s143, %s157
      %p159 = scmp.eq.s32.totalorder %s28, 0
      %p160 = por %p158, %p159
      %s162 = sadd.s32 %s161, 1
      %p165 = scmp.eq.s32.totalorder %s22, 1
      %p166 = scmp.ne.s32.totalorder %s161, %s163
      %p167 = scmp.eq.s32.totalorder %s22, 0
      %p168 = por %p166, %p167
      %p169 = scmp.ne.s32.totalorder %s161, %s163
      %p170 = scmp.eq.s32.totalorder %s27, 1
      %p171 = por %p169, %p170
      %p172 = scmp.ne.s32.totalorder %s163, %s164
      %p173 = scmp.eq.s32.totalorder %s27, 0
      %p174 = por %p172, %p173
      %p175 = scmp.ne.s32.totalorder %s163, %s164
      %p176 = scmp.eq.s32.totalorder %s28, 1
      %p177 = por %p175, %p176
      %p179 = scmp.ne.s32.totalorder %s164, %s178
      %p180 = scmp.eq.s32.totalorder %s28, 0
      %p181 = por %p179, %p180
      %s183 = sadd.s32 %s182, 1
      %p186 = scmp.eq.s32.totalorder %s22, 1
      %p187 = scmp.ne.s32.totalorder %s182, %s184
      %p188 = scmp.eq.s32.totalorder %s22, 0
      %p189 = por %p187, %p188
      %p190 = scmp.ne.s32.totalorder %s182, %s184
      %p191 = scmp.eq.s32.totalorder %s27, 1
      %p192 = por %p190, %p191
      %p193 = scmp.ne.s32.totalorder %s184, %s185
      %p194 = scmp.eq.s32.totalorder %s27, 0
      %p195 = por %p193, %p194
      %p196 = scmp.ne.s32.totalorder %s184, %s185
      %p197 = scmp.eq.s32.totalorder %s28, 1
      %p198 = por %p196, %p197
      %p200 = scmp.ne.s32.totalorder %s185, %s199
      %p201 = scmp.eq.s32.totalorder %s28, 0
      %p202 = por %p200, %p201
      %s204 = sadd.s32 %s203, 1
      %p207 = scmp.eq.s32.totalorder %s22, 1
      %p208 = scmp.ne.s32.totalorder %s203, %s205
      %p209 = scmp.eq.s32.totalorder %s22, 0
      %p210 = por %p208, %p209
      %p211 = scmp.ne.s32.totalorder %s203, %s205
      %p212 = scmp.eq.s32.totalorder %s27, 1
      %p213 = por %p211, %p212
      %p214 = scmp.ne.s32.totalorder %s205, %s206
      %p215 = scmp.eq.s32.totalorder %s27, 0
      %p216 = por %p214, %p215
      %p217 = scmp.ne.s32.totalorder %s205, %s206
      %p218 = scmp.eq.s32.totalorder %s28, 1
      %p219 = por %p217, %p218
      %p221 = scmp.ne.s32.totalorder %s206, %s220
      %p222 = scmp.eq.s32.totalorder %s28, 0
      %p223 = por %p221, %p222
      %s225 = sadd.s32 %s224, 1
      %p228 = scmp.eq.s32.totalorder %s22, 1
      %p229 = scmp.ne.s32.totalorder %s224, %s226
      %p230 = scmp.eq.s32.totalorder %s22, 0
      %p231 = por %p229, %p230
      %p232 = scmp.ne.s32.totalorder %s224, %s226
      %p233 = scmp.eq.s32.totalorder %s27, 1
      %p234 = por %p232, %p233
      %p235 = scmp.ne.s32.totalorder %s226, %s227
      %p236 = scmp.eq.s32.totalorder %s27, 0
      %p237 = por %p235, %p236
      %p238 = scmp.ne.s32.totalorder %s226, %s227
      %p239 = scmp.eq.s32.totalorder %s28, 1
      %p240 = por %p238, %p239
      %p242 = scmp.ne.s32.totalorder %s227, %s241
      %p243 = scmp.eq.s32.totalorder %s28, 0
      %p244 = por %p242, %p243
      %s246 = sadd.s32 %s245, 1
      %p249 = scmp.eq.s32.totalorder %s22, 1
      %p250 = scmp.ne.s32.totalorder %s245, %s247
      %p251 = scmp.eq.s32.totalorder %s22, 0
      %p252 = por %p250, %p251
      %p253 = scmp.ne.s32.totalorder %s245, %s247
      %p254 = scmp.eq.s32.totalorder %s27, 1
      %p255 = por %p253, %p254
      %p256 = scmp.ne.s32.totalorder %s247, %s248
      %p257 = scmp.eq.s32.totalorder %s27, 0
      %p258 = por %p256, %p257
      %p259 = scmp.ne.s32.totalorder %s247, %s248
      %p260 = scmp.eq.s32.totalorder %s28, 1
      %p261 = por %p259, %p260
      %p263 = scmp.ne.s32.totalorder %s248, %s262
      %p264 = scmp.eq.s32.totalorder %s28, 0
      %p265 = por %p263, %p264
      %s267 = sadd.s32 %s266, 1
      %p270 = scmp.eq.s32.totalorder %s22, 1
      %p271 = scmp.ne.s32.totalorder %s266, %s268
      %p272 = scmp.eq.s32.totalorder %s22, 0
      %p273 = por %p271, %p272
      %p274 = scmp.ne.s32.totalorder %s266, %s268
      %p275 = scmp.eq.s32.totalorder %s27, 1
      %p276 = por %p274, %p275
      %p277 = scmp.ne.s32.totalorder %s268, %s269
      %p278 = scmp.eq.s32.totalorder %s27, 0
      %p279 = por %p277, %p278
      %p280 = scmp.ne.s32.totalorder %s268, %s269
      %p281 = scmp.eq.s32.totalorder %s28, 1
      %p282 = por %p280, %p281
      %p284 = scmp.ne.s32.totalorder %s269, %s283
      %p285 = scmp.eq.s32.totalorder %s28, 0
      %p286 = por %p284, %p285
      %s287 = ssub.s32 %s22, %s29
      %p288 = scmp.eq.s32.totalorder %s287, 0
      %s290 = sadd.s32 %s289, 1
      %s291 = scalar_select %p288, %s289, %s290
      %p294 = pneg %p288
      %p295 = scmp.eq.s32.totalorder %s22, 1
      %p296 = por %p294, %p295
      %p297 = scmp.ne.s32.totalorder %s289, %s292
      %p298 = scmp.eq.s32.totalorder %s22, 0
      %p299 = por %p297, %p298
      %p300 = scmp.ne.s32.totalorder %s289, %s292
      %p301 = scmp.eq.s32.totalorder %s27, 1
      %p302 = por %p300, %p301
      %p303 = scmp.ne.s32.totalorder %s292, %s293
      %p304 = scmp.eq.s32.totalorder %s27, 0
      %p305 = por %p303, %p304
      %p306 = scmp.ne.s32.totalorder %s292, %s293
      %p307 = scmp.eq.s32.totalorder %s28, 1
      %p308 = por %p306, %p307
      %p310 = scmp.ne.s32.totalorder %s293, %s309
      %p311 = scmp.eq.s32.totalorder %s28, 0
      %p312 = por %p310, %p311
      %p313 = scmp.le.s32.totalorder 1, %s22
      %p314 = scmp.lt.s32.totalorder %s22, 3
      %p315 = pnand %p313, %p314
      %p316 = pneg %p315
      // Predicated region
      $region9: #{tpu_custom_call.1} parent=5 // pred_check
        _
      $region10: #{tpu_custom_call.1} parent=5 // pred_check_branch
        %318 = sbr.rel (%p315) target = $region12
      $region11: #{tpu_custom_call.1} parent=5 // pred_region
        %s319 = ssub.s32 %s22, 1
        // Predicated region
        $region13: #{tpu_custom_call.1} parent=11 // pred_check
          %p320 = pneg %p69
        $region14: #{tpu_custom_call.1} parent=11 // pred_check_branch
          %322 = sbr.rel (%p320) target = $region16
        $region15: #{tpu_custom_call.1} parent=11 // pred_region
          _
        $region16: #{tpu_custom_call.1} parent=11 // pred_fallthru
          _
        // Predicated region
        $region17: #{tpu_custom_call.1} parent=11 // pred_check
          %p323 = pneg %p90
        $region18: #{tpu_custom_call.1} parent=11 // pred_check_branch
          %325 = sbr.rel (%p323) target = $region20
        $region19: #{tpu_custom_call.1} parent=11 // pred_region
          _
        $region20: #{tpu_custom_call.1} parent=11 // pred_fallthru
          _
        // Predicated region
        $region21: #{tpu_custom_call.1} parent=11 // pred_check
          %p326 = pneg %p111
        $region22: #{tpu_custom_call.1} parent=11 // pred_check_branch
          %328 = sbr.rel (%p326) target = $region24
        $region23: #{tpu_custom_call.1} parent=11 // pred_region
          _
        $region24: #{tpu_custom_call.1} parent=11 // pred_fallthru
          _
        // Predicated region
        $region25: #{tpu_custom_call.1} parent=11 // pred_check
          %p329 = pneg %p132
        $region26: #{tpu_custom_call.1} parent=11 // pred_check_branch
          %331 = sbr.rel (%p329) target = $region28
        $region27: #{tpu_custom_call.1} parent=11 // pred_region
          _
        $region28: #{tpu_custom_call.1} parent=11 // pred_fallthru
          _
        // Predicated region
        $region29: #{tpu_custom_call.1} parent=11 // pred_check
          %p332 = pneg %p153
        $region30: #{tpu_custom_call.1} parent=11 // pred_check_branch
          %334 = sbr.rel (%p332) target = $region32
        $region31: #{tpu_custom_call.1} parent=11 // pred_region
          _
        $region32: #{tpu_custom_call.1} parent=11 // pred_fallthru
          _
        // Predicated region
        $region33: #{tpu_custom_call.1} parent=11 // pred_check
          %p335 = pneg %p174
        $region34: #{tpu_custom_call.1} parent=11 // pred_check_branch
          %337 = sbr.rel (%p335) target = $region36
        $region35: #{tpu_custom_call.1} parent=11 // pred_region
          _
        $region36: #{tpu_custom_call.1} parent=11 // pred_fallthru
          _
        // Predicated region
        $region37: #{tpu_custom_call.1} parent=11 // pred_check
          %p338 = pneg %p195
        $region38: #{tpu_custom_call.1} parent=11 // pred_check_branch
          %340 = sbr.rel (%p338) target = $region40
        $region39: #{tpu_custom_call.1} parent=11 // pred_region
          _
        $region40: #{tpu_custom_call.1} parent=11 // pred_fallthru
          _
        // Predicated region
        $region41: #{tpu_custom_call.1} parent=11 // pred_check
          %p341 = pneg %p216
        $region42: #{tpu_custom_call.1} parent=11 // pred_check_branch
          %343 = sbr.rel (%p341) target = $region44
        $region43: #{tpu_custom_call.1} parent=11 // pred_region
          %s345 = ssub.s32 256, 256
          %346 = vsyncadd [#allocation5], %s345
          %s347 = sshll.u32 [#allocation4], 4
          %s348 = int_to_ptr.vmem [resolvable:$true] %s347
          %353 = dma.hbm_to_vmem [thread:$0]  %s8, 256, %s348, [#allocation5], 64, 64, 4
        $region44: #{tpu_custom_call.1} parent=11 // pred_fallthru
          _
        // Predicated region
        $region45: #{tpu_custom_call.1} parent=11 // pred_check
          %p354 = pneg %p237
        $region46: #{tpu_custom_call.1} parent=11 // pred_check_branch
          %356 = sbr.rel (%p354) target = $region48
        $region47: #{tpu_custom_call.1} parent=11 // pred_region
          _
        $region48: #{tpu_custom_call.1} parent=11 // pred_fallthru
          _
        // Predicated region
        $region49: #{tpu_custom_call.1} parent=11 // pred_check
          %p357 = pneg %p258
        $region50: #{tpu_custom_call.1} parent=11 // pred_check_branch
          %359 = sbr.rel (%p357) target = $region52
        $region51: #{tpu_custom_call.1} parent=11 // pred_region
          _
        $region52: #{tpu_custom_call.1} parent=11 // pred_fallthru
          _
        // Predicated region
        $region53: #{tpu_custom_call.1} parent=11 // pred_check
          %p360 = pneg %p279
        $region54: #{tpu_custom_call.1} parent=11 // pred_check_branch
          %362 = sbr.rel (%p360) target = $region56
        $region55: #{tpu_custom_call.1} parent=11 // pred_region
          _
        $region56: #{tpu_custom_call.1} parent=11 // pred_fallthru
          _
      $region12: #{tpu_custom_call.1} parent=5 // pred_fallthru
        _
      %p363 = scmp.lt.s32.totalorder %s22, 2
      // Predicated region
      $region57: #{tpu_custom_call.1} parent=5 // pred_check
        %p364 = pneg %p363
      $region58: #{tpu_custom_call.1} parent=5 // pred_check_branch
        %366 = sbr.rel (%p364) target = $region60
      $region59: #{tpu_custom_call.1} parent=5 // pred_region
        // Predicated region
        $region61: #{tpu_custom_call.1} parent=59 // pred_check
          %p367 = pneg %p42
        $region62: #{tpu_custom_call.1} parent=59 // pred_check_branch
          %369 = sbr.rel (%p367) target = $region64
        $region63: #{tpu_custom_call.1} parent=59 // pred_region
          %p370 = scmp.lt.s32.totalorder %s22, 1
          %s371 = scalar_select %p370, %s22, 1
          %s372 = smul.addr %s371, 8
          %s373 = scalar_lea.vmem %s0, %s372
        $region64: #{tpu_custom_call.1} parent=59 // pred_fallthru
          _
      $region60: #{tpu_custom_call.1} parent=5 // pred_fallthru
        _
      %p374 = scmp.le.s32.totalorder 1, %s22
      %p375 = scmp.lt.s32.totalorder %s22, 3
      %p376 = pnand %p374, %p375
      %p377 = pneg %p376
      // Predicated region
      $region65: #{tpu_custom_call.1} parent=5 // pred_check
        _
      $region66: #{tpu_custom_call.1} parent=5 // pred_check_branch
        %379 = sbr.rel (%p376) target = $region68
      $region67: #{tpu_custom_call.1} parent=5 // pred_region
        %s380 = ssub.s32 %s22, 1
        // Predicated region
        $region69: #{tpu_custom_call.1} parent=67 // pred_check
          %p381 = pneg %p216
        $region70: #{tpu_custom_call.1} parent=67 // pred_check_branch
          %383 = sbr.rel (%p381) target = $region72
        $region71: #{tpu_custom_call.1} parent=67 // pred_region
          %384 = dma.done [#allocation5], 256
        $region72: #{tpu_custom_call.1} parent=67 // pred_fallthru
          _
        %p385 = scmp.lt.s32.totalorder %s27, 1
        %s386 = scalar_select %p385, %s27, 1
        %s387 = smul.addr %s386, 8
        %s388 = scalar_lea.vmem %s0, %s387
        %p389 = pneg %p48
        %p390 = pneg %p45
        %p391 = pneg %p69
        %p392 = pneg %p66
        %p393 = pneg %p90
        %p394 = pneg %p87
        %p395 = pneg %p111
        %p396 = pneg %p108
        %p397 = pneg %p132
        %p398 = pneg %p129
        %p399 = pneg %p153
        %p400 = pneg %p150
        %p401 = pneg %p174
        %p402 = pneg %p171
        %p403 = pneg %p195
        %p404 = pneg %p192
        %p405 = pneg %p216
        %p406 = pneg %p213
        %p407 = pneg %p237
        %p408 = pneg %p234
        %p409 = pneg %p258
        %p410 = pneg %p255
        %p411 = pneg %p279
        %p412 = pneg %p276
        %p413 = pneg %p305
        %p414 = pneg %p302
        %s415 = sand.u32 %s292, 1
        %s416 = scalar_lea.sflag [#allocation6], %s415
        %s417 = sand.u32 %s292, 1
        %s418 = smul.addr %s417, 8
        %s419 = scalar_lea.vmem [#allocation7], %s418
        %p420 = scmp.lt.s32.totalorder %s27, 1
        %s421 = scalar_select %p420, %s27, 1
        %s422 = smul.addr %s421, 8
        %s423 = scalar_lea.vmem %s0, %s422
        %v425 = vld [vmem:[%s423] sm:$0xff]
        %v426 = vld [vmem:[%s1] sm:$0x1]
        %v427 = vld [vmem:[%s2] sm:$0x1]
        %vm428 = vcmask 261120
        %v429 = vsel %vm428, %v425, 0.0
        %430 = vadd.xlane.f32.xlu0 %v429
        %v431 = vpop.xlane.xlu0 %430
        %v432 = vrcp.pop 32.0
        %v433 = vmul.f32 %v431, %v432
        %v434 = vsub.f32 %v425, %v433
        %v435 = vmul.f32 %v434, %v434
        %v436 = vsel %vm428, %v435, 0.0
        %437 = vadd.xlane.f32.xlu0 %v436
        %v438 = vpop.xlane.xlu0 %437
        %v439 = vmul.f32 %v438, %v432
        %v440 = vadd.f32 %v439, 1e-05
        %v441 = vrsqrt.pop %v440
        %v442 = vmul.f32 %v434, %v441
        %v444 = vlaneseq
        %v445 = vshrl.u32 %v444, 7
        %v446 = vsub.s32 0, %v445
        %v447 = vrot.slane %v426, %v446
        %v449 = vmul.f32 %v442, %v447
        %v451 = vlaneseq
        %v452 = vshrl.u32 %v451, 7
        %v453 = vsub.s32 0, %v452
        %v454 = vrot.slane %v427, %v453
        %v456 = vadd.f32 %v449, %v454
        %v457 = vpack.c.bf16 %v456, %v456
        %v458 = vld [vmem:[%s3] sm:$0xf]
        %v459 = vld [vmem:[%s3 + $0x4] sm:$0xf]
        %v460 = vld [vmem:[%s3 + $0x8] sm:$0xf]
        %v461 = vld [vmem:[%s3 + $0xc] sm:$0xf]
        %v466 = vunpack.c.l.b16 %v458
        %v467 = vunpack.c.l.b16 %v459
        %v468 = vunpack.c.l.b16 %v460
        %v469 = vunpack.c.l.b16 %v461
        %v470 = vpack.c.b16 %v467, %v466
        %v471 = vpack.c.b16 %v469, %v468
        %v475 = vsel %vm428, %v457, 0
        %477 = vmatprep.subr.bf16.mxu0 0
        %478 = vmatpush1.bf16.msra.mxu0 %v470
        %479 = vmatprep.subr.bf16.mxu0 0
        %480 = vmatpush1.bf16.msra.mxu0 %v471
        %481 = vmatprep.subr.bf16.mxu0 0
        %482 = vmatpush1.bf16.msra.mxu0 0
        %483 = vmatprep.subr.bf16.mxu0 0
        %484 = vmatpush1.bf16.msra.mxu0 0
        %485 = vmatprep.subr.bf16.mxu0 0
        %486 = vmatpush1.bf16.msra.mxu0 0
        %487 = vmatprep.subr.bf16.mxu0 0
        %488 = vmatpush1.bf16.msra.mxu0 0
        %489 = vmatprep.subr.bf16.mxu0 0
        %490 = vmatpush1.bf16.msra.mxu0 0
        %491 = vmatprep.subr.bf16.mxu0 0
        %492 = vmatpush1.bf16.msra.mxu0 0
        %493 = vmatprep.subr.bf16.mxu0 0
        %494 = vmatpush1.bf16.msra.mxu0 0
        %495 = vmatprep.subr.bf16.mxu0 0
        %496 = vmatpush1.bf16.msra.mxu0 0
        %497 = vmatprep.subr.bf16.mxu0 0
        %498 = vmatpush1.bf16.msra.mxu0 0
        %499 = vmatprep.subr.bf16.mxu0 0
        %500 = vmatpush1.bf16.msra.mxu0 0
        %501 = vmatprep.subr.bf16.mxu0 0
        %502 = vmatpush1.bf16.msra.mxu0 0
        %503 = vmatprep.subr.bf16.mxu0 0
        %504 = vmatpush1.bf16.msra.mxu0 0
        %505 = vmatprep.subr.bf16.mxu0 0
        %506 = vmatpush1.bf16.msra.mxu0 0
        %507 = vmatprep.subr.bf16.mxu0 0
        %508 = vmatpush1.bf16.msra.mxu0 0
        %509 = vmatprep.mubr.bf16.mxu0 0
        %510 = vmatmul.mubr.bf16.gmra.mrb[0].mxu0 %v475
        %v511 = vpop.f32.mrb[0].mxu0
        %v512 = vadd.f32 0.0, %v511
        %v513 = vpop.f32.mrb[0].mxu0
        %v514 = vpop.f32.mrb[0].mxu0
        %v515 = vpop.f32.mrb[0].mxu0
        %516 = vdwg.mxu0
        %vm517 = vcmask 785408
        %518 = vst.msk [vmem:[#allocation2] sm:$0xff] %vm517, %v512
        %v519 = vld [vmem:[#allocation2] sm:$0xff]
        %v520 = vpack.c.bf16 %v519, %v519
        %522 = vrot.lane.b32.xlu0 %v520, 96
        %v523 = vpop.permute.xlu0 %522
        %vm524 = vcmask 64512
        %v526 = vsel %vm524, %v520, 0
        %v529 = vsel %vm524, %v523, 0
        %531 = vmatprep.subr.bf16.mxu0 0
        %532 = vmatpush1.bf16.xpose.msra.mxu0 %v529
        %533 = vmatprep.subr.bf16.mxu0 0
        %534 = vmatpush1.bf16.xpose.msra.mxu0 0
        %535 = vmatprep.subr.bf16.mxu0 0
        %536 = vmatpush1.bf16.xpose.msra.mxu0 0
        %537 = vmatprep.subr.bf16.mxu0 0
        %538 = vmatpush1.bf16.xpose.msra.mxu0 0
        %539 = vmatprep.subr.bf16.mxu0 0
        %540 = vmatpush1.bf16.xpose.msra.mxu0 0
        %541 = vmatprep.subr.bf16.mxu0 0
        %542 = vmatpush1.bf16.xpose.msra.mxu0 0
        %543 = vmatprep.subr.bf16.mxu0 0
        %544 = vmatpush1.bf16.xpose.msra.mxu0 0
        %545 = vmatprep.subr.bf16.mxu0 0
        %546 = vmatpush1.bf16.xpose.msra.mxu0 0
        %547 = vmatprep.subr.bf16.mxu0 0
        %548 = vmatpush1.bf16.xpose.msra.mxu0 0
        %549 = vmatprep.subr.bf16.mxu0 0
        %550 = vmatpush1.bf16.xpose.msra.mxu0 0
        %551 = vmatprep.subr.bf16.mxu0 0
        %552 = vmatpush1.bf16.xpose.msra.mxu0 0
        %553 = vmatprep.subr.bf16.mxu0 0
        %554 = vmatpush1.bf16.xpose.msra.mxu0 0
        %555 = vmatprep.subr.bf16.mxu0 0
        %556 = vmatpush1.bf16.xpose.msra.mxu0 0
        %557 = vmatprep.subr.bf16.mxu0 0
        %558 = vmatpush1.bf16.xpose.msra.mxu0 0
        %559 = vmatprep.subr.bf16.mxu0 0
        %560 = vmatpush1.bf16.xpose.msra.mxu0 0
        %561 = vmatprep.subr.bf16.mxu0 0
        %562 = vmatpush1.bf16.xpose.msra.mxu0 0
        %563 = vmatprep.mubr.bf16.mxu0 0
        %564 = vmatmul.mubr.bf16.gmra.mrb[0].mxu0 %v526
        %v565 = vpop.f32.mrb[0].mxu0
        %v566 = vadd.f32 0.0, %v565
        %v567 = vpop.f32.mrb[0].mxu0
        %v568 = vpop.f32.mrb[0].mxu0
        %v569 = vpop.f32.mrb[0].mxu0
        %570 = vdwg.mxu0
        %v571 = vmul.f32 %v566, 0.35355338
        %v572 = vsel %vm524, %v571, -inf
        %573 = vmax.xlane.f32.xlu0 %v572
        %v574 = vpop.xlane.xlu0 %573
        %v575 = vsub.f32 %v571, %v574
        %v576 = vmul.f32 %v575, 1.442695
        %v577 = vpow.pop %v576
        %v578 = vsel %vm524, %v577, 0.0
        %579 = vadd.xlane.f32.xlu0 %v578
        %v580 = vpop.xlane.xlu0 %579
        %v581 = vrcp.pop %v580
        %v582 = vmul.f32 %v577, %v581
        %v583 = vpack.c.bf16 %v582, %v582
        %584 = vrot.lane.b32.xlu0 %v520, 64
        %v585 = vpop.permute.xlu0 %584
        %v587 = vsel %vm524, %v583, 0
        %vm589 = vcmask 1043456
        %v591 = vsel %vm589, %v585, 0
        %593 = vmatprep.subr.bf16.mxu0 0
        %594 = vmatpush1.bf16.msra.mxu0 %v591
        %595 = vmatprep.subr.bf16.mxu0 0
        %596 = vmatpush1.bf16.msra.mxu0 0
        %597 = vmatprep.subr.bf16.mxu0 0
        %598 = vmatpush1.bf16.msra.mxu0 0
        %599 = vmatprep.subr.bf16.mxu0 0
        %600 = vmatpush1.bf16.msra.mxu0 0
        %601 = vmatprep.subr.bf16.mxu0 0
        %602 = vmatpush1.bf16.msra.mxu0 0
        %603 = vmatprep.subr.bf16.mxu0 0
        %604 = vmatpush1.bf16.msra.mxu0 0
        %605 = vmatprep.subr.bf16.mxu0 0
        %606 = vmatpush1.bf16.msra.mxu0 0
        %607 = vmatprep.subr.bf16.mxu0 0
        %608 = vmatpush1.bf16.msra.mxu0 0
        %609 = vmatprep.subr.bf16.mxu0 0
        %610 = vmatpush1.bf16.msra.mxu0 0
        %611 = vmatprep.subr.bf16.mxu0 0
        %612 = vmatpush1.bf16.msra.mxu0 0
        %613 = vmatprep.subr.bf16.mxu0 0
        %614 = vmatpush1.bf16.msra.mxu0 0
        %615 = vmatprep.subr.bf16.mxu0 0
        %616 = vmatpush1.bf16.msra.mxu0 0
        %617 = vmatprep.subr.bf16.mxu0 0
        %618 = vmatpush1.bf16.msra.mxu0 0
        %619 = vmatprep.subr.bf16.mxu0 0
        %620 = vmatpush1.bf16.msra.mxu0 0
        %621 = vmatprep.subr.bf16.mxu0 0
        %622 = vmatpush1.bf16.msra.mxu0 0
        %623 = vmatprep.subr.bf16.mxu0 0
        %624 = vmatpush1.bf16.msra.mxu0 0
        %625 = vmatprep.mubr.bf16.mxu0 0
        %626 = vmatmul.mubr.bf16.gmra.mrb[0].mxu0 %v587
        %v627 = vpop.f32.mrb[0].mxu0
        %v628 = vadd.f32 0.0, %v627
        %v629 = vpop.f32.mrb[0].mxu0
        %v630 = vpop.f32.mrb[0].mxu0
        %v631 = vpop.f32.mrb[0].mxu0
        %632 = vdwg.mxu0
        %633 = vst.msk [vmem:[#allocation3] sm:$0xff] %vm524, %v628
        %v634 = vld [vmem:[#allocation2] sm:$0xff]
        %v635 = vpack.c.bf16 %v634, %v634
        %637 = vrot.lane.b32.xlu0 %v635, 120
        %v638 = vpop.permute.xlu0 %637
        %639 = vrot.lane.b32.xlu0 %v635, 88
        %v640 = vpop.permute.xlu0 %639
        %v642 = vsel %vm524, %v638, 0
        %v645 = vsel %vm524, %v640, 0
        %647 = vmatprep.subr.bf16.mxu0 0
        %648 = vmatpush1.bf16.xpose.msra.mxu0 %v645
        %649 = vmatprep.subr.bf16.mxu0 0
        %650 = vmatpush1.bf16.xpose.msra.mxu0 0
        %651 = vmatprep.subr.bf16.mxu0 0
        %652 = vmatpush1.bf16.xpose.msra.mxu0 0
        %653 = vmatprep.subr.bf16.mxu0 0
        %654 = vmatpush1.bf16.xpose.msra.mxu0 0
        %655 = vmatprep.subr.bf16.mxu0 0
        %656 = vmatpush1.bf16.xpose.msra.mxu0 0
        %657 = vmatprep.subr.bf16.mxu0 0
        %658 = vmatpush1.bf16.xpose.msra.mxu0 0
        %659 = vmatprep.subr.bf16.mxu0 0
        %660 = vmatpush1.bf16.xpose.msra.mxu0 0
        %661 = vmatprep.subr.bf16.mxu0 0
        %662 = vmatpush1.bf16.xpose.msra.mxu0 0
        %663 = vmatprep.subr.bf16.mxu0 0
        %664 = vmatpush1.bf16.xpose.msra.mxu0 0
        %665 = vmatprep.subr.bf16.mxu0 0
        %666 = vmatpush1.bf16.xpose.msra.mxu0 0
        %667 = vmatprep.subr.bf16.mxu0 0
        %668 = vmatpush1.bf16.xpose.msra.mxu0 0
        %669 = vmatprep.subr.bf16.mxu0 0
        %670 = vmatpush1.bf16.xpose.msra.mxu0 0
        %671 = vmatprep.subr.bf16.mxu0 0
        %672 = vmatpush1.bf16.xpose.msra.mxu0 0
        %673 = vmatprep.subr.bf16.mxu0 0
        %674 = vmatpush1.bf16.xpose.msra.mxu0 0
        %675 = vmatprep.subr.bf16.mxu0 0
        %676 = vmatpush1.bf16.xpose.msra.mxu0 0
        %677 = vmatprep.subr.bf16.mxu0 0
        %678 = vmatpush1.bf16.xpose.msra.mxu0 0
        %679 = vmatprep.mubr.bf16.mxu0 0
        %680 = vmatmul.mubr.bf16.gmra.mrb[0].mxu0 %v642
        %v681 = vpop.f32.mrb[0].mxu0
        %v682 = vadd.f32 0.0, %v681
        %v683 = vpop.f32.mrb[0].mxu0
        %v684 = vpop.f32.mrb[0].mxu0
        %v685 = vpop.f32.mrb[0].mxu0
        %686 = vdwg.mxu0
        %v687 = vmul.f32 %v682, 0.35355338
        %v688 = vsel %vm524, %v687, -inf
        %689 = vmax.xlane.f32.xlu0 %v688
        %v690 = vpop.xlane.xlu0 %689
        %v691 = vsub.f32 %v687, %v690
        %v692 = vmul.f32 %v691, 1.442695
        %v693 = vpow.pop %v692
        %v694 = vsel %vm524, %v693, 0.0
        %695 = vadd.xlane.f32.xlu0 %v694
        %v696 = vpop.xlane.xlu0 %695
        %v697 = vrcp.pop %v696
        %v698 = vmul.f32 %v693, %v697
        %v699 = vpack.c.bf16 %v698, %v698
        %700 = vrot.lane.b32.xlu0 %v635, 56
        %v701 = vpop.permute.xlu0 %700
        %v703 = vsel %vm524, %v699, 0
        %v706 = vsel %vm589, %v701, 0
        %708 = vmatprep.subr.bf16.mxu0 0
        %709 = vmatpush1.bf16.msra.mxu0 %v706
        %710 = vmatprep.subr.bf16.mxu0 0
        %711 = vmatpush1.bf16.msra.mxu0 0
        %712 = vmatprep.subr.bf16.mxu0 0
        %713 = vmatpush1.bf16.msra.mxu0 0
        %714 = vmatprep.subr.bf16.mxu0 0
        %715 = vmatpush1.bf16.msra.mxu0 0
        %716 = vmatprep.subr.bf16.mxu0 0
        %717 = vmatpush1.bf16.msra.mxu0 0
        %718 = vmatprep.subr.bf16.mxu0 0
        %719 = vmatpush1.bf16.msra.mxu0 0
        %720 = vmatprep.subr.bf16.mxu0 0
        %721 = vmatpush1.bf16.msra.mxu0 0
        %722 = vmatprep.subr.bf16.mxu0 0
        %723 = vmatpush1.bf16.msra.mxu0 0
        %724 = vmatprep.subr.bf16.mxu0 0
        %725 = vmatpush1.bf16.msra.mxu0 0
        %726 = vmatprep.subr.bf16.mxu0 0
        %727 = vmatpush1.bf16.msra.mxu0 0
        %728 = vmatprep.subr.bf16.mxu0 0
        %729 = vmatpush1.bf16.msra.mxu0 0
        %730 = vmatprep.subr.bf16.mxu0 0
        %731 = vmatpush1.bf16.msra.mxu0 0
        %732 = vmatprep.subr.bf16.mxu0 0
        %733 = vmatpush1.bf16.msra.mxu0 0
        %734 = vmatprep.subr.bf16.mxu0 0
        %735 = vmatpush1.bf16.msra.mxu0 0
        %736 = vmatprep.subr.bf16.mxu0 0
        %737 = vmatpush1.bf16.msra.mxu0 0
        %738 = vmatprep.subr.bf16.mxu0 0
        %739 = vmatpush1.bf16.msra.mxu0 0
        %740 = vmatprep.mubr.bf16.mxu0 0
        %741 = vmatmul.mubr.bf16.gmra.mrb[0].mxu0 %v703
        %v742 = vpop.f32.mrb[0].mxu0
        %v743 = vadd.f32 0.0, %v742
        %v744 = vpop.f32.mrb[0].mxu0
        %v745 = vpop.f32.mrb[0].mxu0
        %v746 = vpop.f32.mrb[0].mxu0
        %747 = vdwg.mxu0
        %749 = vrot.lane.b32.xlu0 %v743, 8
        %v750 = vpop.permute.xlu0 %749
        %vm752 = vcmask 130112
        %753 = vst.msk [vmem:[#allocation3] sm:$0xff] %vm752, %v750
        %v754 = vld [vmem:[#allocation2] sm:$0xff]
        %v755 = vpack.c.bf16 %v754, %v754
        %757 = vrot.lane.b32.xlu0 %v755, 112
        %v758 = vpop.permute.xlu0 %757
        %759 = vrot.lane.b32.xlu0 %v755, 80
        %v760 = vpop.permute.xlu0 %759
        %v762 = vsel %vm524, %v758, 0
        %v765 = vsel %vm524, %v760, 0
        %767 = vmatprep.subr.bf16.mxu0 0
        %768 = vmatpush1.bf16.xpose.msra.mxu0 %v765
        %769 = vmatprep.subr.bf16.mxu0 0
        %770 = vmatpush1.bf16.xpose.msra.mxu0 0
        %771 = vmatprep.subr.bf16.mxu0 0
        %772 = vmatpush1.bf16.xpose.msra.mxu0 0
        %773 = vmatprep.subr.bf16.mxu0 0
        %774 = vmatpush1.bf16.xpose.msra.mxu0 0
        %775 = vmatprep.subr.bf16.mxu0 0
        %776 = vmatpush1.bf16.xpose.msra.mxu0 0
        %777 = vmatprep.subr.bf16.mxu0 0
        %778 = vmatpush1.bf16.xpose.msra.mxu0 0
        %779 = vmatprep.subr.bf16.mxu0 0
        %780 = vmatpush1.bf16.xpose.msra.mxu0 0
        %781 = vmatprep.subr.bf16.mxu0 0
        %782 = vmatpush1.bf16.xpose.msra.mxu0 0
        %783 = vmatprep.subr.bf16.mxu0 0
        %784 = vmatpush1.bf16.xpose.msra.mxu0 0
        %785 = vmatprep.subr.bf16.mxu0 0
        %786 = vmatpush1.bf16.xpose.msra.mxu0 0
        %787 = vmatprep.subr.bf16.mxu0 0
        %788 = vmatpush1.bf16.xpose.msra.mxu0 0
        %789 = vmatprep.subr.bf16.mxu0 0
        %790 = vmatpush1.bf16.xpose.msra.mxu0 0
        %791 = vmatprep.subr.bf16.mxu0 0
        %792 = vmatpush1.bf16.xpose.msra.mxu0 0
        %793 = vmatprep.subr.bf16.mxu0 0
        %794 = vmatpush1.bf16.xpose.msra.mxu0 0
        %795 = vmatprep.subr.bf16.mxu0 0
        %796 = vmatpush1.bf16.xpose.msra.mxu0 0
        %797 = vmatprep.subr.bf16.mxu0 0
        %798 = vmatpush1.bf16.xpose.msra.mxu0 0
        %799 = vmatprep.mubr.bf16.mxu0 0
        %800 = vmatmul.mubr.bf16.gmra.mrb[0].mxu0 %v762
        %v801 = vpop.f32.mrb[0].mxu0
        %v802 = vadd.f32 0.0, %v801
        %v803 = vpop.f32.mrb[0].mxu0
        %v804 = vpop.f32.mrb[0].mxu0
        %v805 = vpop.f32.mrb[0].mxu0
        %806 = vdwg.mxu0
        %v807 = vmul.f32 %v802, 0.35355338
        %v808 = vsel %vm524, %v807, -inf
        %809 = vmax.xlane.f32.xlu0 %v808
        %v810 = vpop.xlane.xlu0 %809
        %v811 = vsub.f32 %v807, %v810
        %v812 = vmul.f32 %v811, 1.442695
        %v813 = vpow.pop %v812
        %v814 = vsel %vm524, %v813, 0.0
        %815 = vadd.xlane.f32.xlu0 %v814
        %v816 = vpop.xlane.xlu0 %815
        %v817 = vrcp.pop %v816
        %v818 = vmul.f32 %v813, %v817
        %v819 = vpack.c.bf16 %v818, %v818
        %820 = vrot.lane.b32.xlu0 %v755, 48
        %v821 = vpop.permute.xlu0 %820
        %v823 = vsel %vm524, %v819, 0
        %v826 = vsel %vm589, %v821, 0
        %828 = vmatprep.subr.bf16.mxu0 0
        %829 = vmatpush1.bf16.msra.mxu0 %v826
        %830 = vmatprep.subr.bf16.mxu0 0
        %831 = vmatpush1.bf16.msra.mxu0 0
        %832 = vmatprep.subr.bf16.mxu0 0
        %833 = vmatpush1.bf16.msra.mxu0 0
        %834 = vmatprep.subr.bf16.mxu0 0
        %835 = vmatpush1.bf16.msra.mxu0 0
        %836 = vmatprep.subr.bf16.mxu0 0
        %837 = vmatpush1.bf16.msra.mxu0 0
        %838 = vmatprep.subr.bf16.mxu0 0
        %839 = vmatpush1.bf16.msra.mxu0 0
        %840 = vmatprep.subr.bf16.mxu0 0
        %841 = vmatpush1.bf16.msra.mxu0 0
        %842 = vmatprep.subr.bf16.mxu0 0
        %843 = vmatpush1.bf16.msra.mxu0 0
        %844 = vmatprep.subr.bf16.mxu0 0
        %845 = vmatpush1.bf16.msra.mxu0 0
        %846 = vmatprep.subr.bf16.mxu0 0
        %847 = vmatpush1.bf16.msra.mxu0 0
        %848 = vmatprep.subr.bf16.mxu0 0
        %849 = vmatpush1.bf16.msra.mxu0 0
        %850 = vmatprep.subr.bf16.mxu0 0
        %851 = vmatpush1.bf16.msra.mxu0 0
        %852 = vmatprep.subr.bf16.mxu0 0
        %853 = vmatpush1.bf16.msra.mxu0 0
        %854 = vmatprep.subr.bf16.mxu0 0
        %855 = vmatpush1.bf16.msra.mxu0 0
        %856 = vmatprep.subr.bf16.mxu0 0
        %857 = vmatpush1.bf16.msra.mxu0 0
        %858 = vmatprep.subr.bf16.mxu0 0
        %859 = vmatpush1.bf16.msra.mxu0 0
        %860 = vmatprep.mubr.bf16.mxu0 0
        %861 = vmatmul.mubr.bf16.gmra.mrb[0].mxu0 %v823
        %v862 = vpop.f32.mrb[0].mxu0
        %v863 = vadd.f32 0.0, %v862
        %v864 = vpop.f32.mrb[0].mxu0
        %v865 = vpop.f32.mrb[0].mxu0
        %v866 = vpop.f32.mrb[0].mxu0
        %867 = vdwg.mxu0
        %869 = vrot.lane.b32.xlu0 %v863, 16
        %v870 = vpop.permute.xlu0 %869
        %vm872 = vcmask 195712
        %873 = vst.msk [vmem:[#allocation3] sm:$0xff] %vm872, %v870
        %v874 = vld [vmem:[#allocation2] sm:$0xff]
        %v875 = vpack.c.bf16 %v874, %v874
        %877 = vrot.lane.b32.xlu0 %v875, 104
        %v878 = vpop.permute.xlu0 %877
        %879 = vrot.lane.b32.xlu0 %v875, 72
        %v880 = vpop.permute.xlu0 %879
        %v882 = vsel %vm524, %v878, 0
        %v885 = vsel %vm524, %v880, 0
        %887 = vmatprep.subr.bf16.mxu0 0
        %888 = vmatpush1.bf16.xpose.msra.mxu0 %v885
        %889 = vmatprep.subr.bf16.mxu0 0
        %890 = vmatpush1.bf16.xpose.msra.mxu0 0
        %891 = vmatprep.subr.bf16.mxu0 0
        %892 = vmatpush1.bf16.xpose.msra.mxu0 0
        %893 = vmatprep.subr.bf16.mxu0 0
        %894 = vmatpush1.bf16.xpose.msra.mxu0 0
        %895 = vmatprep.subr.bf16.mxu0 0
        %896 = vmatpush1.bf16.xpose.msra.mxu0 0
        %897 = vmatprep.subr.bf16.mxu0 0
        %898 = vmatpush1.bf16.xpose.msra.mxu0 0
        %899 = vmatprep.subr.bf16.mxu0 0
        %900 = vmatpush1.bf16.xpose.msra.mxu0 0
        %901 = vmatprep.subr.bf16.mxu0 0
        %902 = vmatpush1.bf16.xpose.msra.mxu0 0
        %903 = vmatprep.subr.bf16.mxu0 0
        %904 = vmatpush1.bf16.xpose.msra.mxu0 0
        %905 = vmatprep.subr.bf16.mxu0 0
        %906 = vmatpush1.bf16.xpose.msra.mxu0 0
        %907 = vmatprep.subr.bf16.mxu0 0
        %908 = vmatpush1.bf16.xpose.msra.mxu0 0
        %909 = vmatprep.subr.bf16.mxu0 0
        %910 = vmatpush1.bf16.xpose.msra.mxu0 0
        %911 = vmatprep.subr.bf16.mxu0 0
        %912 = vmatpush1.bf16.xpose.msra.mxu0 0
        %913 = vmatprep.subr.bf16.mxu0 0
        %914 = vmatpush1.bf16.xpose.msra.mxu0 0
        %915 = vmatprep.subr.bf16.mxu0 0
        %916 = vmatpush1.bf16.xpose.msra.mxu0 0
        %917 = vmatprep.subr.bf16.mxu0 0
        %918 = vmatpush1.bf16.xpose.msra.mxu0 0
        %919 = vmatprep.mubr.bf16.mxu0 0
        %920 = vmatmul.mubr.bf16.gmra.mrb[0].mxu0 %v882
        %v921 = vpop.f32.mrb[0].mxu0
        %v922 = vadd.f32 0.0, %v921
        %v923 = vpop.f32.mrb[0].mxu0
        %v924 = vpop.f32.mrb[0].mxu0
        %v925 = vpop.f32.mrb[0].mxu0
        %926 = vdwg.mxu0
        %v927 = vmul.f32 %v922, 0.35355338
        %v928 = vsel %vm524, %v927, -inf
        %929 = vmax.xlane.f32.xlu0 %v928
        %v930 = vpop.xlane.xlu0 %929
        %v931 = vsub.f32 %v927, %v930
        %v932 = vmul.f32 %v931, 1.442695
        %v933 = vpow.pop %v932
        %v934 = vsel %vm524, %v933, 0.0
        %935 = vadd.xlane.f32.xlu0 %v934
        %v936 = vpop.xlane.xlu0 %935
        %v937 = vrcp.pop %v936
        %v938 = vmul.f32 %v933, %v937
        %v939 = vpack.c.bf16 %v938, %v938
        %940 = vrot.lane.b32.xlu0 %v875, 40
        %v941 = vpop.permute.xlu0 %940
        %v943 = vsel %vm524, %v939, 0
        %v946 = vsel %vm589, %v941, 0
        %948 = vmatprep.subr.bf16.mxu0 0
        %949 = vmatpush1.bf16.msra.mxu0 %v946
        %950 = vmatprep.subr.bf16.mxu0 0
        %951 = vmatpush1.bf16.msra.mxu0 0
        %952 = vmatprep.subr.bf16.mxu0 0
        %953 = vmatpush1.bf16.msra.mxu0 0
        %954 = vmatprep.subr.bf16.mxu0 0
        %955 = vmatpush1.bf16.msra.mxu0 0
        %956 = vmatprep.subr.bf16.mxu0 0
        %957 = vmatpush1.bf16.msra.mxu0 0
        %958 = vmatprep.subr.bf16.mxu0 0
        %959 = vmatpush1.bf16.msra.mxu0 0
        %960 = vmatprep.subr.bf16.mxu0 0
        %961 = vmatpush1.bf16.msra.mxu0 0
        %962 = vmatprep.subr.bf16.mxu0 0
        %963 = vmatpush1.bf16.msra.mxu0 0
        %964 = vmatprep.subr.bf16.mxu0 0
        %965 = vmatpush1.bf16.msra.mxu0 0
        %966 = vmatprep.subr.bf16.mxu0 0
        %967 = vmatpush1.bf16.msra.mxu0 0
        %968 = vmatprep.subr.bf16.mxu0 0
        %969 = vmatpush1.bf16.msra.mxu0 0
        %970 = vmatprep.subr.bf16.mxu0 0
        %971 = vmatpush1.bf16.msra.mxu0 0
        %972 = vmatprep.subr.bf16.mxu0 0
        %973 = vmatpush1.bf16.msra.mxu0 0
        %974 = vmatprep.subr.bf16.mxu0 0
        %975 = vmatpush1.bf16.msra.mxu0 0
        %976 = vmatprep.subr.bf16.mxu0 0
        %977 = vmatpush1.bf16.msra.mxu0 0
        %978 = vmatprep.subr.bf16.mxu0 0
        %979 = vmatpush1.bf16.msra.mxu0 0
        %980 = vmatprep.mubr.bf16.mxu0 0
        %981 = vmatmul.mubr.bf16.gmra.mrb[0].mxu0 %v943
        %v982 = vpop.f32.mrb[0].mxu0
        %v983 = vadd.f32 0.0, %v982
        %v984 = vpop.f32.mrb[0].mxu0
        %v985 = vpop.f32.mrb[0].mxu0
        %v986 = vpop.f32.mrb[0].mxu0
        %987 = vdwg.mxu0
        %989 = vrot.lane.b32.xlu0 %v983, 24
        %v990 = vpop.permute.xlu0 %989
        %vm992 = vcmask 261312
        %993 = vst.msk [vmem:[#allocation3] sm:$0xff] %vm992, %v990
        %v994 = vld [vmem:[#allocation3] sm:$0xff]
        %v995 = vpack.c.bf16 %v994, %v994
        %v996 = vld [vmem:[%s4] sm:$0xf]
        %v997 = vld [vmem:[%s4 + $0x4] sm:$0xf]
        %v998 = vld [vmem:[%s4 + $0x8] sm:$0xf]
        %v999 = vld [vmem:[%s4 + $0xc] sm:$0xf]
        %v1004 = vunpack.c.l.b16 %v996
        %v1005 = vunpack.c.l.b16 %v997
        %v1006 = vunpack.c.l.b16 %v998
        %v1007 = vunpack.c.l.b16 %v999
        %v1008 = vpack.c.b16 %v1005, %v1004
        %v1009 = vpack.c.b16 %v1007, %v1006
        %v1013 = vsel %vm428, %v995, 0
        %1015 = vmatprep.subr.bf16.mxu0 0
        %1016 = vmatpush1.bf16.msra.mxu0 %v1008
        %1017 = vmatprep.subr.bf16.mxu0 0
        %1018 = vmatpush1.bf16.msra.mxu0 %v1009
        %1019 = vmatprep.subr.bf16.mxu0 0
        %1020 = vmatpush1.bf16.msra.mxu0 0
        %1021 = vmatprep.subr.bf16.mxu0 0
        %1022 = vmatpush1.bf16.msra.mxu0 0
        %1023 = vmatprep.subr.bf16.mxu0 0
        %1024 = vmatpush1.bf16.msra.mxu0 0
        %1025 = vmatprep.subr.bf16.mxu0 0
        %1026 = vmatpush1.bf16.msra.mxu0 0
        %1027 = vmatprep.subr.bf16.mxu0 0
        %1028 = vmatpush1.bf16.msra.mxu0 0
        %1029 = vmatprep.subr.bf16.mxu0 0
        %1030 = vmatpush1.bf16.msra.mxu0 0
        %1031 = vmatprep.subr.bf16.mxu0 0
        %1032 = vmatpush1.bf16.msra.mxu0 0
        %1033 = vmatprep.subr.bf16.mxu0 0
        %1034 = vmatpush1.bf16.msra.mxu0 0
        %1035 = vmatprep.subr.bf16.mxu0 0
        %1036 = vmatpush1.bf16.msra.mxu0 0
        %1037 = vmatprep.subr.bf16.mxu0 0
        %1038 = vmatpush1.bf16.msra.mxu0 0
        %1039 = vmatprep.subr.bf16.mxu0 0
        %1040 = vmatpush1.bf16.msra.mxu0 0
        %1041 = vmatprep.subr.bf16.mxu0 0
        %1042 = vmatpush1.bf16.msra.mxu0 0
        %1043 = vmatprep.subr.bf16.mxu0 0
        %1044 = vmatpush1.bf16.msra.mxu0 0
        %1045 = vmatprep.subr.bf16.mxu0 0
        %1046 = vmatpush1.bf16.msra.mxu0 0
        %1047 = vmatprep.mubr.bf16.mxu0 0
        %1048 = vmatmul.mubr.bf16.gmra.mrb[0].mxu0 %v1013
        %v1049 = vpop.f32.mrb[0].mxu0
        %v1050 = vadd.f32 0.0, %v1049
        %v1051 = vpop.f32.mrb[0].mxu0
        %v1052 = vpop.f32.mrb[0].mxu0
        %v1053 = vpop.f32.mrb[0].mxu0
        %1054 = vdwg.mxu0
        %v1055 = vadd.f32 %v425, %v1050
        %v1056 = vld [vmem:[%s5] sm:$0x1]
        %v1058 = vlaneseq
        %v1059 = vshrl.u32 %v1058, 7
        %v1060 = vsub.s32 0, %v1059
        %v1061 = vrot.slane %v1056, %v1060
        %v1063 = vadd.f32 %v1055, %v1061
        %v1064 = vld [vmem:[%s6] sm:$0x1]
        %v1065 = vld [vmem:[%s7] sm:$0x1]
        %v1066 = vsel %vm428, %v1063, 0.0
        %1067 = vadd.xlane.f32.xlu0 %v1066
        %v1068 = vpop.xlane.xlu0 %1067
        %v1069 = vmul.f32 %v1068, %v432
        %v1070 = vsub.f32 %v1063, %v1069
        %v1071 = vmul.f32 %v1070, %v1070
        %v1072 = vsel %vm428, %v1071, 0.0
        %1073 = vadd.xlane.f32.xlu0 %v1072
        %v1074 = vpop.xlane.xlu0 %1073
        %v1075 = vmul.f32 %v1074, %v432
        %v1076 = vadd.f32 %v1075, 1e-05
        %v1077 = vrsqrt.pop %v1076
        %v1078 = vmul.f32 %v1070, %v1077
        %v1080 = vlaneseq
        %v1081 = vshrl.u32 %v1080, 7
        %v1082 = vsub.s32 0, %v1081
        %v1083 = vrot.slane %v1064, %v1082
        %v1085 = vmul.f32 %v1078, %v1083
        %v1087 = vlaneseq
        %v1088 = vshrl.u32 %v1087, 7
        %v1089 = vsub.s32 0, %v1088
        %v1090 = vrot.slane %v1065, %v1089
        %v1092 = vadd.f32 %v1085, %v1090
        %v1093 = vpack.c.bf16 %v1092, %v1092
        %v1094 = vld [vmem:[#allocation4] sm:$0xf]
        %v1095 = vld [vmem:[#allocation4 + $0x4] sm:$0xf]
        %v1096 = vld [vmem:[#allocation4 + $0x8] sm:$0xf]
        %v1097 = vld [vmem:[#allocation4 + $0xc] sm:$0xf]
        %v1098 = vld [vmem:[%s9] sm:$0x1]
        %v1100 = vlaneseq
        %v1101 = vshrl.u32 %v1100, 7
        %v1102 = vsub.s32 0, %v1101
        %v1103 = vrot.slane %v1098, %v1102
        %v1109 = vunpack.c.l.b16 %v1094
        %v1110 = vunpack.c.l.b16 %v1095
        %v1111 = vunpack.c.l.b16 %v1096
        %v1112 = vunpack.c.l.b16 %v1097
        %v1113 = vpack.c.b16 %v1110, %v1109
        %v1114 = vpack.c.b16 %v1112, %v1111
        %v1118 = vsel %vm428, %v1093, 0
        %1120 = vmatprep.subr.bf16.mxu0 0
        %1121 = vmatpush1.bf16.msra.mxu0 %v1113
        %1122 = vmatprep.subr.bf16.mxu0 0
        %1123 = vmatpush1.bf16.msra.mxu0 %v1114
        %1124 = vmatprep.subr.bf16.mxu0 0
        %1125 = vmatpush1.bf16.msra.mxu0 0
        %1126 = vmatprep.subr.bf16.mxu0 0
        %1127 = vmatpush1.bf16.msra.mxu0 0
        %1128 = vmatprep.subr.bf16.mxu0 0
        %1129 = vmatpush1.bf16.msra.mxu0 0
        %1130 = vmatprep.subr.bf16.mxu0 0
        %1131 = vmatpush1.bf16.msra.mxu0 0
        %1132 = vmatprep.subr.bf16.mxu0 0
        %1133 = vmatpush1.bf16.msra.mxu0 0
        %1134 = vmatprep.subr.bf16.mxu0 0
        %1135 = vmatpush1.bf16.msra.mxu0 0
        %1136 = vmatprep.subr.bf16.mxu0 0
        %1137 = vmatpush1.bf16.msra.mxu0 0
        %1138 = vmatprep.subr.bf16.mxu0 0
        %1139 = vmatpush1.bf16.msra.mxu0 0
        %1140 = vmatprep.subr.bf16.mxu0 0
        %1141 = vmatpush1.bf16.msra.mxu0 0
        %1142 = vmatprep.subr.bf16.mxu0 0
        %1143 = vmatpush1.bf16.msra.mxu0 0
        %1144 = vmatprep.subr.bf16.mxu0 0
        %1145 = vmatpush1.bf16.msra.mxu0 0
        %1146 = vmatprep.subr.bf16.mxu0 0
        %1147 = vmatpush1.bf16.msra.mxu0 0
        %1148 = vmatprep.subr.bf16.mxu0 0
        %1149 = vmatpush1.bf16.msra.mxu0 0
        %1150 = vmatprep.subr.bf16.mxu0 0
        %1151 = vmatpush1.bf16.msra.mxu0 0
        %1152 = vmatprep.mubr.bf16.mxu0 0
        %1153 = vmatmul.mubr.bf16.gmra.mrb[0].mxu0 %v1118
        %v1154 = vpop.f32.mrb[0].mxu0
        %v1155 = vadd.f32 %v1103, %v1154
        %v1156 = vpop.f32.mrb[0].mxu0
        %v1157 = vpop.f32.mrb[0].mxu0
        %v1158 = vpop.f32.mrb[0].mxu0
        %1159 = vdwg.mxu0
        %v1160 = vmul.f32 %v1155, 0.5
        %v1161 = vmul.f32 %v1155, 0.70710677
        %v1162 = vand.u32 2147483647, %v1161
        %v1163 = vmul.f32 %v1162, 0.3275911
        %v1164 = vadd.f32 %v1163, 1.0
        %v1165 = vrcp.pop %v1164
        %v1166 = vmul.f32 %v1165, 1.0614054
        %v1167 = vadd.f32 %v1166, -1.4531521
        %v1168 = vmul.f32 %v1167, %v1165
        %v1169 = vadd.f32 %v1168, 1.4214138
        %v1170 = vmul.f32 %v1169, %v1165
        %v1171 = vadd.f32 %v1170, -0.28449672
        %v1172 = vmul.f32 %v1171, %v1165
        %v1173 = vadd.f32 %v1172, 0.2548296
        %v1174 = vmul.f32 %v1173, %v1165
        %v1175 = vsub.f32 0.0, %v1162
        %v1176 = vmul.f32 %v1175, %v1162
        %v1177 = vmul.f32 %v1176, 1.442695
        %v1178 = vpow.pop %v1177
        %v1179 = vmul.f32 %v1174, %v1178
        %v1180 = vsub.f32 1.0, %v1179
        %vm1181 = vcmp.ge.f32.partialorder %v1161, 0.0
        %v1182 = vsub.f32 0.0, %v1180
        %v1183 = vsel %vm1181, %v1180, %v1182
        %v1184 = vadd.f32 %v1183, 1.0
        %v1185 = vmul.f32 %v1160, %v1184
        %v1186 = vpack.c.bf16 %v1185, %v1185
        %v1187 = vld [vmem:[%s10] sm:$0xf]
        %v1188 = vld [vmem:[%s10 + $0x4] sm:$0xf]
        %v1189 = vld [vmem:[%s10 + $0x8] sm:$0xf]
        %v1190 = vld [vmem:[%s10 + $0xc] sm:$0xf]
        %v1191 = vld [vmem:[%s10 + $0x10] sm:$0xf]
        %v1192 = vld [vmem:[%s10 + $0x14] sm:$0xf]
        %v1193 = vld [vmem:[%s10 + $0x18] sm:$0xf]
        %v1194 = vld [vmem:[%s10 + $0x1c] sm:$0xf]
        %v1195 = vld [vmem:[%s11] sm:$0x1]
        %v1197 = vlaneseq
        %v1198 = vshrl.u32 %v1197, 7
        %v1199 = vsub.s32 0, %v1198
        %v1200 = vrot.slane %v1195, %v1199
        %v1210 = vunpack.c.l.b16 %v1187
        %v1211 = vunpack.c.l.b16 %v1188
        %v1212 = vunpack.c.l.b16 %v1189
        %v1213 = vunpack.c.l.b16 %v1190
        %v1214 = vunpack.c.l.b16 %v1191
        %v1215 = vunpack.c.l.b16 %v1192
        %v1216 = vunpack.c.l.b16 %v1193
        %v1217 = vunpack.c.l.b16 %v1194
        %v1218 = vpack.c.b16 %v1211, %v1210
        %v1219 = vpack.c.b16 %v1213, %v1212
        %v1220 = vpack.c.b16 %v1215, %v1214
        %v1221 = vpack.c.b16 %v1217, %v1216
        %vm1226 = vcmask 523264
        %v1228 = vsel %vm1226, %v1186, 0
        %1230 = vmatprep.subr.bf16.mxu0 0
        %1231 = vmatpush1.bf16.msra.mxu0 %v1218
        %1232 = vmatprep.subr.bf16.mxu0 0
        %1233 = vmatpush1.bf16.msra.mxu0 %v1219
        %1234 = vmatprep.subr.bf16.mxu0 0
        %1235 = vmatpush1.bf16.msra.mxu0 %v1220
        %1236 = vmatprep.subr.bf16.mxu0 0
        %1237 = vmatpush1.bf16.msra.mxu0 %v1221
        %1238 = vmatprep.subr.bf16.mxu0 0
        %1239 = vmatpush1.bf16.msra.mxu0 0
        %1240 = vmatprep.subr.bf16.mxu0 0
        %1241 = vmatpush1.bf16.msra.mxu0 0
        %1242 = vmatprep.subr.bf16.mxu0 0
        %1243 = vmatpush1.bf16.msra.mxu0 0
        %1244 = vmatprep.subr.bf16.mxu0 0
        %1245 = vmatpush1.bf16.msra.mxu0 0
        %1246 = vmatprep.subr.bf16.mxu0 0
        %1247 = vmatpush1.bf16.msra.mxu0 0
        %1248 = vmatprep.subr.bf16.mxu0 0
        %1249 = vmatpush1.bf16.msra.mxu0 0
        %1250 = vmatprep.subr.bf16.mxu0 0
        %1251 = vmatpush1.bf16.msra.mxu0 0
        %1252 = vmatprep.subr.bf16.mxu0 0
        %1253 = vmatpush1.bf16.msra.mxu0 0
        %1254 = vmatprep.subr.bf16.mxu0 0
        %1255 = vmatpush1.bf16.msra.mxu0 0
        %1256 = vmatprep.subr.bf16.mxu0 0
        %1257 = vmatpush1.bf16.msra.mxu0 0
        %1258 = vmatprep.subr.bf16.mxu0 0
        %1259 = vmatpush1.bf16.msra.mxu0 0
        %1260 = vmatprep.subr.bf16.mxu0 0
        %1261 = vmatpush1.bf16.msra.mxu0 0
        %1262 = vmatprep.mubr.bf16.mxu0 0
        %1263 = vmatmul.mubr.bf16.gmra.mrb[0].mxu0 %v1228
        %v1264 = vpop.f32.mrb[0].mxu0
        %v1265 = vadd.f32 %v1200, %v1264
        %v1266 = vpop.f32.mrb[0].mxu0
        %v1267 = vpop.f32.mrb[0].mxu0
        %v1268 = vpop.f32.mrb[0].mxu0
        %1269 = vdwg.mxu0
        %v1270 = vadd.f32 %v1063, %v1265
        %1271 = vst.msk [vmem:[%s419] sm:$0xff] %vm428, %v1270
        %s1272 = sand.u32 %s292, 1
        %s1273 = scalar_lea.sflag [#allocation6], %s1272
        %s1274 = sand.u32 %s292, 1
        %s1275 = smul.addr %s1274, 8
        %s1276 = scalar_lea.vmem [#allocation7], %s1275
        // Predicated region
        $region73: #{tpu_custom_call.1} parent=67 // pred_check
          %p1277 = pneg %p302
        $region74: #{tpu_custom_call.1} parent=67 // pred_check_branch
          %1279 = sbr.rel (%p1277) target = $region76
        $region75: #{tpu_custom_call.1} parent=67 // pred_region
          %s1281 = ssub.s32 128, 128
          %1282 = vsyncadd %s1273, %s1281
          %s1283 = smul.addr %s27, 128
          %s1284 = scalar_lea.hbm %s12, %s1283
          %s1286 = sshll.u32 %s1276, 4
          %s1287 = int_to_ptr.vmem [resolvable:$true] %s1286
          %1289 = dma.vmem_to_hbm [thread:$0]  %s1287, 128, %s1284, %s1273
        $region76: #{tpu_custom_call.1} parent=67 // pred_fallthru
          _
      $region68: #{tpu_custom_call.1} parent=5 // pred_fallthru
        _
      %p1290 = scmp.le.s32.totalorder 2, %s22
      // Predicated region
      $region77: #{tpu_custom_call.1} parent=5 // pred_check
        %p1291 = pneg %p1290
      $region78: #{tpu_custom_call.1} parent=5 // pred_check_branch
        %1293 = sbr.rel (%p1291) target = $region80
      $region79: #{tpu_custom_call.1} parent=5 // pred_region
        %s1294 = ssub.s32 %s22, 2
        // Predicated region
        $region81: #{tpu_custom_call.1} parent=79 // pred_check
          %p1295 = pneg %p308
        $region82: #{tpu_custom_call.1} parent=79 // pred_check_branch
          %1297 = sbr.rel (%p1295) target = $region84
        $region83: #{tpu_custom_call.1} parent=79 // pred_region
          %s1298 = sand.u32 %s293, 1
          %s1299 = scalar_lea.sflag [#allocation6], %s1298
          %s1300 = sand.u32 %s293, 1
          %s1301 = smul.addr %s1300, 8
          %s1302 = scalar_lea.vmem [#allocation7], %s1301
          %1303 = dma.done %s1299, 128
        $region84: #{tpu_custom_call.1} parent=79 // pred_fallthru
          _
      $region80: #{tpu_custom_call.1} parent=5 // pred_fallthru
        _
    $region6: #{tpu_custom_call.1} parent=1 // loop_footer
      %s26 = sadd.s32 1, %s22
    $region7: #{tpu_custom_call.1} parent=1 // loop_footer_branch
      %21 = sbr.rel target = $region3
    $region8: #{tpu_custom_call.1} parent=1 // loop_exit
      _
    %1304 = vsyncpa [#allocation5], 1
    %s1305 = scalar_lea.sflag [#allocation5], 1
    %1306 = vsyncpa %s1305, 1
    %1307 = vsyncpa [#allocation6], 1
    %s1308 = scalar_lea.sflag [#allocation6], 1
    %1309 = vsyncpa %s1308, 1

</llo_original>
